<compile_context>
chip_gen: v5e
topology: v5e:2x2
jax: 0.10.0
libtpu: 0.0.40
codegen_flags: <defaults>
</compile_context>

<pallas_src>
import jax
import jax.numpy as jnp
from jax.experimental import pallas as pl
from jax.experimental.pallas import tpu as pltpu

N_OUT = 11       # real number of classes
N_PAD = 128      # lane-dense padded output width


def fcn_kernel(gmax_ref, x_ref, w1_ref, b1_ref, wt_ref, bt_ref, o_ref):
    # x / x.max() — gmax is the GLOBAL max (computed in the wrapper over the
    # whole un-padded input), so batch tiling cannot change semantics.
    inv = 1.0 / gmax_ref[0, 0]                      # one scalar divide
    x = (x_ref[...] * inv).astype(jnp.bfloat16)     # VPU mul + narrow cast

    # dense1 + ReLU (256 -> 4096): native bf16 x bf16 -> f32-accumulate MXU.
    h = jnp.dot(x, w1_ref[...], preferred_element_type=jnp.float32) + b1_ref[...]
    h = jnp.maximum(h, 0.0).astype(jnp.bfloat16)

    # dense2..dense5 fused into one (4096, 128) matmul (columns 11..127 of the
    # padded weight/bias are zero, so the extra output lanes are exactly zero).
    out = jnp.dot(h, wt_ref[...], preferred_element_type=jnp.float32) + bt_ref[...]
    o_ref[...] = out.astype(o_ref.dtype)


def prepare_params(params):
    """One-time parameter prep: tail fusion, lane padding, bf16 casts.

    Call once and cache the result; do NOT re-run per forward call.
    """
    w2, w3, w4, w5 = params["w2"], params["w3"], params["w4"], params["w5"]
    b2, b3, b4, b5 = params["b2"], params["b3"], params["b4"], params["b5"]

    # Right-associated so every intermediate has only 11 columns (~6 MFLOP).
    # Exact only because dense2..dense5 have no nonlinearities between them.
    w_tail = w2 @ (w3 @ (w4 @ w5))                                   # (4096, 11)
    b_tail = ((b2 @ w3 + b3) @ w4 + b4) @ w5 + b5                    # (11,)

    # Zero-pad to 128 output columns for unmasked, lane-dense stores.
    w_tail_p = jnp.zeros((w_tail.shape[0], N_PAD), jnp.float32).at[:, :N_OUT].set(w_tail)
    b_tail_p = jnp.zeros((1, N_PAD), jnp.float32).at[0, :N_OUT].set(b_tail)

    return {
        "w1": params["w1"].astype(jnp.bfloat16),        # (256, 4096) bf16
        "b1": params["b1"].reshape(1, -1),               # (1, 4096)   f32
        "wt": w_tail_p.astype(jnp.bfloat16),             # (4096, 128) bf16
        "bt": b_tail_p,                                   # (1, 128)    f32
    }


def _default_tile_b(B):
    # v6e/v7x: 256-512 fills the 256x256 MXU and keeps >=2 parallel grid steps
    # (both v7x TensorCores busy).  v5e (128x128 MXU) is fine with any of these.
    if B >= 1024:
        return 512
    if B >= 512:
        return 256
    if B >= 256:
        return 128
    return ((B + 7) // 8) * 8          # single sublane-aligned tile


def fcn_forward(x, prepared, *, tile_b=None):
    """x: (B, 256) float32. prepared: output of prepare_params()."""
    B, F = x.shape
    assert F == 256

    # Global max over ALL elements (torch.max() semantics), on the un-padded
    # input.  NOTE: gmax == 0 -> inf/NaN; all-negative input flips signs —
    # exactly like the original PyTorch module.
    gmax = jnp.max(x).astype(jnp.float32).reshape(1, 1)

    w1, b1, wt, bt = prepared["w1"], prepared["b1"], prepared["wt"], prepared["bt"]

    if tile_b is None:
        tile_b = _default_tile_b(B)
    B_pad = ((B + tile_b - 1) // tile_b) * tile_b
    x_p = x if B_pad == B else jnp.pad(x, ((0, B_pad - B), (0, 0)))
    grid = (B_pad // tile_b,)

    cost = pl.CostEstimate(
        flops=2 * B_pad * 256 * 4096 + 2 * B_pad * 4096 * N_PAD,
        transcendentals=0,
        bytes_accessed=(x_p.size * 4 + w1.size * 2 + wt.size * 2
                        + b1.size * 4 + bt.size * 4 + B_pad * N_PAD * 4),
    )

    smem_spec = pl.BlockSpec(memory_space=pltpu.MemorySpace.SMEM)

    out = pl.pallas_call(
        fcn_kernel,
        out_shape=jax.ShapeDtypeStruct((B_pad, N_PAD), jnp.float32),
        grid=grid,
        in_specs=[
            smem_spec,                                            # gmax (1,1)
            pl.BlockSpec((tile_b, 256), lambda i: (i, 0)),        # x tile
            pl.BlockSpec((256, 4096), lambda i: (0, 0)),          # w1 (resident)
            pl.BlockSpec((1, 4096), lambda i: (0, 0)),            # b1 (resident)
            pl.BlockSpec((4096, N_PAD), lambda i: (0, 0)),        # w_tail (resident)
            pl.BlockSpec((1, N_PAD), lambda i: (0, 0)),           # b_tail (resident)
        ],
        out_specs=pl.BlockSpec((tile_b, N_PAD), lambda i: (i, 0)),
        compiler_params=pltpu.CompilerParams(
            dimension_semantics=("parallel",)),
        cost_estimate=cost,
    )(gmax, x_p, w1, b1, wt, bt)

    return out[:B, :N_OUT]


def fcn_reference(x, params):
    """Pure-JAX replica of the PyTorch forward (unfused, f32) for checking."""
    h = x / jnp.max(x)
    h = jnp.maximum(h @ params["w1"] + params["b1"], 0.0)
    h = h @ params["w2"] + params["b2"]
    h = h @ params["w3"] + params["b3"]
    h = h @ params["w4"] + params["b4"]
    h = h @ params["w5"] + params["b5"]
    return h


def init_params(key):
    """Deterministic synthetic init. Weights stored as (in, out) = torch weight.T."""
    dims = [(256, 4096), (4096, 64), (64, 256), (256, 16), (16, 11)]
    params = {}
    for i, (fan_in, fan_out) in enumerate(dims, start=1):
        key, kw, kb = jax.random.split(key, 3)
        bound = 1.0 / jnp.sqrt(fan_in)
        params[f"w{i}"] = jax.random.uniform(
            kw, (fan_in, fan_out), jnp.float32, minval=-bound, maxval=bound)
        params[f"b{i}"] = jax.random.uniform(
            kb, (fan_out,), jnp.float32, minval=-bound, maxval=bound)
    return params


if __name__ == "__main__":
    key = jax.random.PRNGKey(0)
    key, kx, kp = jax.random.split(key, 3)

    B = 8
    x = jax.random.normal(kx, (B, 256), dtype=jnp.float32)
    params = init_params(kp)

    prepared = prepare_params(params)          # one-time prep (cacheable)
    out = fcn_forward(x, prepared)
    out = jax.block_until_ready(out)

    assert out.shape == (B, N_OUT), out.shape
    assert out.dtype == jnp.float32

    # Loose tolerance: bf16 weight/activation storage + tail-layer fusion
    # reassociate f32 math; errors are ~1e-3 absolute at these magnitudes.
    # Downstream users expecting bit-exact f32 parity with PyTorch should note
    # this is a reduced-precision (bf16-weight) forward pass.
    ref = fcn_reference(x, params)
    assert jnp.allclose(out, ref, rtol=2e-2, atol=2e-2), (
        float(jnp.max(jnp.abs(out - ref))))

    print("KERNEL_OK")
</pallas_src>

<mosaic_0001>
module attributes {stable_mosaic.version = 11 : i64} {
  func.func @fcn_kernel(%arg0: i32, %arg1: memref<1x1xf32, #tpu.memory_space<smem>>, %arg2: memref<8x256xf32, #tpu.memory_space<vmem>>, %arg3: memref<256x4096xbf16, #tpu.memory_space<vmem>>, %arg4: memref<1x4096xf32, #tpu.memory_space<vmem>>, %arg5: memref<4096x128xbf16, #tpu.memory_space<vmem>>, %arg6: memref<1x128xf32, #tpu.memory_space<vmem>>, %arg7: memref<8x128xf32, #tpu.memory_space<vmem>>) attributes {dimension_semantics = [#tpu.dimension_semantics<parallel>], iteration_bounds = array<i64: 1>, scalar_prefetch = 0 : i64, scratch_operands = 0 : i64, tpu.core_type = #tpu.core_type<tc>, window_params = [{transform_indices = @transform_0, window_bounds = array<i64: 1, 1>}, {transform_indices = @transform_1, window_bounds = array<i64: 8, 256>}, {pipeline_mode = #tpu.pipeline_mode<synchronous>, transform_indices = @transform_2, window_bounds = array<i64: 256, 4096>}, {pipeline_mode = #tpu.pipeline_mode<synchronous>, transform_indices = @transform_3, window_bounds = array<i64: 1, 4096>}, {pipeline_mode = #tpu.pipeline_mode<synchronous>, transform_indices = @transform_4, window_bounds = array<i64: 4096, 128>}, {pipeline_mode = #tpu.pipeline_mode<synchronous>, transform_indices = @transform_5, window_bounds = array<i64: 1, 128>}, {transform_indices = @transform_6, window_bounds = array<i64: 8, 128>}]} {
    %c0 = arith.constant 0 : index
    %c0_0 = arith.constant 0 : index
    %0 = memref.load %arg1[%c0, %c0_0] : memref<1x1xf32, #tpu.memory_space<smem>>
    %cst = arith.constant 1.000000e+00 : f32
    %1 = arith.divf %cst, %0 : f32
    %c0_1 = arith.constant 0 : index
    %c0_2 = arith.constant 0 : index
    %2 = vector.load %arg2[%c0_1, %c0_2] : memref<8x256xf32, #tpu.memory_space<vmem>>, vector<8x256xf32>
    %3 = vector.broadcast %1 : f32 to vector<8x256xf32>
    %4 = arith.mulf %2, %3 : vector<8x256xf32>
    %5 = arith.truncf %4 : vector<8x256xf32> to vector<8x256xbf16>
    %c0_3 = arith.constant 0 : index
    %c0_4 = arith.constant 0 : index
    %6 = vector.load %arg3[%c0_3, %c0_4] : memref<256x4096xbf16, #tpu.memory_space<vmem>>, vector<256x4096xbf16>
    %cst_5 = arith.constant dense<0.000000e+00> : vector<8x4096xf32>
    %7 = tpu.matmul %5, %6, %cst_5 {dimension_numbers = #tpu.dot_dimension_numbers<[1], [0], [0], [1], [0, 0, 1, 1], [], []>} : vector<8x256xbf16>, vector<256x4096xbf16>, vector<8x4096xf32> -> vector<8x4096xf32>
    %c0_6 = arith.constant 0 : index
    %c0_7 = arith.constant 0 : index
    %8 = vector.load %arg4[%c0_6, %c0_7] : memref<1x4096xf32, #tpu.memory_space<vmem>>, vector<1x4096xf32>
    %9 = vector.broadcast %8 : vector<1x4096xf32> to vector<8x4096xf32>
    %10 = arith.addf %7, %9 : vector<8x4096xf32>
    %cst_8 = arith.constant 0.000000e+00 : f32
    %11 = vector.broadcast %cst_8 : f32 to vector<8x4096xf32>
    %12 = arith.maximumf %10, %11 : vector<8x4096xf32>
    %13 = arith.truncf %12 : vector<8x4096xf32> to vector<8x4096xbf16>
    %c0_9 = arith.constant 0 : index
    %c0_10 = arith.constant 0 : index
    %14 = vector.load %arg5[%c0_9, %c0_10] : memref<4096x128xbf16, #tpu.memory_space<vmem>>, vector<4096x128xbf16>
    %cst_11 = arith.constant dense<0.000000e+00> : vector<8x128xf32>
    %15 = tpu.matmul %13, %14, %cst_11 {dimension_numbers = #tpu.dot_dimension_numbers<[1], [0], [0], [1], [0, 0, 1, 1], [], []>} : vector<8x4096xbf16>, vector<4096x128xbf16>, vector<8x128xf32> -> vector<8x128xf32>
    %c0_12 = arith.constant 0 : index
    %c0_13 = arith.constant 0 : index
    %16 = vector.load %arg6[%c0_12, %c0_13] : memref<1x128xf32, #tpu.memory_space<vmem>>, vector<1x128xf32>
    %17 = vector.broadcast %16 : vector<1x128xf32> to vector<8x128xf32>
    %18 = arith.addf %15, %17 : vector<8x128xf32>
    %c0_14 = arith.constant 0 : index
    %c0_15 = arith.constant 0 : index
    %19 = vector.load %arg7[%c0_14, %c0_15] : memref<8x128xf32, #tpu.memory_space<vmem>>, vector<8x128xf32>
    tpu.vector_store %arg7[%c0_14, %c0_15], %18 {strides = array<i32>} : memref<8x128xf32, #tpu.memory_space<vmem>>, vector<8x128xf32>,
    return
  }
  func.func @transform_0(%arg0: i32) -> (i32, i32) {
    %c0_i32 = arith.constant 0 : i32
    %c0_i32_0 = arith.constant 0 : i32
    %c0_i32_1 = arith.constant 0 : i32
    return %c0_i32, %c0_i32_0 : i32, i32
  }
  func.func @transform_1(%arg0: i32) -> (i32, i32) {
    %c0_i32 = arith.constant 0 : i32
    %c0_i32_0 = arith.constant 0 : i32
    return %arg0, %c0_i32 : i32, i32
  }
  func.func @transform_2(%arg0: i32) -> (i32, i32) {
    %c0_i32 = arith.constant 0 : i32
    %c0_i32_0 = arith.constant 0 : i32
    %c0_i32_1 = arith.constant 0 : i32
    return %c0_i32, %c0_i32_0 : i32, i32
  }
  func.func @transform_3(%arg0: i32) -> (i32, i32) {
    %c0_i32 = arith.constant 0 : i32
    %c0_i32_0 = arith.constant 0 : i32
    %c0_i32_1 = arith.constant 0 : i32
    return %c0_i32, %c0_i32_0 : i32, i32
  }
  func.func @transform_4(%arg0: i32) -> (i32, i32) {
    %c0_i32 = arith.constant 0 : i32
    %c0_i32_0 = arith.constant 0 : i32
    %c0_i32_1 = arith.constant 0 : i32
    return %c0_i32, %c0_i32_0 : i32, i32
  }
  func.func @transform_5(%arg0: i32) -> (i32, i32) {
    %c0_i32 = arith.constant 0 : i32
    %c0_i32_0 = arith.constant 0 : i32
    %c0_i32_1 = arith.constant 0 : i32
    return %c0_i32, %c0_i32_0 : i32, i32
  }
  func.func @transform_6(%arg0: i32) -> (i32, i32) {
    %c0_i32 = arith.constant 0 : i32
    %c0_i32_0 = arith.constant 0 : i32
    return %arg0, %c0_i32 : i32, i32
  }
}

</mosaic_0001>

<llo_original>
// kernel: tpu_custom_call.1
$region0: #{tpu_custom_call.1}
  #allocation0 [shape = 'u32[]', space=smem, size = 0x4, offset = 0x4, fixed_abs, tag = 'smem constant byte address 0x4 - core index']
  #allocation1 [shape = 'u32[72,128]{1,0:T(1,128)}', space=vmem, size = 0x9000, scoped, tag = 'internal scratch']
  #allocation2 [shape = 'f32[1,1]{1,0:T(1,128)S(6)}', space=smem, size = 0x200, scoped, tag = 'scoped memory for tpu_custom_call.1']
  %s0 = inlined_call_operand.<no memory space> [shape: f32[1,1], index: 0, kind: input, shape index: {}]
  %s1 = inlined_call_operand.hbm [shape: f32[8,256], index: 1, kind: input, shape index: {}]
  %s2 = inlined_call_operand.hbm [shape: bf16[256,4096], index: 2, kind: input, shape index: {}]
  %s3 = inlined_call_operand.hbm [shape: f32[1,4096], index: 3, kind: input, shape index: {}]
  %s4 = inlined_call_operand.hbm [shape: bf16[4096,128], index: 4, kind: input, shape index: {}]
  %s5 = inlined_call_operand.hbm [shape: f32[1,128], index: 5, kind: input, shape index: {}]
  %s6 = inlined_call_operand.hbm [shape: f32[8,128], index: 6, kind: output, shape index: {}]
  %s7 = sld [smem:[#allocation0]]
  $region54: #{tpu_custom_call.1} parent=0
    _
  %s9 = ssub.s32 1, %s7
  %s10 = scalar_select 0, %s9, %s7
  %11 = sst [smem:[#allocation2]] %s0
  $region1: #{tpu_custom_call.1} parent=0
    #allocation3 [shape = 'u8[8192]{0}', space=vmem, size = 0x2000, scoped, tag = 'input window, operand 1, single buffered']
    #allocation4 [shape = 's32[1]{0}', space=sflag, size = 0x4, scoped, tag = 'scoped memory for tpu_custom_call.1']
    #allocation5 [shape = 's32[1]{0}', space=sflag, size = 0x4, scoped, tag = 'scoped memory for tpu_custom_call.1']
    #allocation6 [shape = 'u8[2097152]{0}', space=vmem, size = 0x200000, scoped, tag = 'input window, operand 2, single buffered']
    #allocation7 [shape = 's32[1]{0}', space=sflag, size = 0x4, scoped, tag = 'scoped memory for tpu_custom_call.1']
    #allocation8 [shape = 'u8[16384]{0}', space=vmem, size = 0x4000, scoped, tag = 'input window, operand 3, single buffered']
    #allocation9 [shape = 'u8[1048576]{0}', space=vmem, size = 0x100000, scoped, tag = 'input window, operand 4, single buffered']
    #allocation10 [shape = 's32[1]{0}', space=sflag, size = 0x4, scoped, tag = 'scoped memory for tpu_custom_call.1']
    #allocation11 [shape = 'u8[512]{0}', space=vmem, size = 0x400, scoped, tag = 'input window, operand 5, single buffered']
    #allocation12 [shape = 'u8[4096]{0}', space=vmem, size = 0x1000, scoped, tag = 'output window, operand 0, single buffered']
    %12 = vsyncpa [#allocation4], 0
    %13 = vsyncpa [#allocation7], 0
    %14 = vsyncpa [#allocation10], 0
    %15 = vsyncpa [#allocation5], 0
    // Predicated region
    $region2: #{tpu_custom_call.1} parent=1 // pred_check
      _
    $region3: #{tpu_custom_call.1} parent=1 // pred_check_branch
      %17 = sbr.rel (0) target = $region5
    $region4: #{tpu_custom_call.1} parent=1 // pred_region
      _
    $region5: #{tpu_custom_call.1} parent=1 // pred_fallthru
      _
    // Predicated region
    $region6: #{tpu_custom_call.1} parent=1 // pred_check
      _
    $region7: #{tpu_custom_call.1} parent=1 // pred_check_branch
      %19 = sbr.rel (0) target = $region9
    $region8: #{tpu_custom_call.1} parent=1 // pred_region
      %21 = vsyncadd [#allocation4], 0
      %s23 = sshll.u32 %s1, 4
      %s24 = int_to_ptr.hbm [resolvable:$true] %s23
      %s25 = sshll.u32 [#allocation3], 4
      %s26 = int_to_ptr.vmem [resolvable:$true] %s25
      %28 = dma.hbm_to_vmem [thread:$0]  %s24, 256, %s26, [#allocation4]
    $region9: #{tpu_custom_call.1} parent=1 // pred_fallthru
      _
    // Predicated region
    $region10: #{tpu_custom_call.1} parent=1 // pred_check
      _
    $region11: #{tpu_custom_call.1} parent=1 // pred_check_branch
      %30 = sbr.rel (0) target = $region13
    $region12: #{tpu_custom_call.1} parent=1 // pred_region
      %32 = vsyncadd [#allocation7], 0
      %s33 = sshll.u32 %s2, 4
      %s34 = int_to_ptr.hbm [resolvable:$true] %s33
      %s35 = sshll.u32 [#allocation6], 4
      %s36 = int_to_ptr.vmem [resolvable:$true] %s35
      %41 = dma.hbm_to_vmem [thread:$0]  %s34, 65536, %s36, [#allocation7], 2048, 2048, 128
    $region13: #{tpu_custom_call.1} parent=1 // pred_fallthru
      _
    // Predicated region
    $region14: #{tpu_custom_call.1} parent=1 // pred_check
      _
    $region15: #{tpu_custom_call.1} parent=1 // pred_check_branch
      %43 = sbr.rel (0) target = $region17
    $region16: #{tpu_custom_call.1} parent=1 // pred_region
      %45 = vsyncadd [#allocation7], 0
      %s47 = sshll.u32 %s3, 4
      %s48 = int_to_ptr.hbm [resolvable:$true] %s47
      %s49 = sshll.u32 [#allocation8], 4
      %s50 = int_to_ptr.vmem [resolvable:$true] %s49
      %52 = dma.hbm_to_vmem [thread:$0]  %s48, 512, %s50, [#allocation7]
    $region17: #{tpu_custom_call.1} parent=1 // pred_fallthru
      _
    // Predicated region
    $region18: #{tpu_custom_call.1} parent=1 // pred_check
      _
    $region19: #{tpu_custom_call.1} parent=1 // pred_check_branch
      %54 = sbr.rel (0) target = $region21
    $region20: #{tpu_custom_call.1} parent=1 // pred_region
      %56 = vsyncadd [#allocation10], 0
      %s57 = sshll.u32 %s4, 4
      %s58 = int_to_ptr.hbm [resolvable:$true] %s57
      %s59 = sshll.u32 [#allocation9], 4
      %s60 = int_to_ptr.vmem [resolvable:$true] %s59
      %65 = dma.hbm_to_vmem [thread:$0]  %s58, 32768, %s60, [#allocation10], 64, 64, 4
    $region21: #{tpu_custom_call.1} parent=1 // pred_fallthru
      _
    // Predicated region
    $region22: #{tpu_custom_call.1} parent=1 // pred_check
      _
    $region23: #{tpu_custom_call.1} parent=1 // pred_check_branch
      %67 = sbr.rel (0) target = $region25
    $region24: #{tpu_custom_call.1} parent=1 // pred_region
      %69 = vsyncadd [#allocation10], 0
      %s71 = sshll.u32 %s5, 4
      %s72 = int_to_ptr.hbm [resolvable:$true] %s71
      %s73 = sshll.u32 [#allocation11], 4
      %s74 = int_to_ptr.vmem [resolvable:$true] %s73
      %76 = dma.hbm_to_vmem [thread:$0]  %s72, 16, %s74, [#allocation10]
    $region25: #{tpu_custom_call.1} parent=1 // pred_fallthru
      _
    // Predicated region
    $region26: #{tpu_custom_call.1} parent=1 // pred_check
      _
    $region27: #{tpu_custom_call.1} parent=1 // pred_check_branch
      %78 = sbr.rel (0) target = $region29
    $region28: #{tpu_custom_call.1} parent=1 // pred_region
      %80 = dma.done [#allocation4], 256
    $region29: #{tpu_custom_call.1} parent=1 // pred_fallthru
      _
    // Predicated region
    $region30: #{tpu_custom_call.1} parent=1 // pred_check
      _
    $region31: #{tpu_custom_call.1} parent=1 // pred_check_branch
      %82 = sbr.rel (0) target = $region33
    $region32: #{tpu_custom_call.1} parent=1 // pred_region
      %84 = dma.done [#allocation7], 65536
    $region33: #{tpu_custom_call.1} parent=1 // pred_fallthru
      _
    // Predicated region
    $region34: #{tpu_custom_call.1} parent=1 // pred_check
      _
    $region35: #{tpu_custom_call.1} parent=1 // pred_check_branch
      %86 = sbr.rel (0) target = $region37
    $region36: #{tpu_custom_call.1} parent=1 // pred_region
      %88 = dma.done [#allocation7], 512
    $region37: #{tpu_custom_call.1} parent=1 // pred_fallthru
      _
    // Predicated region
    $region38: #{tpu_custom_call.1} parent=1 // pred_check
      _
    $region39: #{tpu_custom_call.1} parent=1 // pred_check_branch
      %90 = sbr.rel (0) target = $region41
    $region40: #{tpu_custom_call.1} parent=1 // pred_region
      %92 = dma.done [#allocation10], 32768
    $region41: #{tpu_custom_call.1} parent=1 // pred_fallthru
      _
    // Predicated region
    $region42: #{tpu_custom_call.1} parent=1 // pred_check
      _
    $region43: #{tpu_custom_call.1} parent=1 // pred_check_branch
      %94 = sbr.rel (0) target = $region45
    $region44: #{tpu_custom_call.1} parent=1 // pred_region
      %96 = dma.done [#allocation10], 16
    $region45: #{tpu_custom_call.1} parent=1 // pred_fallthru
      _
    %s97 = sld [smem:[#allocation2]]
    %v98 = vstv %s97
    %v99 = vrcp.pop %v98
    %v100 = vmul.f32 %v98, %v99
    %v101 = vsub.f32 1.0, %v100
    %v102 = vmul.f32 %v99, %v101
    %v103 = vadd.f32 %v99, %v102
    %vm104 = vweird.f32 %v98
    %vm105 = vweird.f32 %v99
    %vm106 = vmor %vm104, %vm105
    %v107 = vsel %vm106, %v99, %v103
    %v108 = vand.u32 2147483647, %v98
    %vm109 = vcmp.eq.f32.partialorder %v108, 8.507059e+37
    %v110 = vand.u32 %v98, 2147483648
    %v111 = vor.u32 1.1754944e-38, %v110
    %v112 = vsel %vm109, %v111, %v107
    %s113 = vtos %v112
    %v114 = vld [vmem:[#allocation3] sm:$0xff]
    %v115 = vld [vmem:[#allocation3 + $0x8] sm:$0xff]
    %v116 = vstv %s113
    %v117 = vmul.f32 %v114, %v116
    %v118 = vmul.f32 %v115, %v116
    %v119 = vpack.c.bf16 %v117, %v117
    %v120 = vpack.c.bf16 %v118, %v118
    %v121 = vld [vmem:[#allocation6] sm:$0xff]
    %v122 = vld [vmem:[#allocation6 + $0x8] sm:$0xff]
    %v123 = vld [vmem:[#allocation6 + $0x10] sm:$0xff]
    %v124 = vld [vmem:[#allocation6 + $0x18] sm:$0xff]
    %v125 = vld [vmem:[#allocation6 + $0x20] sm:$0xff]
    %v126 = vld [vmem:[#allocation6 + $0x28] sm:$0xff]
    %v127 = vld [vmem:[#allocation6 + $0x30] sm:$0xff]
    %v128 = vld [vmem:[#allocation6 + $0x38] sm:$0xff]
    %v129 = vld [vmem:[#allocation6 + $0x40] sm:$0xff]
    %v130 = vld [vmem:[#allocation6 + $0x48] sm:$0xff]
    %v131 = vld [vmem:[#allocation6 + $0x50] sm:$0xff]
    %v132 = vld [vmem:[#allocation6 + $0x58] sm:$0xff]
    %v133 = vld [vmem:[#allocation6 + $0x60] sm:$0xff]
    %v134 = vld [vmem:[#allocation6 + $0x68] sm:$0xff]
    %v135 = vld [vmem:[#allocation6 + $0x70] sm:$0xff]
    %v136 = vld [vmem:[#allocation6 + $0x78] sm:$0xff]
    %v137 = vld [vmem:[#allocation6 + $0x80] sm:$0xff]
    %v138 = vld [vmem:[#allocation6 + $0x88] sm:$0xff]
    %v139 = vld [vmem:[#allocation6 + $0x90] sm:$0xff]
    %v140 = vld [vmem:[#allocation6 + $0x98] sm:$0xff]
    %v141 = vld [vmem:[#allocation6 + $0xa0] sm:$0xff]
    %v142 = vld [vmem:[#allocation6 + $0xa8] sm:$0xff]
    %v143 = vld [vmem:[#allocation6 + $0xb0] sm:$0xff]
    %v144 = vld [vmem:[#allocation6 + $0xb8] sm:$0xff]
    %v145 = vld [vmem:[#allocation6 + $0xc0] sm:$0xff]
    %v146 = vld [vmem:[#allocation6 + $0xc8] sm:$0xff]
    %v147 = vld [vmem:[#allocation6 + $0xd0] sm:$0xff]
    %v148 = vld [vmem:[#allocation6 + $0xd8] sm:$0xff]
    %v149 = vld [vmem:[#allocation6 + $0xe0] sm:$0xff]
    %v150 = vld [vmem:[#allocation6 + $0xe8] sm:$0xff]
    %v151 = vld [vmem:[#allocation6 + $0xf0] sm:$0xff]
    %v152 = vld [vmem:[#allocation6 + $0xf8] sm:$0xff]
    %v153 = vld [vmem:[#allocation6 + $0x100] sm:$0xff]
    %v154 = vld [vmem:[#allocation6 + $0x108] sm:$0xff]
    %v155 = vld [vmem:[#allocation6 + $0x110] sm:$0xff]
    %v156 = vld [vmem:[#allocation6 + $0x118] sm:$0xff]
    %v157 = vld [vmem:[#allocation6 + $0x120] sm:$0xff]
    %v158 = vld [vmem:[#allocation6 + $0x128] sm:$0xff]
    %v159 = vld [vmem:[#allocation6 + $0x130] sm:$0xff]
    %v160 = vld [vmem:[#allocation6 + $0x138] sm:$0xff]
    %v161 = vld [vmem:[#allocation6 + $0x140] sm:$0xff]
    %v162 = vld [vmem:[#allocation6 + $0x148] sm:$0xff]
    %v163 = vld [vmem:[#allocation6 + $0x150] sm:$0xff]
    %v164 = vld [vmem:[#allocation6 + $0x158] sm:$0xff]
    %v165 = vld [vmem:[#allocation6 + $0x160] sm:$0xff]
    %v166 = vld [vmem:[#allocation6 + $0x168] sm:$0xff]
    %v167 = vld [vmem:[#allocation6 + $0x170] sm:$0xff]
    %v168 = vld [vmem:[#allocation6 + $0x178] sm:$0xff]
    %v169 = vld [vmem:[#allocation6 + $0x180] sm:$0xff]
    %v170 = vld [vmem:[#allocation6 + $0x188] sm:$0xff]
    %v171 = vld [vmem:[#allocation6 + $0x190] sm:$0xff]
    %v172 = vld [vmem:[#allocation6 + $0x198] sm:$0xff]
    %v173 = vld [vmem:[#allocation6 + $0x1a0] sm:$0xff]
    %v174 = vld [vmem:[#allocation6 + $0x1a8] sm:$0xff]
    %v175 = vld [vmem:[#allocation6 + $0x1b0] sm:$0xff]
    %v176 = vld [vmem:[#allocation6 + $0x1b8] sm:$0xff]
    %v177 = vld [vmem:[#allocation6 + $0x1c0] sm:$0xff]
    %v178 = vld [vmem:[#allocation6 + $0x1c8] sm:$0xff]
    %v179 = vld [vmem:[#allocation6 + $0x1d0] sm:$0xff]
    %v180 = vld [vmem:[#allocation6 + $0x1d8] sm:$0xff]
    %v181 = vld [vmem:[#allocation6 + $0x1e0] sm:$0xff]
    %v182 = vld [vmem:[#allocation6 + $0x1e8] sm:$0xff]
    %v183 = vld [vmem:[#allocation6 + $0x1f0] sm:$0xff]
    %v184 = vld [vmem:[#allocation6 + $0x1f8] sm:$0xff]
    %v185 = vld [vmem:[#allocation6 + $0x200] sm:$0xff]
    %v186 = vld [vmem:[#allocation6 + $0x208] sm:$0xff]
    %v187 = vld [vmem:[#allocation6 + $0x210] sm:$0xff]
    %v188 = vld [vmem:[#allocation6 + $0x218] sm:$0xff]
    %v189 = vld [vmem:[#allocation6 + $0x220] sm:$0xff]
    %v190 = vld [vmem:[#allocation6 + $0x228] sm:$0xff]
    %v191 = vld [vmem:[#allocation6 + $0x230] sm:$0xff]
    %v192 = vld [vmem:[#allocation6 + $0x238] sm:$0xff]
    %v193 = vld [vmem:[#allocation6 + $0x240] sm:$0xff]
    %v194 = vld [vmem:[#allocation6 + $0x248] sm:$0xff]
    %v195 = vld [vmem:[#allocation6 + $0x250] sm:$0xff]
    %v196 = vld [vmem:[#allocation6 + $0x258] sm:$0xff]
    %v197 = vld [vmem:[#allocation6 + $0x260] sm:$0xff]
    %v198 = vld [vmem:[#allocation6 + $0x268] sm:$0xff]
    %v199 = vld [vmem:[#allocation6 + $0x270] sm:$0xff]
    %v200 = vld [vmem:[#allocation6 + $0x278] sm:$0xff]
    %v201 = vld [vmem:[#allocation6 + $0x280] sm:$0xff]
    %v202 = vld [vmem:[#allocation6 + $0x288] sm:$0xff]
    %v203 = vld [vmem:[#allocation6 + $0x290] sm:$0xff]
    %v204 = vld [vmem:[#allocation6 + $0x298] sm:$0xff]
    %v205 = vld [vmem:[#allocation6 + $0x2a0] sm:$0xff]
    %v206 = vld [vmem:[#allocation6 + $0x2a8] sm:$0xff]
    %v207 = vld [vmem:[#allocation6 + $0x2b0] sm:$0xff]
    %v208 = vld [vmem:[#allocation6 + $0x2b8] sm:$0xff]
    %v209 = vld [vmem:[#allocation6 + $0x2c0] sm:$0xff]
    %v210 = vld [vmem:[#allocation6 + $0x2c8] sm:$0xff]
    %v211 = vld [vmem:[#allocation6 + $0x2d0] sm:$0xff]
    %v212 = vld [vmem:[#allocation6 + $0x2d8] sm:$0xff]
    %v213 = vld [vmem:[#allocation6 + $0x2e0] sm:$0xff]
    %v214 = vld [vmem:[#allocation6 + $0x2e8] sm:$0xff]
    %v215 = vld [vmem:[#allocation6 + $0x2f0] sm:$0xff]
    %v216 = vld [vmem:[#allocation6 + $0x2f8] sm:$0xff]
    %v217 = vld [vmem:[#allocation6 + $0x300] sm:$0xff]
    %v218 = vld [vmem:[#allocation6 + $0x308] sm:$0xff]
    %v219 = vld [vmem:[#allocation6 + $0x310] sm:$0xff]
    %v220 = vld [vmem:[#allocation6 + $0x318] sm:$0xff]
    %v221 = vld [vmem:[#allocation6 + $0x320] sm:$0xff]
    %v222 = vld [vmem:[#allocation6 + $0x328] sm:$0xff]
    %v223 = vld [vmem:[#allocation6 + $0x330] sm:$0xff]
    %v224 = vld [vmem:[#allocation6 + $0x338] sm:$0xff]
    %v225 = vld [vmem:[#allocation6 + $0x340] sm:$0xff]
    %v226 = vld [vmem:[#allocation6 + $0x348] sm:$0xff]
    %v227 = vld [vmem:[#allocation6 + $0x350] sm:$0xff]
    %v228 = vld [vmem:[#allocation6 + $0x358] sm:$0xff]
    %v229 = vld [vmem:[#allocation6 + $0x360] sm:$0xff]
    %v230 = vld [vmem:[#allocation6 + $0x368] sm:$0xff]
    %v231 = vld [vmem:[#allocation6 + $0x370] sm:$0xff]
    %v232 = vld [vmem:[#allocation6 + $0x378] sm:$0xff]
    %v233 = vld [vmem:[#allocation6 + $0x380] sm:$0xff]
    %v234 = vld [vmem:[#allocation6 + $0x388] sm:$0xff]
    %v235 = vld [vmem:[#allocation6 + $0x390] sm:$0xff]
    %v236 = vld [vmem:[#allocation6 + $0x398] sm:$0xff]
    %v237 = vld [vmem:[#allocation6 + $0x3a0] sm:$0xff]
    %v238 = vld [vmem:[#allocation6 + $0x3a8] sm:$0xff]
    %v239 = vld [vmem:[#allocation6 + $0x3b0] sm:$0xff]
    %v240 = vld [vmem:[#allocation6 + $0x3b8] sm:$0xff]
    %v241 = vld [vmem:[#allocation6 + $0x3c0] sm:$0xff]
    %v242 = vld [vmem:[#allocation6 + $0x3c8] sm:$0xff]
    %v243 = vld [vmem:[#allocation6 + $0x3d0] sm:$0xff]
    %v244 = vld [vmem:[#allocation6 + $0x3d8] sm:$0xff]
    %v245 = vld [vmem:[#allocation6 + $0x3e0] sm:$0xff]
    %v246 = vld [vmem:[#allocation6 + $0x3e8] sm:$0xff]
    %v247 = vld [vmem:[#allocation6 + $0x3f0] sm:$0xff]
    %v248 = vld [vmem:[#allocation6 + $0x3f8] sm:$0xff]
    %v249 = vld [vmem:[#allocation6 + $0x400] sm:$0xff]
    %v250 = vld [vmem:[#allocation6 + $0x408] sm:$0xff]
    %v251 = vld [vmem:[#allocation6 + $0x410] sm:$0xff]
    %v252 = vld [vmem:[#allocation6 + $0x418] sm:$0xff]
    %v253 = vld [vmem:[#allocation6 + $0x420] sm:$0xff]
    %v254 = vld [vmem:[#allocation6 + $0x428] sm:$0xff]
    %v255 = vld [vmem:[#allocation6 + $0x430] sm:$0xff]
    %v256 = vld [vmem:[#allocation6 + $0x438] sm:$0xff]
    %v257 = vld [vmem:[#allocation6 + $0x440] sm:$0xff]
    %v258 = vld [vmem:[#allocation6 + $0x448] sm:$0xff]
    %v259 = vld [vmem:[#allocation6 + $0x450] sm:$0xff]
    %v260 = vld [vmem:[#allocation6 + $0x458] sm:$0xff]
    %v261 = vld [vmem:[#allocation6 + $0x460] sm:$0xff]
    %v262 = vld [vmem:[#allocation6 + $0x468] sm:$0xff]
    %v263 = vld [vmem:[#allocation6 + $0x470] sm:$0xff]
    %v264 = vld [vmem:[#allocation6 + $0x478] sm:$0xff]
    %v265 = vld [vmem:[#allocation6 + $0x480] sm:$0xff]
    %v266 = vld [vmem:[#allocation6 + $0x488] sm:$0xff]
    %v267 = vld [vmem:[#allocation6 + $0x490] sm:$0xff]
    %v268 = vld [vmem:[#allocation6 + $0x498] sm:$0xff]
    %v269 = vld [vmem:[#allocation6 + $0x4a0] sm:$0xff]
    %v270 = vld [vmem:[#allocation6 + $0x4a8] sm:$0xff]
    %v271 = vld [vmem:[#allocation6 + $0x4b0] sm:$0xff]
    %v272 = vld [vmem:[#allocation6 + $0x4b8] sm:$0xff]
    %v273 = vld [vmem:[#allocation6 + $0x4c0] sm:$0xff]
    %v274 = vld [vmem:[#allocation6 + $0x4c8] sm:$0xff]
    %v275 = vld [vmem:[#allocation6 + $0x4d0] sm:$0xff]
    %v276 = vld [vmem:[#allocation6 + $0x4d8] sm:$0xff]
    %v277 = vld [vmem:[#allocation6 + $0x4e0] sm:$0xff]
    %v278 = vld [vmem:[#allocation6 + $0x4e8] sm:$0xff]
    %v279 = vld [vmem:[#allocation6 + $0x4f0] sm:$0xff]
    %v280 = vld [vmem:[#allocation6 + $0x4f8] sm:$0xff]
    %v281 = vld [vmem:[#allocation6 + $0x500] sm:$0xff]
    %v282 = vld [vmem:[#allocation6 + $0x508] sm:$0xff]
    %v283 = vld [vmem:[#allocation6 + $0x510] sm:$0xff]
    %v284 = vld [vmem:[#allocation6 + $0x518] sm:$0xff]
    %v285 = vld [vmem:[#allocation6 + $0x520] sm:$0xff]
    %v286 = vld [vmem:[#allocation6 + $0x528] sm:$0xff]
    %v287 = vld [vmem:[#allocation6 + $0x530] sm:$0xff]
    %v288 = vld [vmem:[#allocation6 + $0x538] sm:$0xff]
    %v289 = vld [vmem:[#allocation6 + $0x540] sm:$0xff]
    %v290 = vld [vmem:[#allocation6 + $0x548] sm:$0xff]
    %v291 = vld [vmem:[#allocation6 + $0x550] sm:$0xff]
    %v292 = vld [vmem:[#allocation6 + $0x558] sm:$0xff]
    %v293 = vld [vmem:[#allocation6 + $0x560] sm:$0xff]
    %v294 = vld [vmem:[#allocation6 + $0x568] sm:$0xff]
    %v295 = vld [vmem:[#allocation6 + $0x570] sm:$0xff]
    %v296 = vld [vmem:[#allocation6 + $0x578] sm:$0xff]
    %v297 = vld [vmem:[#allocation6 + $0x580] sm:$0xff]
    %v298 = vld [vmem:[#allocation6 + $0x588] sm:$0xff]
    %v299 = vld [vmem:[#allocation6 + $0x590] sm:$0xff]
    %v300 = vld [vmem:[#allocation6 + $0x598] sm:$0xff]
    %v301 = vld [vmem:[#allocation6 + $0x5a0] sm:$0xff]
    %v302 = vld [vmem:[#allocation6 + $0x5a8] sm:$0xff]
    %v303 = vld [vmem:[#allocation6 + $0x5b0] sm:$0xff]
    %v304 = vld [vmem:[#allocation6 + $0x5b8] sm:$0xff]
    %v305 = vld [vmem:[#allocation6 + $0x5c0] sm:$0xff]
    %v306 = vld [vmem:[#allocation6 + $0x5c8] sm:$0xff]
    %v307 = vld [vmem:[#allocation6 + $0x5d0] sm:$0xff]
    %v308 = vld [vmem:[#allocation6 + $0x5d8] sm:$0xff]
    %v309 = vld [vmem:[#allocation6 + $0x5e0] sm:$0xff]
    %v310 = vld [vmem:[#allocation6 + $0x5e8] sm:$0xff]
    %v311 = vld [vmem:[#allocation6 + $0x5f0] sm:$0xff]
    %v312 = vld [vmem:[#allocation6 + $0x5f8] sm:$0xff]
    %v313 = vld [vmem:[#allocation6 + $0x600] sm:$0xff]
    %v314 = vld [vmem:[#allocation6 + $0x608] sm:$0xff]
    %v315 = vld [vmem:[#allocation6 + $0x610] sm:$0xff]
    %v316 = vld [vmem:[#allocation6 + $0x618] sm:$0xff]
    %v317 = vld [vmem:[#allocation6 + $0x620] sm:$0xff]
    %v318 = vld [vmem:[#allocation6 + $0x628] sm:$0xff]
    %v319 = vld [vmem:[#allocation6 + $0x630] sm:$0xff]
    %v320 = vld [vmem:[#allocation6 + $0x638] sm:$0xff]
    %v321 = vld [vmem:[#allocation6 + $0x640] sm:$0xff]
    %v322 = vld [vmem:[#allocation6 + $0x648] sm:$0xff]
    %v323 = vld [vmem:[#allocation6 + $0x650] sm:$0xff]
    %v324 = vld [vmem:[#allocation6 + $0x658] sm:$0xff]
    %v325 = vld [vmem:[#allocation6 + $0x660] sm:$0xff]
    %v326 = vld [vmem:[#allocation6 + $0x668] sm:$0xff]
    %v327 = vld [vmem:[#allocation6 + $0x670] sm:$0xff]
    %v328 = vld [vmem:[#allocation6 + $0x678] sm:$0xff]
    %v329 = vld [vmem:[#allocation6 + $0x680] sm:$0xff]
    %v330 = vld [vmem:[#allocation6 + $0x688] sm:$0xff]
    %v331 = vld [vmem:[#allocation6 + $0x690] sm:$0xff]
    %v332 = vld [vmem:[#allocation6 + $0x698] sm:$0xff]
    %v333 = vld [vmem:[#allocation6 + $0x6a0] sm:$0xff]
    %v334 = vld [vmem:[#allocation6 + $0x6a8] sm:$0xff]
    %v335 = vld [vmem:[#allocation6 + $0x6b0] sm:$0xff]
    %v336 = vld [vmem:[#allocation6 + $0x6b8] sm:$0xff]
    %v337 = vld [vmem:[#allocation6 + $0x6c0] sm:$0xff]
    %v338 = vld [vmem:[#allocation6 + $0x6c8] sm:$0xff]
    %v339 = vld [vmem:[#allocation6 + $0x6d0] sm:$0xff]
    %v340 = vld [vmem:[#allocation6 + $0x6d8] sm:$0xff]
    %v341 = vld [vmem:[#allocation6 + $0x6e0] sm:$0xff]
    %v342 = vld [vmem:[#allocation6 + $0x6e8] sm:$0xff]
    %v343 = vld [vmem:[#allocation6 + $0x6f0] sm:$0xff]
    %v344 = vld [vmem:[#allocation6 + $0x6f8] sm:$0xff]
    %v345 = vld [vmem:[#allocation6 + $0x700] sm:$0xff]
    %v346 = vld [vmem:[#allocation6 + $0x708] sm:$0xff]
    %v347 = vld [vmem:[#allocation6 + $0x710] sm:$0xff]
    %v348 = vld [vmem:[#allocation6 + $0x718] sm:$0xff]
    %v349 = vld [vmem:[#allocation6 + $0x720] sm:$0xff]
    %v350 = vld [vmem:[#allocation6 + $0x728] sm:$0xff]
    %v351 = vld [vmem:[#allocation6 + $0x730] sm:$0xff]
    %v352 = vld [vmem:[#allocation6 + $0x738] sm:$0xff]
    %v353 = vld [vmem:[#allocation6 + $0x740] sm:$0xff]
    %v354 = vld [vmem:[#allocation6 + $0x748] sm:$0xff]
    %v355 = vld [vmem:[#allocation6 + $0x750] sm:$0xff]
    %v356 = vld [vmem:[#allocation6 + $0x758] sm:$0xff]
    %v357 = vld [vmem:[#allocation6 + $0x760] sm:$0xff]
    %v358 = vld [vmem:[#allocation6 + $0x768] sm:$0xff]
    %v359 = vld [vmem:[#allocation6 + $0x770] sm:$0xff]
    %v360 = vld [vmem:[#allocation6 + $0x778] sm:$0xff]
    %v361 = vld [vmem:[#allocation6 + $0x780] sm:$0xff]
    %v362 = vld [vmem:[#allocation6 + $0x788] sm:$0xff]
    %v363 = vld [vmem:[#allocation6 + $0x790] sm:$0xff]
    %v364 = vld [vmem:[#allocation6 + $0x798] sm:$0xff]
    %v365 = vld [vmem:[#allocation6 + $0x7a0] sm:$0xff]
    %v366 = vld [vmem:[#allocation6 + $0x7a8] sm:$0xff]
    %v367 = vld [vmem:[#allocation6 + $0x7b0] sm:$0xff]
    %v368 = vld [vmem:[#allocation6 + $0x7b8] sm:$0xff]
    %v369 = vld [vmem:[#allocation6 + $0x7c0] sm:$0xff]
    %v370 = vld [vmem:[#allocation6 + $0x7c8] sm:$0xff]
    %v371 = vld [vmem:[#allocation6 + $0x7d0] sm:$0xff]
    %v372 = vld [vmem:[#allocation6 + $0x7d8] sm:$0xff]
    %v373 = vld [vmem:[#allocation6 + $0x7e0] sm:$0xff]
    %v374 = vld [vmem:[#allocation6 + $0x7e8] sm:$0xff]
    %v375 = vld [vmem:[#allocation6 + $0x7f0] sm:$0xff]
    %v376 = vld [vmem:[#allocation6 + $0x7f8] sm:$0xff]
    %v377 = vld [vmem:[#allocation6 + $0x800] sm:$0xff]
    %v378 = vld [vmem:[#allocation6 + $0x808] sm:$0xff]
    %v379 = vld [vmem:[#allocation6 + $0x810] sm:$0xff]
    %v380 = vld [vmem:[#allocation6 + $0x818] sm:$0xff]
    %v381 = vld [vmem:[#allocation6 + $0x820] sm:$0xff]
    %v382 = vld [vmem:[#allocation6 + $0x828] sm:$0xff]
    %v383 = vld [vmem:[#allocation6 + $0x830] sm:$0xff]
    %v384 = vld [vmem:[#allocation6 + $0x838] sm:$0xff]
    %v385 = vld [vmem:[#allocation6 + $0x840] sm:$0xff]
    %v386 = vld [vmem:[#allocation6 + $0x848] sm:$0xff]
    %v387 = vld [vmem:[#allocation6 + $0x850] sm:$0xff]
    %v388 = vld [vmem:[#allocation6 + $0x858] sm:$0xff]
    %v389 = vld [vmem:[#allocation6 + $0x860] sm:$0xff]
    %v390 = vld [vmem:[#allocation6 + $0x868] sm:$0xff]
    %v391 = vld [vmem:[#allocation6 + $0x870] sm:$0xff]
    %v392 = vld [vmem:[#allocation6 + $0x878] sm:$0xff]
    %v393 = vld [vmem:[#allocation6 + $0x880] sm:$0xff]
    %v394 = vld [vmem:[#allocation6 + $0x888] sm:$0xff]
    %v395 = vld [vmem:[#allocation6 + $0x890] sm:$0xff]
    %v396 = vld [vmem:[#allocation6 + $0x898] sm:$0xff]
    %v397 = vld [vmem:[#allocation6 + $0x8a0] sm:$0xff]
    %v398 = vld [vmem:[#allocation6 + $0x8a8] sm:$0xff]
    %v399 = vld [vmem:[#allocation6 + $0x8b0] sm:$0xff]
    %v400 = vld [vmem:[#allocation6 + $0x8b8] sm:$0xff]
    %v401 = vld [vmem:[#allocation6 + $0x8c0] sm:$0xff]
    %v402 = vld [vmem:[#allocation6 + $0x8c8] sm:$0xff]
    %v403 = vld [vmem:[#allocation6 + $0x8d0] sm:$0xff]
    %v404 = vld [vmem:[#allocation6 + $0x8d8] sm:$0xff]
    %v405 = vld [vmem:[#allocation6 + $0x8e0] sm:$0xff]
    %v406 = vld [vmem:[#allocation6 + $0x8e8] sm:$0xff]
    %v407 = vld [vmem:[#allocation6 + $0x8f0] sm:$0xff]
    %v408 = vld [vmem:[#allocation6 + $0x8f8] sm:$0xff]
    %v409 = vld [vmem:[#allocation6 + $0x900] sm:$0xff]
    %v410 = vld [vmem:[#allocation6 + $0x908] sm:$0xff]
    %v411 = vld [vmem:[#allocation6 + $0x910] sm:$0xff]
    %v412 = vld [vmem:[#allocation6 + $0x918] sm:$0xff]
    %v413 = vld [vmem:[#allocation6 + $0x920] sm:$0xff]
    %v414 = vld [vmem:[#allocation6 + $0x928] sm:$0xff]
    %v415 = vld [vmem:[#allocation6 + $0x930] sm:$0xff]
    %v416 = vld [vmem:[#allocation6 + $0x938] sm:$0xff]
    %v417 = vld [vmem:[#allocation6 + $0x940] sm:$0xff]
    %v418 = vld [vmem:[#allocation6 + $0x948] sm:$0xff]
    %v419 = vld [vmem:[#allocation6 + $0x950] sm:$0xff]
    %v420 = vld [vmem:[#allocation6 + $0x958] sm:$0xff]
    %v421 = vld [vmem:[#allocation6 + $0x960] sm:$0xff]
    %v422 = vld [vmem:[#allocation6 + $0x968] sm:$0xff]
    %v423 = vld [vmem:[#allocation6 + $0x970] sm:$0xff]
    %v424 = vld [vmem:[#allocation6 + $0x978] sm:$0xff]
    %v425 = vld [vmem:[#allocation6 + $0x980] sm:$0xff]
    %v426 = vld [vmem:[#allocation6 + $0x988] sm:$0xff]
    %v427 = vld [vmem:[#allocation6 + $0x990] sm:$0xff]
    %v428 = vld [vmem:[#allocation6 + $0x998] sm:$0xff]
    %v429 = vld [vmem:[#allocation6 + $0x9a0] sm:$0xff]
    %v430 = vld [vmem:[#allocation6 + $0x9a8] sm:$0xff]
    %v431 = vld [vmem:[#allocation6 + $0x9b0] sm:$0xff]
    %v432 = vld [vmem:[#allocation6 + $0x9b8] sm:$0xff]
    %v433 = vld [vmem:[#allocation6 + $0x9c0] sm:$0xff]
    %v434 = vld [vmem:[#allocation6 + $0x9c8] sm:$0xff]
    %v435 = vld [vmem:[#allocation6 + $0x9d0] sm:$0xff]
    %v436 = vld [vmem:[#allocation6 + $0x9d8] sm:$0xff]
    %v437 = vld [vmem:[#allocation6 + $0x9e0] sm:$0xff]
    %v438 = vld [vmem:[#allocation6 + $0x9e8] sm:$0xff]
    %v439 = vld [vmem:[#allocation6 + $0x9f0] sm:$0xff]
    %v440 = vld [vmem:[#allocation6 + $0x9f8] sm:$0xff]
    %v441 = vld [vmem:[#allocation6 + $0xa00] sm:$0xff]
    %v442 = vld [vmem:[#allocation6 + $0xa08] sm:$0xff]
    %v443 = vld [vmem:[#allocation6 + $0xa10] sm:$0xff]
    %v444 = vld [vmem:[#allocation6 + $0xa18] sm:$0xff]
    %v445 = vld [vmem:[#allocation6 + $0xa20] sm:$0xff]
    %v446 = vld [vmem:[#allocation6 + $0xa28] sm:$0xff]
    %v447 = vld [vmem:[#allocation6 + $0xa30] sm:$0xff]
    %v448 = vld [vmem:[#allocation6 + $0xa38] sm:$0xff]
    %v449 = vld [vmem:[#allocation6 + $0xa40] sm:$0xff]
    %v450 = vld [vmem:[#allocation6 + $0xa48] sm:$0xff]
    %v451 = vld [vmem:[#allocation6 + $0xa50] sm:$0xff]
    %v452 = vld [vmem:[#allocation6 + $0xa58] sm:$0xff]
    %v453 = vld [vmem:[#allocation6 + $0xa60] sm:$0xff]
    %v454 = vld [vmem:[#allocation6 + $0xa68] sm:$0xff]
    %v455 = vld [vmem:[#allocation6 + $0xa70] sm:$0xff]
    %v456 = vld [vmem:[#allocation6 + $0xa78] sm:$0xff]
    %v457 = vld [vmem:[#allocation6 + $0xa80] sm:$0xff]
    %v458 = vld [vmem:[#allocation6 + $0xa88] sm:$0xff]
    %v459 = vld [vmem:[#allocation6 + $0xa90] sm:$0xff]
    %v460 = vld [vmem:[#allocation6 + $0xa98] sm:$0xff]
    %v461 = vld [vmem:[#allocation6 + $0xaa0] sm:$0xff]
    %v462 = vld [vmem:[#allocation6 + $0xaa8] sm:$0xff]
    %v463 = vld [vmem:[#allocation6 + $0xab0] sm:$0xff]
    %v464 = vld [vmem:[#allocation6 + $0xab8] sm:$0xff]
    %v465 = vld [vmem:[#allocation6 + $0xac0] sm:$0xff]
    %v466 = vld [vmem:[#allocation6 + $0xac8] sm:$0xff]
    %v467 = vld [vmem:[#allocation6 + $0xad0] sm:$0xff]
    %v468 = vld [vmem:[#allocation6 + $0xad8] sm:$0xff]
    %v469 = vld [vmem:[#allocation6 + $0xae0] sm:$0xff]
    %v470 = vld [vmem:[#allocation6 + $0xae8] sm:$0xff]
    %v471 = vld [vmem:[#allocation6 + $0xaf0] sm:$0xff]
    %v472 = vld [vmem:[#allocation6 + $0xaf8] sm:$0xff]
    %v473 = vld [vmem:[#allocation6 + $0xb00] sm:$0xff]
    %v474 = vld [vmem:[#allocation6 + $0xb08] sm:$0xff]
    %v475 = vld [vmem:[#allocation6 + $0xb10] sm:$0xff]
    %v476 = vld [vmem:[#allocation6 + $0xb18] sm:$0xff]
    %v477 = vld [vmem:[#allocation6 + $0xb20] sm:$0xff]
    %v478 = vld [vmem:[#allocation6 + $0xb28] sm:$0xff]
    %v479 = vld [vmem:[#allocation6 + $0xb30] sm:$0xff]
    %v480 = vld [vmem:[#allocation6 + $0xb38] sm:$0xff]
    %v481 = vld [vmem:[#allocation6 + $0xb40] sm:$0xff]
    %v482 = vld [vmem:[#allocation6 + $0xb48] sm:$0xff]
    %v483 = vld [vmem:[#allocation6 + $0xb50] sm:$0xff]
    %v484 = vld [vmem:[#allocation6 + $0xb58] sm:$0xff]
    %v485 = vld [vmem:[#allocation6 + $0xb60] sm:$0xff]
    %v486 = vld [vmem:[#allocation6 + $0xb68] sm:$0xff]
    %v487 = vld [vmem:[#allocation6 + $0xb70] sm:$0xff]
    %v488 = vld [vmem:[#allocation6 + $0xb78] sm:$0xff]
    %v489 = vld [vmem:[#allocation6 + $0xb80] sm:$0xff]
    %v490 = vld [vmem:[#allocation6 + $0xb88] sm:$0xff]
    %v491 = vld [vmem:[#allocation6 + $0xb90] sm:$0xff]
    %v492 = vld [vmem:[#allocation6 + $0xb98] sm:$0xff]
    %v493 = vld [vmem:[#allocation6 + $0xba0] sm:$0xff]
    %v494 = vld [vmem:[#allocation6 + $0xba8] sm:$0xff]
    %v495 = vld [vmem:[#allocation6 + $0xbb0] sm:$0xff]
    %v496 = vld [vmem:[#allocation6 + $0xbb8] sm:$0xff]
    %v497 = vld [vmem:[#allocation6 + $0xbc0] sm:$0xff]
    %v498 = vld [vmem:[#allocation6 + $0xbc8] sm:$0xff]
    %v499 = vld [vmem:[#allocation6 + $0xbd0] sm:$0xff]
    %v500 = vld [vmem:[#allocation6 + $0xbd8] sm:$0xff]
    %v501 = vld [vmem:[#allocation6 + $0xbe0] sm:$0xff]
    %v502 = vld [vmem:[#allocation6 + $0xbe8] sm:$0xff]
    %v503 = vld [vmem:[#allocation6 + $0xbf0] sm:$0xff]
    %v504 = vld [vmem:[#allocation6 + $0xbf8] sm:$0xff]
    %v505 = vld [vmem:[#allocation6 + $0xc00] sm:$0xff]
    %v506 = vld [vmem:[#allocation6 + $0xc08] sm:$0xff]
    %v507 = vld [vmem:[#allocation6 + $0xc10] sm:$0xff]
    %v508 = vld [vmem:[#allocation6 + $0xc18] sm:$0xff]
    %v509 = vld [vmem:[#allocation6 + $0xc20] sm:$0xff]
    %v510 = vld [vmem:[#allocation6 + $0xc28] sm:$0xff]
    %v511 = vld [vmem:[#allocation6 + $0xc30] sm:$0xff]
    %v512 = vld [vmem:[#allocation6 + $0xc38] sm:$0xff]
    %v513 = vld [vmem:[#allocation6 + $0xc40] sm:$0xff]
    %v514 = vld [vmem:[#allocation6 + $0xc48] sm:$0xff]
    %v515 = vld [vmem:[#allocation6 + $0xc50] sm:$0xff]
    %v516 = vld [vmem:[#allocation6 + $0xc58] sm:$0xff]
    %v517 = vld [vmem:[#allocation6 + $0xc60] sm:$0xff]
    %v518 = vld [vmem:[#allocation6 + $0xc68] sm:$0xff]
    %v519 = vld [vmem:[#allocation6 + $0xc70] sm:$0xff]
    %v520 = vld [vmem:[#allocation6 + $0xc78] sm:$0xff]
    %v521 = vld [vmem:[#allocation6 + $0xc80] sm:$0xff]
    %v522 = vld [vmem:[#allocation6 + $0xc88] sm:$0xff]
    %v523 = vld [vmem:[#allocation6 + $0xc90] sm:$0xff]
    %v524 = vld [vmem:[#allocation6 + $0xc98] sm:$0xff]
    %v525 = vld [vmem:[#allocation6 + $0xca0] sm:$0xff]
    %v526 = vld [vmem:[#allocation6 + $0xca8] sm:$0xff]
    %v527 = vld [vmem:[#allocation6 + $0xcb0] sm:$0xff]
    %v528 = vld [vmem:[#allocation6 + $0xcb8] sm:$0xff]
    %v529 = vld [vmem:[#allocation6 + $0xcc0] sm:$0xff]
    %v530 = vld [vmem:[#allocation6 + $0xcc8] sm:$0xff]
    %v531 = vld [vmem:[#allocation6 + $0xcd0] sm:$0xff]
    %v532 = vld [vmem:[#allocation6 + $0xcd8] sm:$0xff]
    %v533 = vld [vmem:[#allocation6 + $0xce0] sm:$0xff]
    %v534 = vld [vmem:[#allocation6 + $0xce8] sm:$0xff]
    %v535 = vld [vmem:[#allocation6 + $0xcf0] sm:$0xff]
    %v536 = vld [vmem:[#allocation6 + $0xcf8] sm:$0xff]
    %v537 = vld [vmem:[#allocation6 + $0xd00] sm:$0xff]
    %v538 = vld [vmem:[#allocation6 + $0xd08] sm:$0xff]
    %v539 = vld [vmem:[#allocation6 + $0xd10] sm:$0xff]
    %v540 = vld [vmem:[#allocation6 + $0xd18] sm:$0xff]
    %v541 = vld [vmem:[#allocation6 + $0xd20] sm:$0xff]
    %v542 = vld [vmem:[#allocation6 + $0xd28] sm:$0xff]
    %v543 = vld [vmem:[#allocation6 + $0xd30] sm:$0xff]
    %v544 = vld [vmem:[#allocation6 + $0xd38] sm:$0xff]
    %v545 = vld [vmem:[#allocation6 + $0xd40] sm:$0xff]
    %v546 = vld [vmem:[#allocation6 + $0xd48] sm:$0xff]
    %v547 = vld [vmem:[#allocation6 + $0xd50] sm:$0xff]
    %v548 = vld [vmem:[#allocation6 + $0xd58] sm:$0xff]
    %v549 = vld [vmem:[#allocation6 + $0xd60] sm:$0xff]
    %v550 = vld [vmem:[#allocation6 + $0xd68] sm:$0xff]
    %v551 = vld [vmem:[#allocation6 + $0xd70] sm:$0xff]
    %v552 = vld [vmem:[#allocation6 + $0xd78] sm:$0xff]
    %v553 = vld [vmem:[#allocation6 + $0xd80] sm:$0xff]
    %v554 = vld [vmem:[#allocation6 + $0xd88] sm:$0xff]
    %v555 = vld [vmem:[#allocation6 + $0xd90] sm:$0xff]
    %v556 = vld [vmem:[#allocation6 + $0xd98] sm:$0xff]
    %v557 = vld [vmem:[#allocation6 + $0xda0] sm:$0xff]
    %v558 = vld [vmem:[#allocation6 + $0xda8] sm:$0xff]
    %v559 = vld [vmem:[#allocation6 + $0xdb0] sm:$0xff]
    %v560 = vld [vmem:[#allocation6 + $0xdb8] sm:$0xff]
    %v561 = vld [vmem:[#allocation6 + $0xdc0] sm:$0xff]
    %v562 = vld [vmem:[#allocation6 + $0xdc8] sm:$0xff]
    %v563 = vld [vmem:[#allocation6 + $0xdd0] sm:$0xff]
    %v564 = vld [vmem:[#allocation6 + $0xdd8] sm:$0xff]
    %v565 = vld [vmem:[#allocation6 + $0xde0] sm:$0xff]
    %v566 = vld [vmem:[#allocation6 + $0xde8] sm:$0xff]
    %v567 = vld [vmem:[#allocation6 + $0xdf0] sm:$0xff]
    %v568 = vld [vmem:[#allocation6 + $0xdf8] sm:$0xff]
    %v569 = vld [vmem:[#allocation6 + $0xe00] sm:$0xff]
    %v570 = vld [vmem:[#allocation6 + $0xe08] sm:$0xff]
    %v571 = vld [vmem:[#allocation6 + $0xe10] sm:$0xff]
    %v572 = vld [vmem:[#allocation6 + $0xe18] sm:$0xff]
    %v573 = vld [vmem:[#allocation6 + $0xe20] sm:$0xff]
    %v574 = vld [vmem:[#allocation6 + $0xe28] sm:$0xff]
    %v575 = vld [vmem:[#allocation6 + $0xe30] sm:$0xff]
    %v576 = vld [vmem:[#allocation6 + $0xe38] sm:$0xff]
    %v577 = vld [vmem:[#allocation6 + $0xe40] sm:$0xff]
    %v578 = vld [vmem:[#allocation6 + $0xe48] sm:$0xff]
    %v579 = vld [vmem:[#allocation6 + $0xe50] sm:$0xff]
    %v580 = vld [vmem:[#allocation6 + $0xe58] sm:$0xff]
    %v581 = vld [vmem:[#allocation6 + $0xe60] sm:$0xff]
    %v582 = vld [vmem:[#allocation6 + $0xe68] sm:$0xff]
    %v583 = vld [vmem:[#allocation6 + $0xe70] sm:$0xff]
    %v584 = vld [vmem:[#allocation6 + $0xe78] sm:$0xff]
    %v585 = vld [vmem:[#allocation6 + $0xe80] sm:$0xff]
    %v586 = vld [vmem:[#allocation6 + $0xe88] sm:$0xff]
    %v587 = vld [vmem:[#allocation6 + $0xe90] sm:$0xff]
    %v588 = vld [vmem:[#allocation6 + $0xe98] sm:$0xff]
    %v589 = vld [vmem:[#allocation6 + $0xea0] sm:$0xff]
    %v590 = vld [vmem:[#allocation6 + $0xea8] sm:$0xff]
    %v591 = vld [vmem:[#allocation6 + $0xeb0] sm:$0xff]
    %v592 = vld [vmem:[#allocation6 + $0xeb8] sm:$0xff]
    %v593 = vld [vmem:[#allocation6 + $0xec0] sm:$0xff]
    %v594 = vld [vmem:[#allocation6 + $0xec8] sm:$0xff]
    %v595 = vld [vmem:[#allocation6 + $0xed0] sm:$0xff]
    %v596 = vld [vmem:[#allocation6 + $0xed8] sm:$0xff]
    %v597 = vld [vmem:[#allocation6 + $0xee0] sm:$0xff]
    %v598 = vld [vmem:[#allocation6 + $0xee8] sm:$0xff]
    %v599 = vld [vmem:[#allocation6 + $0xef0] sm:$0xff]
    %v600 = vld [vmem:[#allocation6 + $0xef8] sm:$0xff]
    %v601 = vld [vmem:[#allocation6 + $0xf00] sm:$0xff]
    %v602 = vld [vmem:[#allocation6 + $0xf08] sm:$0xff]
    %v603 = vld [vmem:[#allocation6 + $0xf10] sm:$0xff]
    %v604 = vld [vmem:[#allocation6 + $0xf18] sm:$0xff]
    %v605 = vld [vmem:[#allocation6 + $0xf20] sm:$0xff]
    %v606 = vld [vmem:[#allocation6 + $0xf28] sm:$0xff]
    %v607 = vld [vmem:[#allocation6 + $0xf30] sm:$0xff]
    %v608 = vld [vmem:[#allocation6 + $0xf38] sm:$0xff]
    %v609 = vld [vmem:[#allocation6 + $0xf40] sm:$0xff]
    %v610 = vld [vmem:[#allocation6 + $0xf48] sm:$0xff]
    %v611 = vld [vmem:[#allocation6 + $0xf50] sm:$0xff]
    %v612 = vld [vmem:[#allocation6 + $0xf58] sm:$0xff]
    %v613 = vld [vmem:[#allocation6 + $0xf60] sm:$0xff]
    %v614 = vld [vmem:[#allocation6 + $0xf68] sm:$0xff]
    %v615 = vld [vmem:[#allocation6 + $0xf70] sm:$0xff]
    %v616 = vld [vmem:[#allocation6 + $0xf78] sm:$0xff]
    %v617 = vld [vmem:[#allocation6 + $0xf80] sm:$0xff]
    %v618 = vld [vmem:[#allocation6 + $0xf88] sm:$0xff]
    %v619 = vld [vmem:[#allocation6 + $0xf90] sm:$0xff]
    %v620 = vld [vmem:[#allocation6 + $0xf98] sm:$0xff]
    %v621 = vld [vmem:[#allocation6 + $0xfa0] sm:$0xff]
    %v622 = vld [vmem:[#allocation6 + $0xfa8] sm:$0xff]
    %v623 = vld [vmem:[#allocation6 + $0xfb0] sm:$0xff]
    %v624 = vld [vmem:[#allocation6 + $0xfb8] sm:$0xff]
    %v625 = vld [vmem:[#allocation6 + $0xfc0] sm:$0xff]
    %v626 = vld [vmem:[#allocation6 + $0xfc8] sm:$0xff]
    %v627 = vld [vmem:[#allocation6 + $0xfd0] sm:$0xff]
    %v628 = vld [vmem:[#allocation6 + $0xfd8] sm:$0xff]
    %v629 = vld [vmem:[#allocation6 + $0xfe0] sm:$0xff]
    %v630 = vld [vmem:[#allocation6 + $0xfe8] sm:$0xff]
    %v631 = vld [vmem:[#allocation6 + $0xff0] sm:$0xff]
    %v632 = vld [vmem:[#allocation6 + $0xff8] sm:$0xff]
    %v633 = vld [vmem:[#allocation8] sm:$0xff]
    %v634 = vld [vmem:[#allocation8 + $0x8] sm:$0xff]
    %v635 = vld [vmem:[#allocation8 + $0x10] sm:$0xff]
    %v636 = vld [vmem:[#allocation8 + $0x18] sm:$0xff]
    %v641 = vperm.slane %v633, 0
    %v642 = vperm.slane %v633, 1
    %v643 = vperm.slane %v633, 2
    %v644 = vperm.slane %v633, 3
    %v645 = vperm.slane %v633, 4
    %v646 = vperm.slane %v633, 5
    %v647 = vperm.slane %v633, 6
    %v648 = vperm.slane %v633, 7
    %v649 = vperm.slane %v634, 0
    %v650 = vperm.slane %v634, 1
    %v651 = vperm.slane %v634, 2
    %v652 = vperm.slane %v634, 3
    %v653 = vperm.slane %v634, 4
    %v654 = vperm.slane %v634, 5
    %v655 = vperm.slane %v634, 6
    %v656 = vperm.slane %v634, 7
    %v657 = vperm.slane %v635, 0
    %v658 = vperm.slane %v635, 1
    %v659 = vperm.slane %v635, 2
    %v660 = vperm.slane %v635, 3
    %v661 = vperm.slane %v635, 4
    %v662 = vperm.slane %v635, 5
    %v663 = vperm.slane %v635, 6
    %v664 = vperm.slane %v635, 7
    %v665 = vperm.slane %v636, 0
    %v666 = vperm.slane %v636, 1
    %v667 = vperm.slane %v636, 2
    %v668 = vperm.slane %v636, 3
    %v669 = vperm.slane %v636, 4
    %v670 = vperm.slane %v636, 5
    %v671 = vperm.slane %v636, 6
    %v672 = vperm.slane %v636, 7
    %v1217 = vunpack.c.l.b16 %v121
    %v1218 = vunpack.c.h.b16 %v121
    %v1219 = vunpack.c.l.b16 %v122
    %v1220 = vunpack.c.h.b16 %v122
    %v1221 = vunpack.c.l.b16 %v123
    %v1222 = vunpack.c.h.b16 %v123
    %v1223 = vunpack.c.l.b16 %v124
    %v1224 = vunpack.c.h.b16 %v124
    %v1225 = vunpack.c.l.b16 %v125
    %v1226 = vunpack.c.h.b16 %v125
    %v1227 = vunpack.c.l.b16 %v126
    %v1228 = vunpack.c.h.b16 %v126
    %v1229 = vunpack.c.l.b16 %v127
    %v1230 = vunpack.c.h.b16 %v127
    %v1231 = vunpack.c.l.b16 %v128
    %v1232 = vunpack.c.h.b16 %v128
    %v1233 = vunpack.c.l.b16 %v129
    %v1234 = vunpack.c.h.b16 %v129
    %v1235 = vunpack.c.l.b16 %v130
    %v1236 = vunpack.c.h.b16 %v130
    %v1237 = vunpack.c.l.b16 %v131
    %v1238 = vunpack.c.h.b16 %v131
    %v1239 = vunpack.c.l.b16 %v132
    %v1240 = vunpack.c.h.b16 %v132
    %v1241 = vunpack.c.l.b16 %v133
    %v1242 = vunpack.c.h.b16 %v133
    %v1243 = vunpack.c.l.b16 %v134
    %v1244 = vunpack.c.h.b16 %v134
    %v1245 = vunpack.c.l.b16 %v135
    %v1246 = vunpack.c.h.b16 %v135
    %v1247 = vunpack.c.l.b16 %v136
    %v1248 = vunpack.c.h.b16 %v136
    %v1249 = vunpack.c.l.b16 %v137
    %v1250 = vunpack.c.h.b16 %v137
    %v1251 = vunpack.c.l.b16 %v138
    %v1252 = vunpack.c.h.b16 %v138
    %v1253 = vunpack.c.l.b16 %v139
    %v1254 = vunpack.c.h.b16 %v139
    %v1255 = vunpack.c.l.b16 %v140
    %v1256 = vunpack.c.h.b16 %v140
    %v1257 = vunpack.c.l.b16 %v141
    %v1258 = vunpack.c.h.b16 %v141
    %v1259 = vunpack.c.l.b16 %v142
    %v1260 = vunpack.c.h.b16 %v142
    %v1261 = vunpack.c.l.b16 %v143
    %v1262 = vunpack.c.h.b16 %v143
    %v1263 = vunpack.c.l.b16 %v144
    %v1264 = vunpack.c.h.b16 %v144
    %v1265 = vunpack.c.l.b16 %v145
    %v1266 = vunpack.c.h.b16 %v145
    %v1267 = vunpack.c.l.b16 %v146
    %v1268 = vunpack.c.h.b16 %v146
    %v1269 = vunpack.c.l.b16 %v147
    %v1270 = vunpack.c.h.b16 %v147
    %v1271 = vunpack.c.l.b16 %v148
    %v1272 = vunpack.c.h.b16 %v148
    %v1273 = vunpack.c.l.b16 %v149
    %v1274 = vunpack.c.h.b16 %v149
    %v1275 = vunpack.c.l.b16 %v150
    %v1276 = vunpack.c.h.b16 %v150
    %v1277 = vunpack.c.l.b16 %v151
    %v1278 = vunpack.c.h.b16 %v151
    %v1279 = vunpack.c.l.b16 %v152
    %v1280 = vunpack.c.h.b16 %v152
    %v1281 = vunpack.c.l.b16 %v153
    %v1282 = vunpack.c.h.b16 %v153
    %v1283 = vunpack.c.l.b16 %v154
    %v1284 = vunpack.c.h.b16 %v154
    %v1285 = vunpack.c.l.b16 %v155
    %v1286 = vunpack.c.h.b16 %v155
    %v1287 = vunpack.c.l.b16 %v156
    %v1288 = vunpack.c.h.b16 %v156
    %v1289 = vunpack.c.l.b16 %v157
    %v1290 = vunpack.c.h.b16 %v157
    %v1291 = vunpack.c.l.b16 %v158
    %v1292 = vunpack.c.h.b16 %v158
    %v1293 = vunpack.c.l.b16 %v159
    %v1294 = vunpack.c.h.b16 %v159
    %v1295 = vunpack.c.l.b16 %v160
    %v1296 = vunpack.c.h.b16 %v160
    %v1297 = vunpack.c.l.b16 %v161
    %v1298 = vunpack.c.h.b16 %v161
    %v1299 = vunpack.c.l.b16 %v162
    %v1300 = vunpack.c.h.b16 %v162
    %v1301 = vunpack.c.l.b16 %v163
    %v1302 = vunpack.c.h.b16 %v163
    %v1303 = vunpack.c.l.b16 %v164
    %v1304 = vunpack.c.h.b16 %v164
    %v1305 = vunpack.c.l.b16 %v165
    %v1306 = vunpack.c.h.b16 %v165
    %v1307 = vunpack.c.l.b16 %v166
    %v1308 = vunpack.c.h.b16 %v166
    %v1309 = vunpack.c.l.b16 %v167
    %v1310 = vunpack.c.h.b16 %v167
    %v1311 = vunpack.c.l.b16 %v168
    %v1312 = vunpack.c.h.b16 %v168
    %v1313 = vunpack.c.l.b16 %v169
    %v1314 = vunpack.c.h.b16 %v169
    %v1315 = vunpack.c.l.b16 %v170
    %v1316 = vunpack.c.h.b16 %v170
    %v1317 = vunpack.c.l.b16 %v171
    %v1318 = vunpack.c.h.b16 %v171
    %v1319 = vunpack.c.l.b16 %v172
    %v1320 = vunpack.c.h.b16 %v172
    %v1321 = vunpack.c.l.b16 %v173
    %v1322 = vunpack.c.h.b16 %v173
    %v1323 = vunpack.c.l.b16 %v174
    %v1324 = vunpack.c.h.b16 %v174
    %v1325 = vunpack.c.l.b16 %v175
    %v1326 = vunpack.c.h.b16 %v175
    %v1327 = vunpack.c.l.b16 %v176
    %v1328 = vunpack.c.h.b16 %v176
    %v1329 = vunpack.c.l.b16 %v177
    %v1330 = vunpack.c.h.b16 %v177
    %v1331 = vunpack.c.l.b16 %v178
    %v1332 = vunpack.c.h.b16 %v178
    %v1333 = vunpack.c.l.b16 %v179
    %v1334 = vunpack.c.h.b16 %v179
    %v1335 = vunpack.c.l.b16 %v180
    %v1336 = vunpack.c.h.b16 %v180
    %v1337 = vunpack.c.l.b16 %v181
    %v1338 = vunpack.c.h.b16 %v181
    %v1339 = vunpack.c.l.b16 %v182
    %v1340 = vunpack.c.h.b16 %v182
    %v1341 = vunpack.c.l.b16 %v183
    %v1342 = vunpack.c.h.b16 %v183
    %v1343 = vunpack.c.l.b16 %v184
    %v1344 = vunpack.c.h.b16 %v184
    %v1345 = vunpack.c.l.b16 %v185
    %v1346 = vunpack.c.h.b16 %v185
    %v1347 = vunpack.c.l.b16 %v186
    %v1348 = vunpack.c.h.b16 %v186
    %v1349 = vunpack.c.l.b16 %v187
    %v1350 = vunpack.c.h.b16 %v187
    %v1351 = vunpack.c.l.b16 %v188
    %v1352 = vunpack.c.h.b16 %v188
    %v1353 = vunpack.c.l.b16 %v189
    %v1354 = vunpack.c.h.b16 %v189
    %v1355 = vunpack.c.l.b16 %v190
    %v1356 = vunpack.c.h.b16 %v190
    %v1357 = vunpack.c.l.b16 %v191
    %v1358 = vunpack.c.h.b16 %v191
    %v1359 = vunpack.c.l.b16 %v192
    %v1360 = vunpack.c.h.b16 %v192
    %v1361 = vunpack.c.l.b16 %v193
    %v1362 = vunpack.c.h.b16 %v193
    %v1363 = vunpack.c.l.b16 %v194
    %v1364 = vunpack.c.h.b16 %v194
    %v1365 = vunpack.c.l.b16 %v195
    %v1366 = vunpack.c.h.b16 %v195
    %v1367 = vunpack.c.l.b16 %v196
    %v1368 = vunpack.c.h.b16 %v196
    %v1369 = vunpack.c.l.b16 %v197
    %v1370 = vunpack.c.h.b16 %v197
    %v1371 = vunpack.c.l.b16 %v198
    %v1372 = vunpack.c.h.b16 %v198
    %v1373 = vunpack.c.l.b16 %v199
    %v1374 = vunpack.c.h.b16 %v199
    %v1375 = vunpack.c.l.b16 %v200
    %v1376 = vunpack.c.h.b16 %v200
    %v1377 = vunpack.c.l.b16 %v201
    %v1378 = vunpack.c.h.b16 %v201
    %v1379 = vunpack.c.l.b16 %v202
    %v1380 = vunpack.c.h.b16 %v202
    %v1381 = vunpack.c.l.b16 %v203
    %v1382 = vunpack.c.h.b16 %v203
    %v1383 = vunpack.c.l.b16 %v204
    %v1384 = vunpack.c.h.b16 %v204
    %v1385 = vunpack.c.l.b16 %v205
    %v1386 = vunpack.c.h.b16 %v205
    %v1387 = vunpack.c.l.b16 %v206
    %v1388 = vunpack.c.h.b16 %v206
    %v1389 = vunpack.c.l.b16 %v207
    %v1390 = vunpack.c.h.b16 %v207
    %v1391 = vunpack.c.l.b16 %v208
    %v1392 = vunpack.c.h.b16 %v208
    %v1393 = vunpack.c.l.b16 %v209
    %v1394 = vunpack.c.h.b16 %v209
    %v1395 = vunpack.c.l.b16 %v210
    %v1396 = vunpack.c.h.b16 %v210
    %v1397 = vunpack.c.l.b16 %v211
    %v1398 = vunpack.c.h.b16 %v211
    %v1399 = vunpack.c.l.b16 %v212
    %v1400 = vunpack.c.h.b16 %v212
    %v1401 = vunpack.c.l.b16 %v213
    %v1402 = vunpack.c.h.b16 %v213
    %v1403 = vunpack.c.l.b16 %v214
    %v1404 = vunpack.c.h.b16 %v214
    %v1405 = vunpack.c.l.b16 %v215
    %v1406 = vunpack.c.h.b16 %v215
    %v1407 = vunpack.c.l.b16 %v216
    %v1408 = vunpack.c.h.b16 %v216
    %v1409 = vunpack.c.l.b16 %v217
    %v1410 = vunpack.c.h.b16 %v217
    %v1411 = vunpack.c.l.b16 %v218
    %v1412 = vunpack.c.h.b16 %v218
    %v1413 = vunpack.c.l.b16 %v219
    %v1414 = vunpack.c.h.b16 %v219
    %v1415 = vunpack.c.l.b16 %v220
    %v1416 = vunpack.c.h.b16 %v220
    %v1417 = vunpack.c.l.b16 %v221
    %v1418 = vunpack.c.h.b16 %v221
    %v1419 = vunpack.c.l.b16 %v222
    %v1420 = vunpack.c.h.b16 %v222
    %v1421 = vunpack.c.l.b16 %v223
    %v1422 = vunpack.c.h.b16 %v223
    %v1423 = vunpack.c.l.b16 %v224
    %v1424 = vunpack.c.h.b16 %v224
    %v1425 = vunpack.c.l.b16 %v225
    %v1426 = vunpack.c.h.b16 %v225
    %v1427 = vunpack.c.l.b16 %v226
    %v1428 = vunpack.c.h.b16 %v226
    %v1429 = vunpack.c.l.b16 %v227
    %v1430 = vunpack.c.h.b16 %v227
    %v1431 = vunpack.c.l.b16 %v228
    %v1432 = vunpack.c.h.b16 %v228
    %v1433 = vunpack.c.l.b16 %v229
    %v1434 = vunpack.c.h.b16 %v229
    %v1435 = vunpack.c.l.b16 %v230
    %v1436 = vunpack.c.h.b16 %v230
    %v1437 = vunpack.c.l.b16 %v231
    %v1438 = vunpack.c.h.b16 %v231
    %v1439 = vunpack.c.l.b16 %v232
    %v1440 = vunpack.c.h.b16 %v232
    %v1441 = vunpack.c.l.b16 %v233
    %v1442 = vunpack.c.h.b16 %v233
    %v1443 = vunpack.c.l.b16 %v234
    %v1444 = vunpack.c.h.b16 %v234
    %v1445 = vunpack.c.l.b16 %v235
    %v1446 = vunpack.c.h.b16 %v235
    %v1447 = vunpack.c.l.b16 %v236
    %v1448 = vunpack.c.h.b16 %v236
    %v1449 = vunpack.c.l.b16 %v237
    %v1450 = vunpack.c.h.b16 %v237
    %v1451 = vunpack.c.l.b16 %v238
    %v1452 = vunpack.c.h.b16 %v238
    %v1453 = vunpack.c.l.b16 %v239
    %v1454 = vunpack.c.h.b16 %v239
    %v1455 = vunpack.c.l.b16 %v240
    %v1456 = vunpack.c.h.b16 %v240
    %v1457 = vunpack.c.l.b16 %v241
    %v1458 = vunpack.c.h.b16 %v241
    %v1459 = vunpack.c.l.b16 %v242
    %v1460 = vunpack.c.h.b16 %v242
    %v1461 = vunpack.c.l.b16 %v243
    %v1462 = vunpack.c.h.b16 %v243
    %v1463 = vunpack.c.l.b16 %v244
    %v1464 = vunpack.c.h.b16 %v244
    %v1465 = vunpack.c.l.b16 %v245
    %v1466 = vunpack.c.h.b16 %v245
    %v1467 = vunpack.c.l.b16 %v246
    %v1468 = vunpack.c.h.b16 %v246
    %v1469 = vunpack.c.l.b16 %v247
    %v1470 = vunpack.c.h.b16 %v247
    %v1471 = vunpack.c.l.b16 %v248
    %v1472 = vunpack.c.h.b16 %v248
    %v1473 = vunpack.c.l.b16 %v249
    %v1474 = vunpack.c.h.b16 %v249
    %v1475 = vunpack.c.l.b16 %v250
    %v1476 = vunpack.c.h.b16 %v250
    %v1477 = vunpack.c.l.b16 %v251
    %v1478 = vunpack.c.h.b16 %v251
    %v1479 = vunpack.c.l.b16 %v252
    %v1480 = vunpack.c.h.b16 %v252
    %v1481 = vunpack.c.l.b16 %v253
    %v1482 = vunpack.c.h.b16 %v253
    %v1483 = vunpack.c.l.b16 %v254
    %v1484 = vunpack.c.h.b16 %v254
    %v1485 = vunpack.c.l.b16 %v255
    %v1486 = vunpack.c.h.b16 %v255
    %v1487 = vunpack.c.l.b16 %v256
    %v1488 = vunpack.c.h.b16 %v256
    %v1489 = vunpack.c.l.b16 %v257
    %v1490 = vunpack.c.h.b16 %v257
    %v1491 = vunpack.c.l.b16 %v258
    %v1492 = vunpack.c.h.b16 %v258
    %v1493 = vunpack.c.l.b16 %v259
    %v1494 = vunpack.c.h.b16 %v259
    %v1495 = vunpack.c.l.b16 %v260
    %v1496 = vunpack.c.h.b16 %v260
    %v1497 = vunpack.c.l.b16 %v261
    %v1498 = vunpack.c.h.b16 %v261
    %v1499 = vunpack.c.l.b16 %v262
    %v1500 = vunpack.c.h.b16 %v262
    %v1501 = vunpack.c.l.b16 %v263
    %v1502 = vunpack.c.h.b16 %v263
    %v1503 = vunpack.c.l.b16 %v264
    %v1504 = vunpack.c.h.b16 %v264
    %v1505 = vunpack.c.l.b16 %v265
    %v1506 = vunpack.c.h.b16 %v265
    %v1507 = vunpack.c.l.b16 %v266
    %v1508 = vunpack.c.h.b16 %v266
    %v1509 = vunpack.c.l.b16 %v267
    %v1510 = vunpack.c.h.b16 %v267
    %v1511 = vunpack.c.l.b16 %v268
    %v1512 = vunpack.c.h.b16 %v268
    %v1513 = vunpack.c.l.b16 %v269
    %v1514 = vunpack.c.h.b16 %v269
    %v1515 = vunpack.c.l.b16 %v270
    %v1516 = vunpack.c.h.b16 %v270
    %v1517 = vunpack.c.l.b16 %v271
    %v1518 = vunpack.c.h.b16 %v271
    %v1519 = vunpack.c.l.b16 %v272
    %v1520 = vunpack.c.h.b16 %v272
    %v1521 = vunpack.c.l.b16 %v273
    %v1522 = vunpack.c.h.b16 %v273
    %v1523 = vunpack.c.l.b16 %v274
    %v1524 = vunpack.c.h.b16 %v274
    %v1525 = vunpack.c.l.b16 %v275
    %v1526 = vunpack.c.h.b16 %v275
    %v1527 = vunpack.c.l.b16 %v276
    %v1528 = vunpack.c.h.b16 %v276
    %v1529 = vunpack.c.l.b16 %v277
    %v1530 = vunpack.c.h.b16 %v277
    %v1531 = vunpack.c.l.b16 %v278
    %v1532 = vunpack.c.h.b16 %v278
    %v1533 = vunpack.c.l.b16 %v279
    %v1534 = vunpack.c.h.b16 %v279
    %v1535 = vunpack.c.l.b16 %v280
    %v1536 = vunpack.c.h.b16 %v280
    %v1537 = vunpack.c.l.b16 %v281
    %v1538 = vunpack.c.h.b16 %v281
    %v1539 = vunpack.c.l.b16 %v282
    %v1540 = vunpack.c.h.b16 %v282
    %v1541 = vunpack.c.l.b16 %v283
    %v1542 = vunpack.c.h.b16 %v283
    %v1543 = vunpack.c.l.b16 %v284
    %v1544 = vunpack.c.h.b16 %v284
    %v1545 = vunpack.c.l.b16 %v285
    %v1546 = vunpack.c.h.b16 %v285
    %v1547 = vunpack.c.l.b16 %v286
    %v1548 = vunpack.c.h.b16 %v286
    %v1549 = vunpack.c.l.b16 %v287
    %v1550 = vunpack.c.h.b16 %v287
    %v1551 = vunpack.c.l.b16 %v288
    %v1552 = vunpack.c.h.b16 %v288
    %v1553 = vunpack.c.l.b16 %v289
    %v1554 = vunpack.c.h.b16 %v289
    %v1555 = vunpack.c.l.b16 %v290
    %v1556 = vunpack.c.h.b16 %v290
    %v1557 = vunpack.c.l.b16 %v291
    %v1558 = vunpack.c.h.b16 %v291
    %v1559 = vunpack.c.l.b16 %v292
    %v1560 = vunpack.c.h.b16 %v292
    %v1561 = vunpack.c.l.b16 %v293
    %v1562 = vunpack.c.h.b16 %v293
    %v1563 = vunpack.c.l.b16 %v294
    %v1564 = vunpack.c.h.b16 %v294
    %v1565 = vunpack.c.l.b16 %v295
    %v1566 = vunpack.c.h.b16 %v295
    %v1567 = vunpack.c.l.b16 %v296
    %v1568 = vunpack.c.h.b16 %v296
    %v1569 = vunpack.c.l.b16 %v297
    %v1570 = vunpack.c.h.b16 %v297
    %v1571 = vunpack.c.l.b16 %v298
    %v1572 = vunpack.c.h.b16 %v298
    %v1573 = vunpack.c.l.b16 %v299
    %v1574 = vunpack.c.h.b16 %v299
    %v1575 = vunpack.c.l.b16 %v300
    %v1576 = vunpack.c.h.b16 %v300
    %v1577 = vunpack.c.l.b16 %v301
    %v1578 = vunpack.c.h.b16 %v301
    %v1579 = vunpack.c.l.b16 %v302
    %v1580 = vunpack.c.h.b16 %v302
    %v1581 = vunpack.c.l.b16 %v303
    %v1582 = vunpack.c.h.b16 %v303
    %v1583 = vunpack.c.l.b16 %v304
    %v1584 = vunpack.c.h.b16 %v304
    %v1585 = vunpack.c.l.b16 %v305
    %v1586 = vunpack.c.h.b16 %v305
    %v1587 = vunpack.c.l.b16 %v306
    %v1588 = vunpack.c.h.b16 %v306
    %v1589 = vunpack.c.l.b16 %v307
    %v1590 = vunpack.c.h.b16 %v307
    %v1591 = vunpack.c.l.b16 %v308
    %v1592 = vunpack.c.h.b16 %v308
    %v1593 = vunpack.c.l.b16 %v309
    %v1594 = vunpack.c.h.b16 %v309
    %v1595 = vunpack.c.l.b16 %v310
    %v1596 = vunpack.c.h.b16 %v310
    %v1597 = vunpack.c.l.b16 %v311
    %v1598 = vunpack.c.h.b16 %v311
    %v1599 = vunpack.c.l.b16 %v312
    %v1600 = vunpack.c.h.b16 %v312
    %v1601 = vunpack.c.l.b16 %v313
    %v1602 = vunpack.c.h.b16 %v313
    %v1603 = vunpack.c.l.b16 %v314
    %v1604 = vunpack.c.h.b16 %v314
    %v1605 = vunpack.c.l.b16 %v315
    %v1606 = vunpack.c.h.b16 %v315
    %v1607 = vunpack.c.l.b16 %v316
    %v1608 = vunpack.c.h.b16 %v316
    %v1609 = vunpack.c.l.b16 %v317
    %v1610 = vunpack.c.h.b16 %v317
    %v1611 = vunpack.c.l.b16 %v318
    %v1612 = vunpack.c.h.b16 %v318
    %v1613 = vunpack.c.l.b16 %v319
    %v1614 = vunpack.c.h.b16 %v319
    %v1615 = vunpack.c.l.b16 %v320
    %v1616 = vunpack.c.h.b16 %v320
    %v1617 = vunpack.c.l.b16 %v321
    %v1618 = vunpack.c.h.b16 %v321
    %v1619 = vunpack.c.l.b16 %v322
    %v1620 = vunpack.c.h.b16 %v322
    %v1621 = vunpack.c.l.b16 %v323
    %v1622 = vunpack.c.h.b16 %v323
    %v1623 = vunpack.c.l.b16 %v324
    %v1624 = vunpack.c.h.b16 %v324
    %v1625 = vunpack.c.l.b16 %v325
    %v1626 = vunpack.c.h.b16 %v325
    %v1627 = vunpack.c.l.b16 %v326
    %v1628 = vunpack.c.h.b16 %v326
    %v1629 = vunpack.c.l.b16 %v327
    %v1630 = vunpack.c.h.b16 %v327
    %v1631 = vunpack.c.l.b16 %v328
    %v1632 = vunpack.c.h.b16 %v328
    %v1633 = vunpack.c.l.b16 %v329
    %v1634 = vunpack.c.h.b16 %v329
    %v1635 = vunpack.c.l.b16 %v330
    %v1636 = vunpack.c.h.b16 %v330
    %v1637 = vunpack.c.l.b16 %v331
    %v1638 = vunpack.c.h.b16 %v331
    %v1639 = vunpack.c.l.b16 %v332
    %v1640 = vunpack.c.h.b16 %v332
    %v1641 = vunpack.c.l.b16 %v333
    %v1642 = vunpack.c.h.b16 %v333
    %v1643 = vunpack.c.l.b16 %v334
    %v1644 = vunpack.c.h.b16 %v334
    %v1645 = vunpack.c.l.b16 %v335
    %v1646 = vunpack.c.h.b16 %v335
    %v1647 = vunpack.c.l.b16 %v336
    %v1648 = vunpack.c.h.b16 %v336
    %v1649 = vunpack.c.l.b16 %v337
    %v1650 = vunpack.c.h.b16 %v337
    %v1651 = vunpack.c.l.b16 %v338
    %v1652 = vunpack.c.h.b16 %v338
    %v1653 = vunpack.c.l.b16 %v339
    %v1654 = vunpack.c.h.b16 %v339
    %v1655 = vunpack.c.l.b16 %v340
    %v1656 = vunpack.c.h.b16 %v340
    %v1657 = vunpack.c.l.b16 %v341
    %v1658 = vunpack.c.h.b16 %v341
    %v1659 = vunpack.c.l.b16 %v342
    %v1660 = vunpack.c.h.b16 %v342
    %v1661 = vunpack.c.l.b16 %v343
    %v1662 = vunpack.c.h.b16 %v343
    %v1663 = vunpack.c.l.b16 %v344
    %v1664 = vunpack.c.h.b16 %v344
    %v1665 = vunpack.c.l.b16 %v345
    %v1666 = vunpack.c.h.b16 %v345
    %v1667 = vunpack.c.l.b16 %v346
    %v1668 = vunpack.c.h.b16 %v346
    %v1669 = vunpack.c.l.b16 %v347
    %v1670 = vunpack.c.h.b16 %v347
    %v1671 = vunpack.c.l.b16 %v348
    %v1672 = vunpack.c.h.b16 %v348
    %v1673 = vunpack.c.l.b16 %v349
    %v1674 = vunpack.c.h.b16 %v349
    %v1675 = vunpack.c.l.b16 %v350
    %v1676 = vunpack.c.h.b16 %v350
    %v1677 = vunpack.c.l.b16 %v351
    %v1678 = vunpack.c.h.b16 %v351
    %v1679 = vunpack.c.l.b16 %v352
    %v1680 = vunpack.c.h.b16 %v352
    %v1681 = vunpack.c.l.b16 %v353
    %v1682 = vunpack.c.h.b16 %v353
    %v1683 = vunpack.c.l.b16 %v354
    %v1684 = vunpack.c.h.b16 %v354
    %v1685 = vunpack.c.l.b16 %v355
    %v1686 = vunpack.c.h.b16 %v355
    %v1687 = vunpack.c.l.b16 %v356
    %v1688 = vunpack.c.h.b16 %v356
    %v1689 = vunpack.c.l.b16 %v357
    %v1690 = vunpack.c.h.b16 %v357
    %v1691 = vunpack.c.l.b16 %v358
    %v1692 = vunpack.c.h.b16 %v358
    %v1693 = vunpack.c.l.b16 %v359
    %v1694 = vunpack.c.h.b16 %v359
    %v1695 = vunpack.c.l.b16 %v360
    %v1696 = vunpack.c.h.b16 %v360
    %v1697 = vunpack.c.l.b16 %v361
    %v1698 = vunpack.c.h.b16 %v361
    %v1699 = vunpack.c.l.b16 %v362
    %v1700 = vunpack.c.h.b16 %v362
    %v1701 = vunpack.c.l.b16 %v363
    %v1702 = vunpack.c.h.b16 %v363
    %v1703 = vunpack.c.l.b16 %v364
    %v1704 = vunpack.c.h.b16 %v364
    %v1705 = vunpack.c.l.b16 %v365
    %v1706 = vunpack.c.h.b16 %v365
    %v1707 = vunpack.c.l.b16 %v366
    %v1708 = vunpack.c.h.b16 %v366
    %v1709 = vunpack.c.l.b16 %v367
    %v1710 = vunpack.c.h.b16 %v367
    %v1711 = vunpack.c.l.b16 %v368
    %v1712 = vunpack.c.h.b16 %v368
    %v1713 = vunpack.c.l.b16 %v369
    %v1714 = vunpack.c.h.b16 %v369
    %v1715 = vunpack.c.l.b16 %v370
    %v1716 = vunpack.c.h.b16 %v370
    %v1717 = vunpack.c.l.b16 %v371
    %v1718 = vunpack.c.h.b16 %v371
    %v1719 = vunpack.c.l.b16 %v372
    %v1720 = vunpack.c.h.b16 %v372
    %v1721 = vunpack.c.l.b16 %v373
    %v1722 = vunpack.c.h.b16 %v373
    %v1723 = vunpack.c.l.b16 %v374
    %v1724 = vunpack.c.h.b16 %v374
    %v1725 = vunpack.c.l.b16 %v375
    %v1726 = vunpack.c.h.b16 %v375
    %v1727 = vunpack.c.l.b16 %v376
    %v1728 = vunpack.c.h.b16 %v376
    %v1729 = vunpack.c.l.b16 %v377
    %v1730 = vunpack.c.h.b16 %v377
    %v1731 = vunpack.c.l.b16 %v378
    %v1732 = vunpack.c.h.b16 %v378
    %v1733 = vunpack.c.l.b16 %v379
    %v1734 = vunpack.c.h.b16 %v379
    %v1735 = vunpack.c.l.b16 %v380
    %v1736 = vunpack.c.h.b16 %v380
    %v1737 = vunpack.c.l.b16 %v381
    %v1738 = vunpack.c.h.b16 %v381
    %v1739 = vunpack.c.l.b16 %v382
    %v1740 = vunpack.c.h.b16 %v382
    %v1741 = vunpack.c.l.b16 %v383
    %v1742 = vunpack.c.h.b16 %v383
    %v1743 = vunpack.c.l.b16 %v384
    %v1744 = vunpack.c.h.b16 %v384
    %v1745 = vunpack.c.l.b16 %v385
    %v1746 = vunpack.c.h.b16 %v385
    %v1747 = vunpack.c.l.b16 %v386
    %v1748 = vunpack.c.h.b16 %v386
    %v1749 = vunpack.c.l.b16 %v387
    %v1750 = vunpack.c.h.b16 %v387
    %v1751 = vunpack.c.l.b16 %v388
    %v1752 = vunpack.c.h.b16 %v388
    %v1753 = vunpack.c.l.b16 %v389
    %v1754 = vunpack.c.h.b16 %v389
    %v1755 = vunpack.c.l.b16 %v390
    %v1756 = vunpack.c.h.b16 %v390
    %v1757 = vunpack.c.l.b16 %v391
    %v1758 = vunpack.c.h.b16 %v391
    %v1759 = vunpack.c.l.b16 %v392
    %v1760 = vunpack.c.h.b16 %v392
    %v1761 = vunpack.c.l.b16 %v393
    %v1762 = vunpack.c.h.b16 %v393
    %v1763 = vunpack.c.l.b16 %v394
    %v1764 = vunpack.c.h.b16 %v394
    %v1765 = vunpack.c.l.b16 %v395
    %v1766 = vunpack.c.h.b16 %v395
    %v1767 = vunpack.c.l.b16 %v396
    %v1768 = vunpack.c.h.b16 %v396
    %v1769 = vunpack.c.l.b16 %v397
    %v1770 = vunpack.c.h.b16 %v397
    %v1771 = vunpack.c.l.b16 %v398
    %v1772 = vunpack.c.h.b16 %v398
    %v1773 = vunpack.c.l.b16 %v399
    %v1774 = vunpack.c.h.b16 %v399
    %v1775 = vunpack.c.l.b16 %v400
    %v1776 = vunpack.c.h.b16 %v400
    %v1777 = vunpack.c.l.b16 %v401
    %v1778 = vunpack.c.h.b16 %v401
    %v1779 = vunpack.c.l.b16 %v402
    %v1780 = vunpack.c.h.b16 %v402
    %v1781 = vunpack.c.l.b16 %v403
    %v1782 = vunpack.c.h.b16 %v403
    %v1783 = vunpack.c.l.b16 %v404
    %v1784 = vunpack.c.h.b16 %v404
    %v1785 = vunpack.c.l.b16 %v405
    %v1786 = vunpack.c.h.b16 %v405
    %v1787 = vunpack.c.l.b16 %v406
    %v1788 = vunpack.c.h.b16 %v406
    %v1789 = vunpack.c.l.b16 %v407
    %v1790 = vunpack.c.h.b16 %v407
    %v1791 = vunpack.c.l.b16 %v408
    %v1792 = vunpack.c.h.b16 %v408
    %v1793 = vunpack.c.l.b16 %v409
    %v1794 = vunpack.c.h.b16 %v409
    %v1795 = vunpack.c.l.b16 %v410
    %v1796 = vunpack.c.h.b16 %v410
    %v1797 = vunpack.c.l.b16 %v411
    %v1798 = vunpack.c.h.b16 %v411
    %v1799 = vunpack.c.l.b16 %v412
    %v1800 = vunpack.c.h.b16 %v412
    %v1801 = vunpack.c.l.b16 %v413
    %v1802 = vunpack.c.h.b16 %v413
    %v1803 = vunpack.c.l.b16 %v414
    %v1804 = vunpack.c.h.b16 %v414
    %v1805 = vunpack.c.l.b16 %v415
    %v1806 = vunpack.c.h.b16 %v415
    %v1807 = vunpack.c.l.b16 %v416
    %v1808 = vunpack.c.h.b16 %v416
    %v1809 = vunpack.c.l.b16 %v417
    %v1810 = vunpack.c.h.b16 %v417
    %v1811 = vunpack.c.l.b16 %v418
    %v1812 = vunpack.c.h.b16 %v418
    %v1813 = vunpack.c.l.b16 %v419
    %v1814 = vunpack.c.h.b16 %v419
    %v1815 = vunpack.c.l.b16 %v420
    %v1816 = vunpack.c.h.b16 %v420
    %v1817 = vunpack.c.l.b16 %v421
    %v1818 = vunpack.c.h.b16 %v421
    %v1819 = vunpack.c.l.b16 %v422
    %v1820 = vunpack.c.h.b16 %v422
    %v1821 = vunpack.c.l.b16 %v423
    %v1822 = vunpack.c.h.b16 %v423
    %v1823 = vunpack.c.l.b16 %v424
    %v1824 = vunpack.c.h.b16 %v424
    %v1825 = vunpack.c.l.b16 %v425
    %v1826 = vunpack.c.h.b16 %v425
    %v1827 = vunpack.c.l.b16 %v426
    %v1828 = vunpack.c.h.b16 %v426
    %v1829 = vunpack.c.l.b16 %v427
    %v1830 = vunpack.c.h.b16 %v427
    %v1831 = vunpack.c.l.b16 %v428
    %v1832 = vunpack.c.h.b16 %v428
    %v1833 = vunpack.c.l.b16 %v429
    %v1834 = vunpack.c.h.b16 %v429
    %v1835 = vunpack.c.l.b16 %v430
    %v1836 = vunpack.c.h.b16 %v430
    %v1837 = vunpack.c.l.b16 %v431
    %v1838 = vunpack.c.h.b16 %v431
    %v1839 = vunpack.c.l.b16 %v432
    %v1840 = vunpack.c.h.b16 %v432
    %v1841 = vunpack.c.l.b16 %v433
    %v1842 = vunpack.c.h.b16 %v433
    %v1843 = vunpack.c.l.b16 %v434
    %v1844 = vunpack.c.h.b16 %v434
    %v1845 = vunpack.c.l.b16 %v435
    %v1846 = vunpack.c.h.b16 %v435
    %v1847 = vunpack.c.l.b16 %v436
    %v1848 = vunpack.c.h.b16 %v436
    %v1849 = vunpack.c.l.b16 %v437
    %v1850 = vunpack.c.h.b16 %v437
    %v1851 = vunpack.c.l.b16 %v438
    %v1852 = vunpack.c.h.b16 %v438
    %v1853 = vunpack.c.l.b16 %v439
    %v1854 = vunpack.c.h.b16 %v439
    %v1855 = vunpack.c.l.b16 %v440
    %v1856 = vunpack.c.h.b16 %v440
    %v1857 = vunpack.c.l.b16 %v441
    %v1858 = vunpack.c.h.b16 %v441
    %v1859 = vunpack.c.l.b16 %v442
    %v1860 = vunpack.c.h.b16 %v442
    %v1861 = vunpack.c.l.b16 %v443
    %v1862 = vunpack.c.h.b16 %v443
    %v1863 = vunpack.c.l.b16 %v444
    %v1864 = vunpack.c.h.b16 %v444
    %v1865 = vunpack.c.l.b16 %v445
    %v1866 = vunpack.c.h.b16 %v445
    %v1867 = vunpack.c.l.b16 %v446
    %v1868 = vunpack.c.h.b16 %v446
    %v1869 = vunpack.c.l.b16 %v447
    %v1870 = vunpack.c.h.b16 %v447
    %v1871 = vunpack.c.l.b16 %v448
    %v1872 = vunpack.c.h.b16 %v448
    %v1873 = vunpack.c.l.b16 %v449
    %v1874 = vunpack.c.h.b16 %v449
    %v1875 = vunpack.c.l.b16 %v450
    %v1876 = vunpack.c.h.b16 %v450
    %v1877 = vunpack.c.l.b16 %v451
    %v1878 = vunpack.c.h.b16 %v451
    %v1879 = vunpack.c.l.b16 %v452
    %v1880 = vunpack.c.h.b16 %v452
    %v1881 = vunpack.c.l.b16 %v453
    %v1882 = vunpack.c.h.b16 %v453
    %v1883 = vunpack.c.l.b16 %v454
    %v1884 = vunpack.c.h.b16 %v454
    %v1885 = vunpack.c.l.b16 %v455
    %v1886 = vunpack.c.h.b16 %v455
    %v1887 = vunpack.c.l.b16 %v456
    %v1888 = vunpack.c.h.b16 %v456
    %v1889 = vunpack.c.l.b16 %v457
    %v1890 = vunpack.c.h.b16 %v457
    %v1891 = vunpack.c.l.b16 %v458
    %v1892 = vunpack.c.h.b16 %v458
    %v1893 = vunpack.c.l.b16 %v459
    %v1894 = vunpack.c.h.b16 %v459
    %v1895 = vunpack.c.l.b16 %v460
    %v1896 = vunpack.c.h.b16 %v460
    %v1897 = vunpack.c.l.b16 %v461
    %v1898 = vunpack.c.h.b16 %v461
    %v1899 = vunpack.c.l.b16 %v462
    %v1900 = vunpack.c.h.b16 %v462
    %v1901 = vunpack.c.l.b16 %v463
    %v1902 = vunpack.c.h.b16 %v463
    %v1903 = vunpack.c.l.b16 %v464
    %v1904 = vunpack.c.h.b16 %v464
    %v1905 = vunpack.c.l.b16 %v465
    %v1906 = vunpack.c.h.b16 %v465
    %v1907 = vunpack.c.l.b16 %v466
    %v1908 = vunpack.c.h.b16 %v466
    %v1909 = vunpack.c.l.b16 %v467
    %v1910 = vunpack.c.h.b16 %v467
    %v1911 = vunpack.c.l.b16 %v468
    %v1912 = vunpack.c.h.b16 %v468
    %v1913 = vunpack.c.l.b16 %v469
    %v1914 = vunpack.c.h.b16 %v469
    %v1915 = vunpack.c.l.b16 %v470
    %v1916 = vunpack.c.h.b16 %v470
    %v1917 = vunpack.c.l.b16 %v471
    %v1918 = vunpack.c.h.b16 %v471
    %v1919 = vunpack.c.l.b16 %v472
    %v1920 = vunpack.c.h.b16 %v472
    %v1921 = vunpack.c.l.b16 %v473
    %v1922 = vunpack.c.h.b16 %v473
    %v1923 = vunpack.c.l.b16 %v474
    %v1924 = vunpack.c.h.b16 %v474
    %v1925 = vunpack.c.l.b16 %v475
    %v1926 = vunpack.c.h.b16 %v475
    %v1927 = vunpack.c.l.b16 %v476
    %v1928 = vunpack.c.h.b16 %v476
    %v1929 = vunpack.c.l.b16 %v477
    %v1930 = vunpack.c.h.b16 %v477
    %v1931 = vunpack.c.l.b16 %v478
    %v1932 = vunpack.c.h.b16 %v478
    %v1933 = vunpack.c.l.b16 %v479
    %v1934 = vunpack.c.h.b16 %v479
    %v1935 = vunpack.c.l.b16 %v480
    %v1936 = vunpack.c.h.b16 %v480
    %v1937 = vunpack.c.l.b16 %v481
    %v1938 = vunpack.c.h.b16 %v481
    %v1939 = vunpack.c.l.b16 %v482
    %v1940 = vunpack.c.h.b16 %v482
    %v1941 = vunpack.c.l.b16 %v483
    %v1942 = vunpack.c.h.b16 %v483
    %v1943 = vunpack.c.l.b16 %v484
    %v1944 = vunpack.c.h.b16 %v484
    %v1945 = vunpack.c.l.b16 %v485
    %v1946 = vunpack.c.h.b16 %v485
    %v1947 = vunpack.c.l.b16 %v486
    %v1948 = vunpack.c.h.b16 %v486
    %v1949 = vunpack.c.l.b16 %v487
    %v1950 = vunpack.c.h.b16 %v487
    %v1951 = vunpack.c.l.b16 %v488
    %v1952 = vunpack.c.h.b16 %v488
    %v1953 = vunpack.c.l.b16 %v489
    %v1954 = vunpack.c.h.b16 %v489
    %v1955 = vunpack.c.l.b16 %v490
    %v1956 = vunpack.c.h.b16 %v490
    %v1957 = vunpack.c.l.b16 %v491
    %v1958 = vunpack.c.h.b16 %v491
    %v1959 = vunpack.c.l.b16 %v492
    %v1960 = vunpack.c.h.b16 %v492
    %v1961 = vunpack.c.l.b16 %v493
    %v1962 = vunpack.c.h.b16 %v493
    %v1963 = vunpack.c.l.b16 %v494
    %v1964 = vunpack.c.h.b16 %v494
    %v1965 = vunpack.c.l.b16 %v495
    %v1966 = vunpack.c.h.b16 %v495
    %v1967 = vunpack.c.l.b16 %v496
    %v1968 = vunpack.c.h.b16 %v496
    %v1969 = vunpack.c.l.b16 %v497
    %v1970 = vunpack.c.h.b16 %v497
    %v1971 = vunpack.c.l.b16 %v498
    %v1972 = vunpack.c.h.b16 %v498
    %v1973 = vunpack.c.l.b16 %v499
    %v1974 = vunpack.c.h.b16 %v499
    %v1975 = vunpack.c.l.b16 %v500
    %v1976 = vunpack.c.h.b16 %v500
    %v1977 = vunpack.c.l.b16 %v501
    %v1978 = vunpack.c.h.b16 %v501
    %v1979 = vunpack.c.l.b16 %v502
    %v1980 = vunpack.c.h.b16 %v502
    %v1981 = vunpack.c.l.b16 %v503
    %v1982 = vunpack.c.h.b16 %v503
    %v1983 = vunpack.c.l.b16 %v504
    %v1984 = vunpack.c.h.b16 %v504
    %v1985 = vunpack.c.l.b16 %v505
    %v1986 = vunpack.c.h.b16 %v505
    %v1987 = vunpack.c.l.b16 %v506
    %v1988 = vunpack.c.h.b16 %v506
    %v1989 = vunpack.c.l.b16 %v507
    %v1990 = vunpack.c.h.b16 %v507
    %v1991 = vunpack.c.l.b16 %v508
    %v1992 = vunpack.c.h.b16 %v508
    %v1993 = vunpack.c.l.b16 %v509
    %v1994 = vunpack.c.h.b16 %v509
    %v1995 = vunpack.c.l.b16 %v510
    %v1996 = vunpack.c.h.b16 %v510
    %v1997 = vunpack.c.l.b16 %v511
    %v1998 = vunpack.c.h.b16 %v511
    %v1999 = vunpack.c.l.b16 %v512
    %v2000 = vunpack.c.h.b16 %v512
    %v2001 = vunpack.c.l.b16 %v513
    %v2002 = vunpack.c.h.b16 %v513
    %v2003 = vunpack.c.l.b16 %v514
    %v2004 = vunpack.c.h.b16 %v514
    %v2005 = vunpack.c.l.b16 %v515
    %v2006 = vunpack.c.h.b16 %v515
    %v2007 = vunpack.c.l.b16 %v516
    %v2008 = vunpack.c.h.b16 %v516
    %v2009 = vunpack.c.l.b16 %v517
    %v2010 = vunpack.c.h.b16 %v517
    %v2011 = vunpack.c.l.b16 %v518
    %v2012 = vunpack.c.h.b16 %v518
    %v2013 = vunpack.c.l.b16 %v519
    %v2014 = vunpack.c.h.b16 %v519
    %v2015 = vunpack.c.l.b16 %v520
    %v2016 = vunpack.c.h.b16 %v520
    %v2017 = vunpack.c.l.b16 %v521
    %v2018 = vunpack.c.h.b16 %v521
    %v2019 = vunpack.c.l.b16 %v522
    %v2020 = vunpack.c.h.b16 %v522
    %v2021 = vunpack.c.l.b16 %v523
    %v2022 = vunpack.c.h.b16 %v523
    %v2023 = vunpack.c.l.b16 %v524
    %v2024 = vunpack.c.h.b16 %v524
    %v2025 = vunpack.c.l.b16 %v525
    %v2026 = vunpack.c.h.b16 %v525
    %v2027 = vunpack.c.l.b16 %v526
    %v2028 = vunpack.c.h.b16 %v526
    %v2029 = vunpack.c.l.b16 %v527
    %v2030 = vunpack.c.h.b16 %v527
    %v2031 = vunpack.c.l.b16 %v528
    %v2032 = vunpack.c.h.b16 %v528
    %v2033 = vunpack.c.l.b16 %v529
    %v2034 = vunpack.c.h.b16 %v529
    %v2035 = vunpack.c.l.b16 %v530
    %v2036 = vunpack.c.h.b16 %v530
    %v2037 = vunpack.c.l.b16 %v531
    %v2038 = vunpack.c.h.b16 %v531
    %v2039 = vunpack.c.l.b16 %v532
    %v2040 = vunpack.c.h.b16 %v532
    %v2041 = vunpack.c.l.b16 %v533
    %v2042 = vunpack.c.h.b16 %v533
    %v2043 = vunpack.c.l.b16 %v534
    %v2044 = vunpack.c.h.b16 %v534
    %v2045 = vunpack.c.l.b16 %v535
    %v2046 = vunpack.c.h.b16 %v535
    %v2047 = vunpack.c.l.b16 %v536
    %v2048 = vunpack.c.h.b16 %v536
    %v2049 = vunpack.c.l.b16 %v537
    %v2050 = vunpack.c.h.b16 %v537
    %v2051 = vunpack.c.l.b16 %v538
    %v2052 = vunpack.c.h.b16 %v538
    %v2053 = vunpack.c.l.b16 %v539
    %v2054 = vunpack.c.h.b16 %v539
    %v2055 = vunpack.c.l.b16 %v540
    %v2056 = vunpack.c.h.b16 %v540
    %v2057 = vunpack.c.l.b16 %v541
    %v2058 = vunpack.c.h.b16 %v541
    %v2059 = vunpack.c.l.b16 %v542
    %v2060 = vunpack.c.h.b16 %v542
    %v2061 = vunpack.c.l.b16 %v543
    %v2062 = vunpack.c.h.b16 %v543
    %v2063 = vunpack.c.l.b16 %v544
    %v2064 = vunpack.c.h.b16 %v544
    %v2065 = vunpack.c.l.b16 %v545
    %v2066 = vunpack.c.h.b16 %v545
    %v2067 = vunpack.c.l.b16 %v546
    %v2068 = vunpack.c.h.b16 %v546
    %v2069 = vunpack.c.l.b16 %v547
    %v2070 = vunpack.c.h.b16 %v547
    %v2071 = vunpack.c.l.b16 %v548
    %v2072 = vunpack.c.h.b16 %v548
    %v2073 = vunpack.c.l.b16 %v549
    %v2074 = vunpack.c.h.b16 %v549
    %v2075 = vunpack.c.l.b16 %v550
    %v2076 = vunpack.c.h.b16 %v550
    %v2077 = vunpack.c.l.b16 %v551
    %v2078 = vunpack.c.h.b16 %v551
    %v2079 = vunpack.c.l.b16 %v552
    %v2080 = vunpack.c.h.b16 %v552
    %v2081 = vunpack.c.l.b16 %v553
    %v2082 = vunpack.c.h.b16 %v553
    %v2083 = vunpack.c.l.b16 %v554
    %v2084 = vunpack.c.h.b16 %v554
    %v2085 = vunpack.c.l.b16 %v555
    %v2086 = vunpack.c.h.b16 %v555
    %v2087 = vunpack.c.l.b16 %v556
    %v2088 = vunpack.c.h.b16 %v556
    %v2089 = vunpack.c.l.b16 %v557
    %v2090 = vunpack.c.h.b16 %v557
    %v2091 = vunpack.c.l.b16 %v558
    %v2092 = vunpack.c.h.b16 %v558
    %v2093 = vunpack.c.l.b16 %v559
    %v2094 = vunpack.c.h.b16 %v559
    %v2095 = vunpack.c.l.b16 %v560
    %v2096 = vunpack.c.h.b16 %v560
    %v2097 = vunpack.c.l.b16 %v561
    %v2098 = vunpack.c.h.b16 %v561
    %v2099 = vunpack.c.l.b16 %v562
    %v2100 = vunpack.c.h.b16 %v562
    %v2101 = vunpack.c.l.b16 %v563
    %v2102 = vunpack.c.h.b16 %v563
    %v2103 = vunpack.c.l.b16 %v564
    %v2104 = vunpack.c.h.b16 %v564
    %v2105 = vunpack.c.l.b16 %v565
    %v2106 = vunpack.c.h.b16 %v565
    %v2107 = vunpack.c.l.b16 %v566
    %v2108 = vunpack.c.h.b16 %v566
    %v2109 = vunpack.c.l.b16 %v567
    %v2110 = vunpack.c.h.b16 %v567
    %v2111 = vunpack.c.l.b16 %v568
    %v2112 = vunpack.c.h.b16 %v568
    %v2113 = vunpack.c.l.b16 %v569
    %v2114 = vunpack.c.h.b16 %v569
    %v2115 = vunpack.c.l.b16 %v570
    %v2116 = vunpack.c.h.b16 %v570
    %v2117 = vunpack.c.l.b16 %v571
    %v2118 = vunpack.c.h.b16 %v571
    %v2119 = vunpack.c.l.b16 %v572
    %v2120 = vunpack.c.h.b16 %v572
    %v2121 = vunpack.c.l.b16 %v573
    %v2122 = vunpack.c.h.b16 %v573
    %v2123 = vunpack.c.l.b16 %v574
    %v2124 = vunpack.c.h.b16 %v574
    %v2125 = vunpack.c.l.b16 %v575
    %v2126 = vunpack.c.h.b16 %v575
    %v2127 = vunpack.c.l.b16 %v576
    %v2128 = vunpack.c.h.b16 %v576
    %v2129 = vunpack.c.l.b16 %v577
    %v2130 = vunpack.c.h.b16 %v577
    %v2131 = vunpack.c.l.b16 %v578
    %v2132 = vunpack.c.h.b16 %v578
    %v2133 = vunpack.c.l.b16 %v579
    %v2134 = vunpack.c.h.b16 %v579
    %v2135 = vunpack.c.l.b16 %v580
    %v2136 = vunpack.c.h.b16 %v580
    %v2137 = vunpack.c.l.b16 %v581
    %v2138 = vunpack.c.h.b16 %v581
    %v2139 = vunpack.c.l.b16 %v582
    %v2140 = vunpack.c.h.b16 %v582
    %v2141 = vunpack.c.l.b16 %v583
    %v2142 = vunpack.c.h.b16 %v583
    %v2143 = vunpack.c.l.b16 %v584
    %v2144 = vunpack.c.h.b16 %v584
    %v2145 = vunpack.c.l.b16 %v585
    %v2146 = vunpack.c.h.b16 %v585
    %v2147 = vunpack.c.l.b16 %v586
    %v2148 = vunpack.c.h.b16 %v586
    %v2149 = vunpack.c.l.b16 %v587
    %v2150 = vunpack.c.h.b16 %v587
    %v2151 = vunpack.c.l.b16 %v588
    %v2152 = vunpack.c.h.b16 %v588
    %v2153 = vunpack.c.l.b16 %v589
    %v2154 = vunpack.c.h.b16 %v589
    %v2155 = vunpack.c.l.b16 %v590
    %v2156 = vunpack.c.h.b16 %v590
    %v2157 = vunpack.c.l.b16 %v591
    %v2158 = vunpack.c.h.b16 %v591
    %v2159 = vunpack.c.l.b16 %v592
    %v2160 = vunpack.c.h.b16 %v592
    %v2161 = vunpack.c.l.b16 %v593
    %v2162 = vunpack.c.h.b16 %v593
    %v2163 = vunpack.c.l.b16 %v594
    %v2164 = vunpack.c.h.b16 %v594
    %v2165 = vunpack.c.l.b16 %v595
    %v2166 = vunpack.c.h.b16 %v595
    %v2167 = vunpack.c.l.b16 %v596
    %v2168 = vunpack.c.h.b16 %v596
    %v2169 = vunpack.c.l.b16 %v597
    %v2170 = vunpack.c.h.b16 %v597
    %v2171 = vunpack.c.l.b16 %v598
    %v2172 = vunpack.c.h.b16 %v598
    %v2173 = vunpack.c.l.b16 %v599
    %v2174 = vunpack.c.h.b16 %v599
    %v2175 = vunpack.c.l.b16 %v600
    %v2176 = vunpack.c.h.b16 %v600
    %v2177 = vunpack.c.l.b16 %v601
    %v2178 = vunpack.c.h.b16 %v601
    %v2179 = vunpack.c.l.b16 %v602
    %v2180 = vunpack.c.h.b16 %v602
    %v2181 = vunpack.c.l.b16 %v603
    %v2182 = vunpack.c.h.b16 %v603
    %v2183 = vunpack.c.l.b16 %v604
    %v2184 = vunpack.c.h.b16 %v604
    %v2185 = vunpack.c.l.b16 %v605
    %v2186 = vunpack.c.h.b16 %v605
    %v2187 = vunpack.c.l.b16 %v606
    %v2188 = vunpack.c.h.b16 %v606
    %v2189 = vunpack.c.l.b16 %v607
    %v2190 = vunpack.c.h.b16 %v607
    %v2191 = vunpack.c.l.b16 %v608
    %v2192 = vunpack.c.h.b16 %v608
    %v2193 = vunpack.c.l.b16 %v609
    %v2194 = vunpack.c.h.b16 %v609
    %v2195 = vunpack.c.l.b16 %v610
    %v2196 = vunpack.c.h.b16 %v610
    %v2197 = vunpack.c.l.b16 %v611
    %v2198 = vunpack.c.h.b16 %v611
    %v2199 = vunpack.c.l.b16 %v612
    %v2200 = vunpack.c.h.b16 %v612
    %v2201 = vunpack.c.l.b16 %v613
    %v2202 = vunpack.c.h.b16 %v613
    %v2203 = vunpack.c.l.b16 %v614
    %v2204 = vunpack.c.h.b16 %v614
    %v2205 = vunpack.c.l.b16 %v615
    %v2206 = vunpack.c.h.b16 %v615
    %v2207 = vunpack.c.l.b16 %v616
    %v2208 = vunpack.c.h.b16 %v616
    %v2209 = vunpack.c.l.b16 %v617
    %v2210 = vunpack.c.h.b16 %v617
    %v2211 = vunpack.c.l.b16 %v618
    %v2212 = vunpack.c.h.b16 %v618
    %v2213 = vunpack.c.l.b16 %v619
    %v2214 = vunpack.c.h.b16 %v619
    %v2215 = vunpack.c.l.b16 %v620
    %v2216 = vunpack.c.h.b16 %v620
    %v2217 = vunpack.c.l.b16 %v621
    %v2218 = vunpack.c.h.b16 %v621
    %v2219 = vunpack.c.l.b16 %v622
    %v2220 = vunpack.c.h.b16 %v622
    %v2221 = vunpack.c.l.b16 %v623
    %v2222 = vunpack.c.h.b16 %v623
    %v2223 = vunpack.c.l.b16 %v624
    %v2224 = vunpack.c.h.b16 %v624
    %v2225 = vunpack.c.l.b16 %v625
    %v2226 = vunpack.c.h.b16 %v625
    %v2227 = vunpack.c.l.b16 %v626
    %v2228 = vunpack.c.h.b16 %v626
    %v2229 = vunpack.c.l.b16 %v627
    %v2230 = vunpack.c.h.b16 %v627
    %v2231 = vunpack.c.l.b16 %v628
    %v2232 = vunpack.c.h.b16 %v628
    %v2233 = vunpack.c.l.b16 %v629
    %v2234 = vunpack.c.h.b16 %v629
    %v2235 = vunpack.c.l.b16 %v630
    %v2236 = vunpack.c.h.b16 %v630
    %v2237 = vunpack.c.l.b16 %v631
    %v2238 = vunpack.c.h.b16 %v631
    %v2239 = vunpack.c.l.b16 %v632
    %v2240 = vunpack.c.h.b16 %v632
    %v2241 = vpack.c.b16 %v1249, %v1217
    %v2242 = vpack.c.b16 %v1250, %v1218
    %v2243 = vpack.c.b16 %v1251, %v1219
    %v2244 = vpack.c.b16 %v1252, %v1220
    %v2245 = vpack.c.b16 %v1253, %v1221
    %v2246 = vpack.c.b16 %v1254, %v1222
    %v2247 = vpack.c.b16 %v1255, %v1223
    %v2248 = vpack.c.b16 %v1256, %v1224
    %v2249 = vpack.c.b16 %v1257, %v1225
    %v2250 = vpack.c.b16 %v1258, %v1226
    %v2251 = vpack.c.b16 %v1259, %v1227
    %v2252 = vpack.c.b16 %v1260, %v1228
    %v2253 = vpack.c.b16 %v1261, %v1229
    %v2254 = vpack.c.b16 %v1262, %v1230
    %v2255 = vpack.c.b16 %v1263, %v1231
    %v2256 = vpack.c.b16 %v1264, %v1232
    %v2257 = vpack.c.b16 %v1265, %v1233
    %v2258 = vpack.c.b16 %v1266, %v1234
    %v2259 = vpack.c.b16 %v1267, %v1235
    %v2260 = vpack.c.b16 %v1268, %v1236
    %v2261 = vpack.c.b16 %v1269, %v1237
    %v2262 = vpack.c.b16 %v1270, %v1238
    %v2263 = vpack.c.b16 %v1271, %v1239
    %v2264 = vpack.c.b16 %v1272, %v1240
    %v2265 = vpack.c.b16 %v1273, %v1241
    %v2266 = vpack.c.b16 %v1274, %v1242
    %v2267 = vpack.c.b16 %v1275, %v1243
    %v2268 = vpack.c.b16 %v1276, %v1244
    %v2269 = vpack.c.b16 %v1277, %v1245
    %v2270 = vpack.c.b16 %v1278, %v1246
    %v2271 = vpack.c.b16 %v1279, %v1247
    %v2272 = vpack.c.b16 %v1280, %v1248
    %v2273 = vpack.c.b16 %v1313, %v1281
    %v2274 = vpack.c.b16 %v1314, %v1282
    %v2275 = vpack.c.b16 %v1315, %v1283
    %v2276 = vpack.c.b16 %v1316, %v1284
    %v2277 = vpack.c.b16 %v1317, %v1285
    %v2278 = vpack.c.b16 %v1318, %v1286
    %v2279 = vpack.c.b16 %v1319, %v1287
    %v2280 = vpack.c.b16 %v1320, %v1288
    %v2281 = vpack.c.b16 %v1321, %v1289
    %v2282 = vpack.c.b16 %v1322, %v1290
    %v2283 = vpack.c.b16 %v1323, %v1291
    %v2284 = vpack.c.b16 %v1324, %v1292
    %v2285 = vpack.c.b16 %v1325, %v1293
    %v2286 = vpack.c.b16 %v1326, %v1294
    %v2287 = vpack.c.b16 %v1327, %v1295
    %v2288 = vpack.c.b16 %v1328, %v1296
    %v2289 = vpack.c.b16 %v1329, %v1297
    %v2290 = vpack.c.b16 %v1330, %v1298
    %v2291 = vpack.c.b16 %v1331, %v1299
    %v2292 = vpack.c.b16 %v1332, %v1300
    %v2293 = vpack.c.b16 %v1333, %v1301
    %v2294 = vpack.c.b16 %v1334, %v1302
    %v2295 = vpack.c.b16 %v1335, %v1303
    %v2296 = vpack.c.b16 %v1336, %v1304
    %v2297 = vpack.c.b16 %v1337, %v1305
    %v2298 = vpack.c.b16 %v1338, %v1306
    %v2299 = vpack.c.b16 %v1339, %v1307
    %v2300 = vpack.c.b16 %v1340, %v1308
    %v2301 = vpack.c.b16 %v1341, %v1309
    %v2302 = vpack.c.b16 %v1342, %v1310
    %v2303 = vpack.c.b16 %v1343, %v1311
    %v2304 = vpack.c.b16 %v1344, %v1312
    %v2305 = vpack.c.b16 %v1377, %v1345
    %v2306 = vpack.c.b16 %v1378, %v1346
    %v2307 = vpack.c.b16 %v1379, %v1347
    %v2308 = vpack.c.b16 %v1380, %v1348
    %v2309 = vpack.c.b16 %v1381, %v1349
    %v2310 = vpack.c.b16 %v1382, %v1350
    %v2311 = vpack.c.b16 %v1383, %v1351
    %v2312 = vpack.c.b16 %v1384, %v1352
    %v2313 = vpack.c.b16 %v1385, %v1353
    %v2314 = vpack.c.b16 %v1386, %v1354
    %v2315 = vpack.c.b16 %v1387, %v1355
    %v2316 = vpack.c.b16 %v1388, %v1356
    %v2317 = vpack.c.b16 %v1389, %v1357
    %v2318 = vpack.c.b16 %v1390, %v1358
    %v2319 = vpack.c.b16 %v1391, %v1359
    %v2320 = vpack.c.b16 %v1392, %v1360
    %v2321 = vpack.c.b16 %v1393, %v1361
    %v2322 = vpack.c.b16 %v1394, %v1362
    %v2323 = vpack.c.b16 %v1395, %v1363
    %v2324 = vpack.c.b16 %v1396, %v1364
    %v2325 = vpack.c.b16 %v1397, %v1365
    %v2326 = vpack.c.b16 %v1398, %v1366
    %v2327 = vpack.c.b16 %v1399, %v1367
    %v2328 = vpack.c.b16 %v1400, %v1368
    %v2329 = vpack.c.b16 %v1401, %v1369
    %v2330 = vpack.c.b16 %v1402, %v1370
    %v2331 = vpack.c.b16 %v1403, %v1371
    %v2332 = vpack.c.b16 %v1404, %v1372
    %v2333 = vpack.c.b16 %v1405, %v1373
    %v2334 = vpack.c.b16 %v1406, %v1374
    %v2335 = vpack.c.b16 %v1407, %v1375
    %v2336 = vpack.c.b16 %v1408, %v1376
    %v2337 = vpack.c.b16 %v1441, %v1409
    %v2338 = vpack.c.b16 %v1442, %v1410
    %v2339 = vpack.c.b16 %v1443, %v1411
    %v2340 = vpack.c.b16 %v1444, %v1412
    %v2341 = vpack.c.b16 %v1445, %v1413
    %v2342 = vpack.c.b16 %v1446, %v1414
    %v2343 = vpack.c.b16 %v1447, %v1415
    %v2344 = vpack.c.b16 %v1448, %v1416
    %v2345 = vpack.c.b16 %v1449, %v1417
    %v2346 = vpack.c.b16 %v1450, %v1418
    %v2347 = vpack.c.b16 %v1451, %v1419
    %v2348 = vpack.c.b16 %v1452, %v1420
    %v2349 = vpack.c.b16 %v1453, %v1421
    %v2350 = vpack.c.b16 %v1454, %v1422
    %v2351 = vpack.c.b16 %v1455, %v1423
    %v2352 = vpack.c.b16 %v1456, %v1424
    %v2353 = vpack.c.b16 %v1457, %v1425
    %v2354 = vpack.c.b16 %v1458, %v1426
    %v2355 = vpack.c.b16 %v1459, %v1427
    %v2356 = vpack.c.b16 %v1460, %v1428
    %v2357 = vpack.c.b16 %v1461, %v1429
    %v2358 = vpack.c.b16 %v1462, %v1430
    %v2359 = vpack.c.b16 %v1463, %v1431
    %v2360 = vpack.c.b16 %v1464, %v1432
    %v2361 = vpack.c.b16 %v1465, %v1433
    %v2362 = vpack.c.b16 %v1466, %v1434
    %v2363 = vpack.c.b16 %v1467, %v1435
    %v2364 = vpack.c.b16 %v1468, %v1436
    %v2365 = vpack.c.b16 %v1469, %v1437
    %v2366 = vpack.c.b16 %v1470, %v1438
    %v2367 = vpack.c.b16 %v1471, %v1439
    %v2368 = vpack.c.b16 %v1472, %v1440
    %v2369 = vpack.c.b16 %v1505, %v1473
    %v2370 = vpack.c.b16 %v1506, %v1474
    %v2371 = vpack.c.b16 %v1507, %v1475
    %v2372 = vpack.c.b16 %v1508, %v1476
    %v2373 = vpack.c.b16 %v1509, %v1477
    %v2374 = vpack.c.b16 %v1510, %v1478
    %v2375 = vpack.c.b16 %v1511, %v1479
    %v2376 = vpack.c.b16 %v1512, %v1480
    %v2377 = vpack.c.b16 %v1513, %v1481
    %v2378 = vpack.c.b16 %v1514, %v1482
    %v2379 = vpack.c.b16 %v1515, %v1483
    %v2380 = vpack.c.b16 %v1516, %v1484
    %v2381 = vpack.c.b16 %v1517, %v1485
    %v2382 = vpack.c.b16 %v1518, %v1486
    %v2383 = vpack.c.b16 %v1519, %v1487
    %v2384 = vpack.c.b16 %v1520, %v1488
    %v2385 = vpack.c.b16 %v1521, %v1489
    %v2386 = vpack.c.b16 %v1522, %v1490
    %v2387 = vpack.c.b16 %v1523, %v1491
    %v2388 = vpack.c.b16 %v1524, %v1492
    %v2389 = vpack.c.b16 %v1525, %v1493
    %v2390 = vpack.c.b16 %v1526, %v1494
    %v2391 = vpack.c.b16 %v1527, %v1495
    %v2392 = vpack.c.b16 %v1528, %v1496
    %v2393 = vpack.c.b16 %v1529, %v1497
    %v2394 = vpack.c.b16 %v1530, %v1498
    %v2395 = vpack.c.b16 %v1531, %v1499
    %v2396 = vpack.c.b16 %v1532, %v1500
    %v2397 = vpack.c.b16 %v1533, %v1501
    %v2398 = vpack.c.b16 %v1534, %v1502
    %v2399 = vpack.c.b16 %v1535, %v1503
    %v2400 = vpack.c.b16 %v1536, %v1504
    %v2401 = vpack.c.b16 %v1569, %v1537
    %v2402 = vpack.c.b16 %v1570, %v1538
    %v2403 = vpack.c.b16 %v1571, %v1539
    %v2404 = vpack.c.b16 %v1572, %v1540
    %v2405 = vpack.c.b16 %v1573, %v1541
    %v2406 = vpack.c.b16 %v1574, %v1542
    %v2407 = vpack.c.b16 %v1575, %v1543
    %v2408 = vpack.c.b16 %v1576, %v1544
    %v2409 = vpack.c.b16 %v1577, %v1545
    %v2410 = vpack.c.b16 %v1578, %v1546
    %v2411 = vpack.c.b16 %v1579, %v1547
    %v2412 = vpack.c.b16 %v1580, %v1548
    %v2413 = vpack.c.b16 %v1581, %v1549
    %v2414 = vpack.c.b16 %v1582, %v1550
    %v2415 = vpack.c.b16 %v1583, %v1551
    %v2416 = vpack.c.b16 %v1584, %v1552
    %v2417 = vpack.c.b16 %v1585, %v1553
    %v2418 = vpack.c.b16 %v1586, %v1554
    %v2419 = vpack.c.b16 %v1587, %v1555
    %v2420 = vpack.c.b16 %v1588, %v1556
    %v2421 = vpack.c.b16 %v1589, %v1557
    %v2422 = vpack.c.b16 %v1590, %v1558
    %v2423 = vpack.c.b16 %v1591, %v1559
    %v2424 = vpack.c.b16 %v1592, %v1560
    %v2425 = vpack.c.b16 %v1593, %v1561
    %v2426 = vpack.c.b16 %v1594, %v1562
    %v2427 = vpack.c.b16 %v1595, %v1563
    %v2428 = vpack.c.b16 %v1596, %v1564
    %v2429 = vpack.c.b16 %v1597, %v1565
    %v2430 = vpack.c.b16 %v1598, %v1566
    %v2431 = vpack.c.b16 %v1599, %v1567
    %v2432 = vpack.c.b16 %v1600, %v1568
    %v2433 = vpack.c.b16 %v1633, %v1601
    %v2434 = vpack.c.b16 %v1634, %v1602
    %v2435 = vpack.c.b16 %v1635, %v1603
    %v2436 = vpack.c.b16 %v1636, %v1604
    %v2437 = vpack.c.b16 %v1637, %v1605
    %v2438 = vpack.c.b16 %v1638, %v1606
    %v2439 = vpack.c.b16 %v1639, %v1607
    %v2440 = vpack.c.b16 %v1640, %v1608
    %v2441 = vpack.c.b16 %v1641, %v1609
    %v2442 = vpack.c.b16 %v1642, %v1610
    %v2443 = vpack.c.b16 %v1643, %v1611
    %v2444 = vpack.c.b16 %v1644, %v1612
    %v2445 = vpack.c.b16 %v1645, %v1613
    %v2446 = vpack.c.b16 %v1646, %v1614
    %v2447 = vpack.c.b16 %v1647, %v1615
    %v2448 = vpack.c.b16 %v1648, %v1616
    %v2449 = vpack.c.b16 %v1649, %v1617
    %v2450 = vpack.c.b16 %v1650, %v1618
    %v2451 = vpack.c.b16 %v1651, %v1619
    %v2452 = vpack.c.b16 %v1652, %v1620
    %v2453 = vpack.c.b16 %v1653, %v1621
    %v2454 = vpack.c.b16 %v1654, %v1622
    %v2455 = vpack.c.b16 %v1655, %v1623
    %v2456 = vpack.c.b16 %v1656, %v1624
    %v2457 = vpack.c.b16 %v1657, %v1625
    %v2458 = vpack.c.b16 %v1658, %v1626
    %v2459 = vpack.c.b16 %v1659, %v1627
    %v2460 = vpack.c.b16 %v1660, %v1628
    %v2461 = vpack.c.b16 %v1661, %v1629
    %v2462 = vpack.c.b16 %v1662, %v1630
    %v2463 = vpack.c.b16 %v1663, %v1631
    %v2464 = vpack.c.b16 %v1664, %v1632
    %v2465 = vpack.c.b16 %v1697, %v1665
    %v2466 = vpack.c.b16 %v1698, %v1666
    %v2467 = vpack.c.b16 %v1699, %v1667
    %v2468 = vpack.c.b16 %v1700, %v1668
    %v2469 = vpack.c.b16 %v1701, %v1669
    %v2470 = vpack.c.b16 %v1702, %v1670
    %v2471 = vpack.c.b16 %v1703, %v1671
    %v2472 = vpack.c.b16 %v1704, %v1672
    %v2473 = vpack.c.b16 %v1705, %v1673
    %v2474 = vpack.c.b16 %v1706, %v1674
    %v2475 = vpack.c.b16 %v1707, %v1675
    %v2476 = vpack.c.b16 %v1708, %v1676
    %v2477 = vpack.c.b16 %v1709, %v1677
    %v2478 = vpack.c.b16 %v1710, %v1678
    %v2479 = vpack.c.b16 %v1711, %v1679
    %v2480 = vpack.c.b16 %v1712, %v1680
    %v2481 = vpack.c.b16 %v1713, %v1681
    %v2482 = vpack.c.b16 %v1714, %v1682
    %v2483 = vpack.c.b16 %v1715, %v1683
    %v2484 = vpack.c.b16 %v1716, %v1684
    %v2485 = vpack.c.b16 %v1717, %v1685
    %v2486 = vpack.c.b16 %v1718, %v1686
    %v2487 = vpack.c.b16 %v1719, %v1687
    %v2488 = vpack.c.b16 %v1720, %v1688
    %v2489 = vpack.c.b16 %v1721, %v1689
    %v2490 = vpack.c.b16 %v1722, %v1690
    %v2491 = vpack.c.b16 %v1723, %v1691
    %v2492 = vpack.c.b16 %v1724, %v1692
    %v2493 = vpack.c.b16 %v1725, %v1693
    %v2494 = vpack.c.b16 %v1726, %v1694
    %v2495 = vpack.c.b16 %v1727, %v1695
    %v2496 = vpack.c.b16 %v1728, %v1696
    %v2497 = vpack.c.b16 %v1761, %v1729
    %v2498 = vpack.c.b16 %v1762, %v1730
    %v2499 = vpack.c.b16 %v1763, %v1731
    %v2500 = vpack.c.b16 %v1764, %v1732
    %v2501 = vpack.c.b16 %v1765, %v1733
    %v2502 = vpack.c.b16 %v1766, %v1734
    %v2503 = vpack.c.b16 %v1767, %v1735
    %v2504 = vpack.c.b16 %v1768, %v1736
    %v2505 = vpack.c.b16 %v1769, %v1737
    %v2506 = vpack.c.b16 %v1770, %v1738
    %v2507 = vpack.c.b16 %v1771, %v1739
    %v2508 = vpack.c.b16 %v1772, %v1740
    %v2509 = vpack.c.b16 %v1773, %v1741
    %v2510 = vpack.c.b16 %v1774, %v1742
    %v2511 = vpack.c.b16 %v1775, %v1743
    %v2512 = vpack.c.b16 %v1776, %v1744
    %v2513 = vpack.c.b16 %v1777, %v1745
    %v2514 = vpack.c.b16 %v1778, %v1746
    %v2515 = vpack.c.b16 %v1779, %v1747
    %v2516 = vpack.c.b16 %v1780, %v1748
    %v2517 = vpack.c.b16 %v1781, %v1749
    %v2518 = vpack.c.b16 %v1782, %v1750
    %v2519 = vpack.c.b16 %v1783, %v1751
    %v2520 = vpack.c.b16 %v1784, %v1752
    %v2521 = vpack.c.b16 %v1785, %v1753
    %v2522 = vpack.c.b16 %v1786, %v1754
    %v2523 = vpack.c.b16 %v1787, %v1755
    %v2524 = vpack.c.b16 %v1788, %v1756
    %v2525 = vpack.c.b16 %v1789, %v1757
    %v2526 = vpack.c.b16 %v1790, %v1758
    %v2527 = vpack.c.b16 %v1791, %v1759
    %v2528 = vpack.c.b16 %v1792, %v1760
    %v2529 = vpack.c.b16 %v1825, %v1793
    %v2530 = vpack.c.b16 %v1826, %v1794
    %v2531 = vpack.c.b16 %v1827, %v1795
    %v2532 = vpack.c.b16 %v1828, %v1796
    %v2533 = vpack.c.b16 %v1829, %v1797
    %v2534 = vpack.c.b16 %v1830, %v1798
    %v2535 = vpack.c.b16 %v1831, %v1799
    %v2536 = vpack.c.b16 %v1832, %v1800
    %v2537 = vpack.c.b16 %v1833, %v1801
    %v2538 = vpack.c.b16 %v1834, %v1802
    %v2539 = vpack.c.b16 %v1835, %v1803
    %v2540 = vpack.c.b16 %v1836, %v1804
    %v2541 = vpack.c.b16 %v1837, %v1805
    %v2542 = vpack.c.b16 %v1838, %v1806
    %v2543 = vpack.c.b16 %v1839, %v1807
    %v2544 = vpack.c.b16 %v1840, %v1808
    %v2545 = vpack.c.b16 %v1841, %v1809
    %v2546 = vpack.c.b16 %v1842, %v1810
    %v2547 = vpack.c.b16 %v1843, %v1811
    %v2548 = vpack.c.b16 %v1844, %v1812
    %v2549 = vpack.c.b16 %v1845, %v1813
    %v2550 = vpack.c.b16 %v1846, %v1814
    %v2551 = vpack.c.b16 %v1847, %v1815
    %v2552 = vpack.c.b16 %v1848, %v1816
    %v2553 = vpack.c.b16 %v1849, %v1817
    %v2554 = vpack.c.b16 %v1850, %v1818
    %v2555 = vpack.c.b16 %v1851, %v1819
    %v2556 = vpack.c.b16 %v1852, %v1820
    %v2557 = vpack.c.b16 %v1853, %v1821
    %v2558 = vpack.c.b16 %v1854, %v1822
    %v2559 = vpack.c.b16 %v1855, %v1823
    %v2560 = vpack.c.b16 %v1856, %v1824
    %v2561 = vpack.c.b16 %v1889, %v1857
    %v2562 = vpack.c.b16 %v1890, %v1858
    %v2563 = vpack.c.b16 %v1891, %v1859
    %v2564 = vpack.c.b16 %v1892, %v1860
    %v2565 = vpack.c.b16 %v1893, %v1861
    %v2566 = vpack.c.b16 %v1894, %v1862
    %v2567 = vpack.c.b16 %v1895, %v1863
    %v2568 = vpack.c.b16 %v1896, %v1864
    %v2569 = vpack.c.b16 %v1897, %v1865
    %v2570 = vpack.c.b16 %v1898, %v1866
    %v2571 = vpack.c.b16 %v1899, %v1867
    %v2572 = vpack.c.b16 %v1900, %v1868
    %v2573 = vpack.c.b16 %v1901, %v1869
    %v2574 = vpack.c.b16 %v1902, %v1870
    %v2575 = vpack.c.b16 %v1903, %v1871
    %v2576 = vpack.c.b16 %v1904, %v1872
    %v2577 = vpack.c.b16 %v1905, %v1873
    %v2578 = vpack.c.b16 %v1906, %v1874
    %v2579 = vpack.c.b16 %v1907, %v1875
    %v2580 = vpack.c.b16 %v1908, %v1876
    %v2581 = vpack.c.b16 %v1909, %v1877
    %v2582 = vpack.c.b16 %v1910, %v1878
    %v2583 = vpack.c.b16 %v1911, %v1879
    %v2584 = vpack.c.b16 %v1912, %v1880
    %v2585 = vpack.c.b16 %v1913, %v1881
    %v2586 = vpack.c.b16 %v1914, %v1882
    %v2587 = vpack.c.b16 %v1915, %v1883
    %v2588 = vpack.c.b16 %v1916, %v1884
    %v2589 = vpack.c.b16 %v1917, %v1885
    %v2590 = vpack.c.b16 %v1918, %v1886
    %v2591 = vpack.c.b16 %v1919, %v1887
    %v2592 = vpack.c.b16 %v1920, %v1888
    %v2593 = vpack.c.b16 %v1953, %v1921
    %v2594 = vpack.c.b16 %v1954, %v1922
    %v2595 = vpack.c.b16 %v1955, %v1923
    %v2596 = vpack.c.b16 %v1956, %v1924
    %v2597 = vpack.c.b16 %v1957, %v1925
    %v2598 = vpack.c.b16 %v1958, %v1926
    %v2599 = vpack.c.b16 %v1959, %v1927
    %v2600 = vpack.c.b16 %v1960, %v1928
    %v2601 = vpack.c.b16 %v1961, %v1929
    %v2602 = vpack.c.b16 %v1962, %v1930
    %v2603 = vpack.c.b16 %v1963, %v1931
    %v2604 = vpack.c.b16 %v1964, %v1932
    %v2605 = vpack.c.b16 %v1965, %v1933
    %v2606 = vpack.c.b16 %v1966, %v1934
    %v2607 = vpack.c.b16 %v1967, %v1935
    %v2608 = vpack.c.b16 %v1968, %v1936
    %v2609 = vpack.c.b16 %v1969, %v1937
    %v2610 = vpack.c.b16 %v1970, %v1938
    %v2611 = vpack.c.b16 %v1971, %v1939
    %v2612 = vpack.c.b16 %v1972, %v1940
    %v2613 = vpack.c.b16 %v1973, %v1941
    %v2614 = vpack.c.b16 %v1974, %v1942
    %v2615 = vpack.c.b16 %v1975, %v1943
    %v2616 = vpack.c.b16 %v1976, %v1944
    %v2617 = vpack.c.b16 %v1977, %v1945
    %v2618 = vpack.c.b16 %v1978, %v1946
    %v2619 = vpack.c.b16 %v1979, %v1947
    %v2620 = vpack.c.b16 %v1980, %v1948
    %v2621 = vpack.c.b16 %v1981, %v1949
    %v2622 = vpack.c.b16 %v1982, %v1950
    %v2623 = vpack.c.b16 %v1983, %v1951
    %v2624 = vpack.c.b16 %v1984, %v1952
    %v2625 = vpack.c.b16 %v2017, %v1985
    %v2626 = vpack.c.b16 %v2018, %v1986
    %v2627 = vpack.c.b16 %v2019, %v1987
    %v2628 = vpack.c.b16 %v2020, %v1988
    %v2629 = vpack.c.b16 %v2021, %v1989
    %v2630 = vpack.c.b16 %v2022, %v1990
    %v2631 = vpack.c.b16 %v2023, %v1991
    %v2632 = vpack.c.b16 %v2024, %v1992
    %v2633 = vpack.c.b16 %v2025, %v1993
    %v2634 = vpack.c.b16 %v2026, %v1994
    %v2635 = vpack.c.b16 %v2027, %v1995
    %v2636 = vpack.c.b16 %v2028, %v1996
    %v2637 = vpack.c.b16 %v2029, %v1997
    %v2638 = vpack.c.b16 %v2030, %v1998
    %v2639 = vpack.c.b16 %v2031, %v1999
    %v2640 = vpack.c.b16 %v2032, %v2000
    %v2641 = vpack.c.b16 %v2033, %v2001
    %v2642 = vpack.c.b16 %v2034, %v2002
    %v2643 = vpack.c.b16 %v2035, %v2003
    %v2644 = vpack.c.b16 %v2036, %v2004
    %v2645 = vpack.c.b16 %v2037, %v2005
    %v2646 = vpack.c.b16 %v2038, %v2006
    %v2647 = vpack.c.b16 %v2039, %v2007
    %v2648 = vpack.c.b16 %v2040, %v2008
    %v2649 = vpack.c.b16 %v2041, %v2009
    %v2650 = vpack.c.b16 %v2042, %v2010
    %v2651 = vpack.c.b16 %v2043, %v2011
    %v2652 = vpack.c.b16 %v2044, %v2012
    %v2653 = vpack.c.b16 %v2045, %v2013
    %v2654 = vpack.c.b16 %v2046, %v2014
    %v2655 = vpack.c.b16 %v2047, %v2015
    %v2656 = vpack.c.b16 %v2048, %v2016
    %v2657 = vpack.c.b16 %v2081, %v2049
    %v2658 = vpack.c.b16 %v2082, %v2050
    %v2659 = vpack.c.b16 %v2083, %v2051
    %v2660 = vpack.c.b16 %v2084, %v2052
    %v2661 = vpack.c.b16 %v2085, %v2053
    %v2662 = vpack.c.b16 %v2086, %v2054
    %v2663 = vpack.c.b16 %v2087, %v2055
    %v2664 = vpack.c.b16 %v2088, %v2056
    %v2665 = vpack.c.b16 %v2089, %v2057
    %v2666 = vpack.c.b16 %v2090, %v2058
    %v2667 = vpack.c.b16 %v2091, %v2059
    %v2668 = vpack.c.b16 %v2092, %v2060
    %v2669 = vpack.c.b16 %v2093, %v2061
    %v2670 = vpack.c.b16 %v2094, %v2062
    %v2671 = vpack.c.b16 %v2095, %v2063
    %v2672 = vpack.c.b16 %v2096, %v2064
    %v2673 = vpack.c.b16 %v2097, %v2065
    %v2674 = vpack.c.b16 %v2098, %v2066
    %v2675 = vpack.c.b16 %v2099, %v2067
    %v2676 = vpack.c.b16 %v2100, %v2068
    %v2677 = vpack.c.b16 %v2101, %v2069
    %v2678 = vpack.c.b16 %v2102, %v2070
    %v2679 = vpack.c.b16 %v2103, %v2071
    %v2680 = vpack.c.b16 %v2104, %v2072
    %v2681 = vpack.c.b16 %v2105, %v2073
    %v2682 = vpack.c.b16 %v2106, %v2074
    %v2683 = vpack.c.b16 %v2107, %v2075
    %v2684 = vpack.c.b16 %v2108, %v2076
    %v2685 = vpack.c.b16 %v2109, %v2077
    %v2686 = vpack.c.b16 %v2110, %v2078
    %v2687 = vpack.c.b16 %v2111, %v2079
    %v2688 = vpack.c.b16 %v2112, %v2080
    %v2689 = vpack.c.b16 %v2145, %v2113
    %v2690 = vpack.c.b16 %v2146, %v2114
    %v2691 = vpack.c.b16 %v2147, %v2115
    %v2692 = vpack.c.b16 %v2148, %v2116
    %v2693 = vpack.c.b16 %v2149, %v2117
    %v2694 = vpack.c.b16 %v2150, %v2118
    %v2695 = vpack.c.b16 %v2151, %v2119
    %v2696 = vpack.c.b16 %v2152, %v2120
    %v2697 = vpack.c.b16 %v2153, %v2121
    %v2698 = vpack.c.b16 %v2154, %v2122
    %v2699 = vpack.c.b16 %v2155, %v2123
    %v2700 = vpack.c.b16 %v2156, %v2124
    %v2701 = vpack.c.b16 %v2157, %v2125
    %v2702 = vpack.c.b16 %v2158, %v2126
    %v2703 = vpack.c.b16 %v2159, %v2127
    %v2704 = vpack.c.b16 %v2160, %v2128
    %v2705 = vpack.c.b16 %v2161, %v2129
    %v2706 = vpack.c.b16 %v2162, %v2130
    %v2707 = vpack.c.b16 %v2163, %v2131
    %v2708 = vpack.c.b16 %v2164, %v2132
    %v2709 = vpack.c.b16 %v2165, %v2133
    %v2710 = vpack.c.b16 %v2166, %v2134
    %v2711 = vpack.c.b16 %v2167, %v2135
    %v2712 = vpack.c.b16 %v2168, %v2136
    %v2713 = vpack.c.b16 %v2169, %v2137
    %v2714 = vpack.c.b16 %v2170, %v2138
    %v2715 = vpack.c.b16 %v2171, %v2139
    %v2716 = vpack.c.b16 %v2172, %v2140
    %v2717 = vpack.c.b16 %v2173, %v2141
    %v2718 = vpack.c.b16 %v2174, %v2142
    %v2719 = vpack.c.b16 %v2175, %v2143
    %v2720 = vpack.c.b16 %v2176, %v2144
    %v2721 = vpack.c.b16 %v2209, %v2177
    %v2722 = vpack.c.b16 %v2210, %v2178
    %v2723 = vpack.c.b16 %v2211, %v2179
    %v2724 = vpack.c.b16 %v2212, %v2180
    %v2725 = vpack.c.b16 %v2213, %v2181
    %v2726 = vpack.c.b16 %v2214, %v2182
    %v2727 = vpack.c.b16 %v2215, %v2183
    %v2728 = vpack.c.b16 %v2216, %v2184
    %v2729 = vpack.c.b16 %v2217, %v2185
    %v2730 = vpack.c.b16 %v2218, %v2186
    %v2731 = vpack.c.b16 %v2219, %v2187
    %v2732 = vpack.c.b16 %v2220, %v2188
    %v2733 = vpack.c.b16 %v2221, %v2189
    %v2734 = vpack.c.b16 %v2222, %v2190
    %v2735 = vpack.c.b16 %v2223, %v2191
    %v2736 = vpack.c.b16 %v2224, %v2192
    %v2737 = vpack.c.b16 %v2225, %v2193
    %v2738 = vpack.c.b16 %v2226, %v2194
    %v2739 = vpack.c.b16 %v2227, %v2195
    %v2740 = vpack.c.b16 %v2228, %v2196
    %v2741 = vpack.c.b16 %v2229, %v2197
    %v2742 = vpack.c.b16 %v2230, %v2198
    %v2743 = vpack.c.b16 %v2231, %v2199
    %v2744 = vpack.c.b16 %v2232, %v2200
    %v2745 = vpack.c.b16 %v2233, %v2201
    %v2746 = vpack.c.b16 %v2234, %v2202
    %v2747 = vpack.c.b16 %v2235, %v2203
    %v2748 = vpack.c.b16 %v2236, %v2204
    %v2749 = vpack.c.b16 %v2237, %v2205
    %v2750 = vpack.c.b16 %v2238, %v2206
    %v2751 = vpack.c.b16 %v2239, %v2207
    %v2752 = vpack.c.b16 %v2240, %v2208
    %3265 = vmatpush.bf16.msra.mxu0 %v2465
    %3266 = vmatpush.bf16.msra.mxu0 %v2433
    %3267 = vmatpush.bf16.msra.mxu0 %v2401
    %3268 = vmatpush.bf16.msra.mxu0 %v2369
    %3269 = vmatpush.bf16.msra.mxu0 %v2337
    %3270 = vmatpush.bf16.msra.mxu0 %v2305
    %3271 = vmatpush.bf16.msra.mxu0 %v2273
    %3272 = vmatpush.bf16.msra.mxu0 %v2241
    %3273 = vmatmul.bf16.gmra.mxu0 %v119
    %v3274 = vpop.f32.mrf.mxu0
    %v3275 = vadd.f32 %v641, %v3274
    %v3276 = vpop.f32.mrf.mxu0
    %3277 = vdwg.mxu0
    %3278 = vmatpush.bf16.msra.mxu0 %v2721
    %3279 = vmatpush.bf16.msra.mxu0 %v2689
    %3280 = vmatpush.bf16.msra.mxu0 %v2657
    %3281 = vmatpush.bf16.msra.mxu0 %v2625
    %3282 = vmatpush.bf16.msra.mxu0 %v2593
    %3283 = vmatpush.bf16.msra.mxu0 %v2561
    %3284 = vmatpush.bf16.msra.mxu0 %v2529
    %3285 = vmatpush.bf16.msra.mxu0 %v2497
    %3286 = vmatmul.bf16.gmra.mxu0 %v120
    %v3287 = vpop.f32.mrf.mxu0
    %v3288 = vadd.f32 %v3275, %v3287
    %v3289 = vpop.f32.mrf.mxu0
    %3290 = vdwg.mxu0
    %3291 = vmatpush.bf16.msra.mxu0 %v2466
    %3292 = vmatpush.bf16.msra.mxu0 %v2434
    %3293 = vmatpush.bf16.msra.mxu0 %v2402
    %3294 = vmatpush.bf16.msra.mxu0 %v2370
    %3295 = vmatpush.bf16.msra.mxu0 %v2338
    %3296 = vmatpush.bf16.msra.mxu0 %v2306
    %3297 = vmatpush.bf16.msra.mxu0 %v2274
    %3298 = vmatpush.bf16.msra.mxu0 %v2242
    %3299 = vmatmul.bf16.gmra.mxu0 %v119
    %v3300 = vpop.f32.mrf.mxu0
    %v3301 = vadd.f32 %v642, %v3300
    %v3302 = vpop.f32.mrf.mxu0
    %3303 = vdwg.mxu0
    %3304 = vmatpush.bf16.msra.mxu0 %v2722
    %3305 = vmatpush.bf16.msra.mxu0 %v2690
    %3306 = vmatpush.bf16.msra.mxu0 %v2658
    %3307 = vmatpush.bf16.msra.mxu0 %v2626
    %3308 = vmatpush.bf16.msra.mxu0 %v2594
    %3309 = vmatpush.bf16.msra.mxu0 %v2562
    %3310 = vmatpush.bf16.msra.mxu0 %v2530
    %3311 = vmatpush.bf16.msra.mxu0 %v2498
    %3312 = vmatmul.bf16.gmra.mxu0 %v120
    %v3313 = vpop.f32.mrf.mxu0
    %v3314 = vadd.f32 %v3301, %v3313
    %v3315 = vpop.f32.mrf.mxu0
    %3316 = vdwg.mxu0
    %3317 = vmatpush.bf16.msra.mxu0 %v2467
    %3318 = vmatpush.bf16.msra.mxu0 %v2435
    %3319 = vmatpush.bf16.msra.mxu0 %v2403
    %3320 = vmatpush.bf16.msra.mxu0 %v2371
    %3321 = vmatpush.bf16.msra.mxu0 %v2339
    %3322 = vmatpush.bf16.msra.mxu0 %v2307
    %3323 = vmatpush.bf16.msra.mxu0 %v2275
    %3324 = vmatpush.bf16.msra.mxu0 %v2243
    %3325 = vmatmul.bf16.gmra.mxu0 %v119
    %v3326 = vpop.f32.mrf.mxu0
    %v3327 = vadd.f32 %v643, %v3326
    %v3328 = vpop.f32.mrf.mxu0
    %3329 = vdwg.mxu0
    %3330 = vmatpush.bf16.msra.mxu0 %v2723
    %3331 = vmatpush.bf16.msra.mxu0 %v2691
    %3332 = vmatpush.bf16.msra.mxu0 %v2659
    %3333 = vmatpush.bf16.msra.mxu0 %v2627
    %3334 = vmatpush.bf16.msra.mxu0 %v2595
    %3335 = vmatpush.bf16.msra.mxu0 %v2563
    %3336 = vmatpush.bf16.msra.mxu0 %v2531
    %3337 = vmatpush.bf16.msra.mxu0 %v2499
    %3338 = vmatmul.bf16.gmra.mxu0 %v120
    %v3339 = vpop.f32.mrf.mxu0
    %v3340 = vadd.f32 %v3327, %v3339
    %v3341 = vpop.f32.mrf.mxu0
    %3342 = vdwg.mxu0
    %3343 = vmatpush.bf16.msra.mxu0 %v2468
    %3344 = vmatpush.bf16.msra.mxu0 %v2436
    %3345 = vmatpush.bf16.msra.mxu0 %v2404
    %3346 = vmatpush.bf16.msra.mxu0 %v2372
    %3347 = vmatpush.bf16.msra.mxu0 %v2340
    %3348 = vmatpush.bf16.msra.mxu0 %v2308
    %3349 = vmatpush.bf16.msra.mxu0 %v2276
    %3350 = vmatpush.bf16.msra.mxu0 %v2244
    %3351 = vmatmul.bf16.gmra.mxu0 %v119
    %v3352 = vpop.f32.mrf.mxu0
    %v3353 = vadd.f32 %v644, %v3352
    %v3354 = vpop.f32.mrf.mxu0
    %3355 = vdwg.mxu0
    %3356 = vmatpush.bf16.msra.mxu0 %v2724
    %3357 = vmatpush.bf16.msra.mxu0 %v2692
    %3358 = vmatpush.bf16.msra.mxu0 %v2660
    %3359 = vmatpush.bf16.msra.mxu0 %v2628
    %3360 = vmatpush.bf16.msra.mxu0 %v2596
    %3361 = vmatpush.bf16.msra.mxu0 %v2564
    %3362 = vmatpush.bf16.msra.mxu0 %v2532
    %3363 = vmatpush.bf16.msra.mxu0 %v2500
    %3364 = vmatmul.bf16.gmra.mxu0 %v120
    %v3365 = vpop.f32.mrf.mxu0
    %v3366 = vadd.f32 %v3353, %v3365
    %v3367 = vpop.f32.mrf.mxu0
    %3368 = vdwg.mxu0
    %3369 = vmatpush.bf16.msra.mxu0 %v2469
    %3370 = vmatpush.bf16.msra.mxu0 %v2437
    %3371 = vmatpush.bf16.msra.mxu0 %v2405
    %3372 = vmatpush.bf16.msra.mxu0 %v2373
    %3373 = vmatpush.bf16.msra.mxu0 %v2341
    %3374 = vmatpush.bf16.msra.mxu0 %v2309
    %3375 = vmatpush.bf16.msra.mxu0 %v2277
    %3376 = vmatpush.bf16.msra.mxu0 %v2245
    %3377 = vmatmul.bf16.gmra.mxu0 %v119
    %v3378 = vpop.f32.mrf.mxu0
    %v3379 = vadd.f32 %v645, %v3378
    %v3380 = vpop.f32.mrf.mxu0
    %3381 = vdwg.mxu0
    %3382 = vmatpush.bf16.msra.mxu0 %v2725
    %3383 = vmatpush.bf16.msra.mxu0 %v2693
    %3384 = vmatpush.bf16.msra.mxu0 %v2661
    %3385 = vmatpush.bf16.msra.mxu0 %v2629
    %3386 = vmatpush.bf16.msra.mxu0 %v2597
    %3387 = vmatpush.bf16.msra.mxu0 %v2565
    %3388 = vmatpush.bf16.msra.mxu0 %v2533
    %3389 = vmatpush.bf16.msra.mxu0 %v2501
    %3390 = vmatmul.bf16.gmra.mxu0 %v120
    %v3391 = vpop.f32.mrf.mxu0
    %v3392 = vadd.f32 %v3379, %v3391
    %v3393 = vpop.f32.mrf.mxu0
    %3394 = vdwg.mxu0
    %3395 = vmatpush.bf16.msra.mxu0 %v2470
    %3396 = vmatpush.bf16.msra.mxu0 %v2438
    %3397 = vmatpush.bf16.msra.mxu0 %v2406
    %3398 = vmatpush.bf16.msra.mxu0 %v2374
    %3399 = vmatpush.bf16.msra.mxu0 %v2342
    %3400 = vmatpush.bf16.msra.mxu0 %v2310
    %3401 = vmatpush.bf16.msra.mxu0 %v2278
    %3402 = vmatpush.bf16.msra.mxu0 %v2246
    %3403 = vmatmul.bf16.gmra.mxu0 %v119
    %v3404 = vpop.f32.mrf.mxu0
    %v3405 = vadd.f32 %v646, %v3404
    %v3406 = vpop.f32.mrf.mxu0
    %3407 = vdwg.mxu0
    %3408 = vmatpush.bf16.msra.mxu0 %v2726
    %3409 = vmatpush.bf16.msra.mxu0 %v2694
    %3410 = vmatpush.bf16.msra.mxu0 %v2662
    %3411 = vmatpush.bf16.msra.mxu0 %v2630
    %3412 = vmatpush.bf16.msra.mxu0 %v2598
    %3413 = vmatpush.bf16.msra.mxu0 %v2566
    %3414 = vmatpush.bf16.msra.mxu0 %v2534
    %3415 = vmatpush.bf16.msra.mxu0 %v2502
    %3416 = vmatmul.bf16.gmra.mxu0 %v120
    %v3417 = vpop.f32.mrf.mxu0
    %v3418 = vadd.f32 %v3405, %v3417
    %v3419 = vpop.f32.mrf.mxu0
    %3420 = vdwg.mxu0
    %3421 = vmatpush.bf16.msra.mxu0 %v2471
    %3422 = vmatpush.bf16.msra.mxu0 %v2439
    %3423 = vmatpush.bf16.msra.mxu0 %v2407
    %3424 = vmatpush.bf16.msra.mxu0 %v2375
    %3425 = vmatpush.bf16.msra.mxu0 %v2343
    %3426 = vmatpush.bf16.msra.mxu0 %v2311
    %3427 = vmatpush.bf16.msra.mxu0 %v2279
    %3428 = vmatpush.bf16.msra.mxu0 %v2247
    %3429 = vmatmul.bf16.gmra.mxu0 %v119
    %v3430 = vpop.f32.mrf.mxu0
    %v3431 = vadd.f32 %v647, %v3430
    %v3432 = vpop.f32.mrf.mxu0
    %3433 = vdwg.mxu0
    %3434 = vmatpush.bf16.msra.mxu0 %v2727
    %3435 = vmatpush.bf16.msra.mxu0 %v2695
    %3436 = vmatpush.bf16.msra.mxu0 %v2663
    %3437 = vmatpush.bf16.msra.mxu0 %v2631
    %3438 = vmatpush.bf16.msra.mxu0 %v2599
    %3439 = vmatpush.bf16.msra.mxu0 %v2567
    %3440 = vmatpush.bf16.msra.mxu0 %v2535
    %3441 = vmatpush.bf16.msra.mxu0 %v2503
    %3442 = vmatmul.bf16.gmra.mxu0 %v120
    %v3443 = vpop.f32.mrf.mxu0
    %v3444 = vadd.f32 %v3431, %v3443
    %v3445 = vpop.f32.mrf.mxu0
    %3446 = vdwg.mxu0
    %3447 = vmatpush.bf16.msra.mxu0 %v2472
    %3448 = vmatpush.bf16.msra.mxu0 %v2440
    %3449 = vmatpush.bf16.msra.mxu0 %v2408
    %3450 = vmatpush.bf16.msra.mxu0 %v2376
    %3451 = vmatpush.bf16.msra.mxu0 %v2344
    %3452 = vmatpush.bf16.msra.mxu0 %v2312
    %3453 = vmatpush.bf16.msra.mxu0 %v2280
    %3454 = vmatpush.bf16.msra.mxu0 %v2248
    %3455 = vmatmul.bf16.gmra.mxu0 %v119
    %v3456 = vpop.f32.mrf.mxu0
    %v3457 = vadd.f32 %v648, %v3456
    %v3458 = vpop.f32.mrf.mxu0
    %3459 = vdwg.mxu0
    %3460 = vmatpush.bf16.msra.mxu0 %v2728
    %3461 = vmatpush.bf16.msra.mxu0 %v2696
    %3462 = vmatpush.bf16.msra.mxu0 %v2664
    %3463 = vmatpush.bf16.msra.mxu0 %v2632
    %3464 = vmatpush.bf16.msra.mxu0 %v2600
    %3465 = vmatpush.bf16.msra.mxu0 %v2568
    %3466 = vmatpush.bf16.msra.mxu0 %v2536
    %3467 = vmatpush.bf16.msra.mxu0 %v2504
    %3468 = vmatmul.bf16.gmra.mxu0 %v120
    %v3469 = vpop.f32.mrf.mxu0
    %v3470 = vadd.f32 %v3457, %v3469
    %v3471 = vpop.f32.mrf.mxu0
    %3472 = vdwg.mxu0
    %3473 = vmatpush.bf16.msra.mxu0 %v2473
    %3474 = vmatpush.bf16.msra.mxu0 %v2441
    %3475 = vmatpush.bf16.msra.mxu0 %v2409
    %3476 = vmatpush.bf16.msra.mxu0 %v2377
    %3477 = vmatpush.bf16.msra.mxu0 %v2345
    %3478 = vmatpush.bf16.msra.mxu0 %v2313
    %3479 = vmatpush.bf16.msra.mxu0 %v2281
    %3480 = vmatpush.bf16.msra.mxu0 %v2249
    %3481 = vmatmul.bf16.gmra.mxu0 %v119
    %v3482 = vpop.f32.mrf.mxu0
    %v3483 = vadd.f32 %v649, %v3482
    %v3484 = vpop.f32.mrf.mxu0
    %3485 = vdwg.mxu0
    %3486 = vmatpush.bf16.msra.mxu0 %v2729
    %3487 = vmatpush.bf16.msra.mxu0 %v2697
    %3488 = vmatpush.bf16.msra.mxu0 %v2665
    %3489 = vmatpush.bf16.msra.mxu0 %v2633
    %3490 = vmatpush.bf16.msra.mxu0 %v2601
    %3491 = vmatpush.bf16.msra.mxu0 %v2569
    %3492 = vmatpush.bf16.msra.mxu0 %v2537
    %3493 = vmatpush.bf16.msra.mxu0 %v2505
    %3494 = vmatmul.bf16.gmra.mxu0 %v120
    %v3495 = vpop.f32.mrf.mxu0
    %v3496 = vadd.f32 %v3483, %v3495
    %v3497 = vpop.f32.mrf.mxu0
    %3498 = vdwg.mxu0
    %3499 = vmatpush.bf16.msra.mxu0 %v2474
    %3500 = vmatpush.bf16.msra.mxu0 %v2442
    %3501 = vmatpush.bf16.msra.mxu0 %v2410
    %3502 = vmatpush.bf16.msra.mxu0 %v2378
    %3503 = vmatpush.bf16.msra.mxu0 %v2346
    %3504 = vmatpush.bf16.msra.mxu0 %v2314
    %3505 = vmatpush.bf16.msra.mxu0 %v2282
    %3506 = vmatpush.bf16.msra.mxu0 %v2250
    %3507 = vmatmul.bf16.gmra.mxu0 %v119
    %v3508 = vpop.f32.mrf.mxu0
    %v3509 = vadd.f32 %v650, %v3508
    %v3510 = vpop.f32.mrf.mxu0
    %3511 = vdwg.mxu0
    %3512 = vmatpush.bf16.msra.mxu0 %v2730
    %3513 = vmatpush.bf16.msra.mxu0 %v2698
    %3514 = vmatpush.bf16.msra.mxu0 %v2666
    %3515 = vmatpush.bf16.msra.mxu0 %v2634
    %3516 = vmatpush.bf16.msra.mxu0 %v2602
    %3517 = vmatpush.bf16.msra.mxu0 %v2570
    %3518 = vmatpush.bf16.msra.mxu0 %v2538
    %3519 = vmatpush.bf16.msra.mxu0 %v2506
    %3520 = vmatmul.bf16.gmra.mxu0 %v120
    %v3521 = vpop.f32.mrf.mxu0
    %v3522 = vadd.f32 %v3509, %v3521
    %v3523 = vpop.f32.mrf.mxu0
    %3524 = vdwg.mxu0
    %3525 = vmatpush.bf16.msra.mxu0 %v2475
    %3526 = vmatpush.bf16.msra.mxu0 %v2443
    %3527 = vmatpush.bf16.msra.mxu0 %v2411
    %3528 = vmatpush.bf16.msra.mxu0 %v2379
    %3529 = vmatpush.bf16.msra.mxu0 %v2347
    %3530 = vmatpush.bf16.msra.mxu0 %v2315
    %3531 = vmatpush.bf16.msra.mxu0 %v2283
    %3532 = vmatpush.bf16.msra.mxu0 %v2251
    %3533 = vmatmul.bf16.gmra.mxu0 %v119
    %v3534 = vpop.f32.mrf.mxu0
    %v3535 = vadd.f32 %v651, %v3534
    %v3536 = vpop.f32.mrf.mxu0
    %3537 = vdwg.mxu0
    %3538 = vmatpush.bf16.msra.mxu0 %v2731
    %3539 = vmatpush.bf16.msra.mxu0 %v2699
    %3540 = vmatpush.bf16.msra.mxu0 %v2667
    %3541 = vmatpush.bf16.msra.mxu0 %v2635
    %3542 = vmatpush.bf16.msra.mxu0 %v2603
    %3543 = vmatpush.bf16.msra.mxu0 %v2571
    %3544 = vmatpush.bf16.msra.mxu0 %v2539
    %3545 = vmatpush.bf16.msra.mxu0 %v2507
    %3546 = vmatmul.bf16.gmra.mxu0 %v120
    %v3547 = vpop.f32.mrf.mxu0
    %v3548 = vadd.f32 %v3535, %v3547
    %v3549 = vpop.f32.mrf.mxu0
    %3550 = vdwg.mxu0
    %3551 = vmatpush.bf16.msra.mxu0 %v2476
    %3552 = vmatpush.bf16.msra.mxu0 %v2444
    %3553 = vmatpush.bf16.msra.mxu0 %v2412
    %3554 = vmatpush.bf16.msra.mxu0 %v2380
    %3555 = vmatpush.bf16.msra.mxu0 %v2348
    %3556 = vmatpush.bf16.msra.mxu0 %v2316
    %3557 = vmatpush.bf16.msra.mxu0 %v2284
    %3558 = vmatpush.bf16.msra.mxu0 %v2252
    %3559 = vmatmul.bf16.gmra.mxu0 %v119
    %v3560 = vpop.f32.mrf.mxu0
    %v3561 = vadd.f32 %v652, %v3560
    %v3562 = vpop.f32.mrf.mxu0
    %3563 = vdwg.mxu0
    %3564 = vmatpush.bf16.msra.mxu0 %v2732
    %3565 = vmatpush.bf16.msra.mxu0 %v2700
    %3566 = vmatpush.bf16.msra.mxu0 %v2668
    %3567 = vmatpush.bf16.msra.mxu0 %v2636
    %3568 = vmatpush.bf16.msra.mxu0 %v2604
    %3569 = vmatpush.bf16.msra.mxu0 %v2572
    %3570 = vmatpush.bf16.msra.mxu0 %v2540
    %3571 = vmatpush.bf16.msra.mxu0 %v2508
    %3572 = vmatmul.bf16.gmra.mxu0 %v120
    %v3573 = vpop.f32.mrf.mxu0
    %v3574 = vadd.f32 %v3561, %v3573
    %v3575 = vpop.f32.mrf.mxu0
    %3576 = vdwg.mxu0
    %3577 = vmatpush.bf16.msra.mxu0 %v2477
    %3578 = vmatpush.bf16.msra.mxu0 %v2445
    %3579 = vmatpush.bf16.msra.mxu0 %v2413
    %3580 = vmatpush.bf16.msra.mxu0 %v2381
    %3581 = vmatpush.bf16.msra.mxu0 %v2349
    %3582 = vmatpush.bf16.msra.mxu0 %v2317
    %3583 = vmatpush.bf16.msra.mxu0 %v2285
    %3584 = vmatpush.bf16.msra.mxu0 %v2253
    %3585 = vmatmul.bf16.gmra.mxu0 %v119
    %v3586 = vpop.f32.mrf.mxu0
    %v3587 = vadd.f32 %v653, %v3586
    %v3588 = vpop.f32.mrf.mxu0
    %3589 = vdwg.mxu0
    %3590 = vmatpush.bf16.msra.mxu0 %v2733
    %3591 = vmatpush.bf16.msra.mxu0 %v2701
    %3592 = vmatpush.bf16.msra.mxu0 %v2669
    %3593 = vmatpush.bf16.msra.mxu0 %v2637
    %3594 = vmatpush.bf16.msra.mxu0 %v2605
    %3595 = vmatpush.bf16.msra.mxu0 %v2573
    %3596 = vmatpush.bf16.msra.mxu0 %v2541
    %3597 = vmatpush.bf16.msra.mxu0 %v2509
    %3598 = vmatmul.bf16.gmra.mxu0 %v120
    %v3599 = vpop.f32.mrf.mxu0
    %v3600 = vadd.f32 %v3587, %v3599
    %v3601 = vpop.f32.mrf.mxu0
    %3602 = vdwg.mxu0
    %3603 = vmatpush.bf16.msra.mxu0 %v2478
    %3604 = vmatpush.bf16.msra.mxu0 %v2446
    %3605 = vmatpush.bf16.msra.mxu0 %v2414
    %3606 = vmatpush.bf16.msra.mxu0 %v2382
    %3607 = vmatpush.bf16.msra.mxu0 %v2350
    %3608 = vmatpush.bf16.msra.mxu0 %v2318
    %3609 = vmatpush.bf16.msra.mxu0 %v2286
    %3610 = vmatpush.bf16.msra.mxu0 %v2254
    %3611 = vmatmul.bf16.gmra.mxu0 %v119
    %v3612 = vpop.f32.mrf.mxu0
    %v3613 = vadd.f32 %v654, %v3612
    %v3614 = vpop.f32.mrf.mxu0
    %3615 = vdwg.mxu0
    %3616 = vmatpush.bf16.msra.mxu0 %v2734
    %3617 = vmatpush.bf16.msra.mxu0 %v2702
    %3618 = vmatpush.bf16.msra.mxu0 %v2670
    %3619 = vmatpush.bf16.msra.mxu0 %v2638
    %3620 = vmatpush.bf16.msra.mxu0 %v2606
    %3621 = vmatpush.bf16.msra.mxu0 %v2574
    %3622 = vmatpush.bf16.msra.mxu0 %v2542
    %3623 = vmatpush.bf16.msra.mxu0 %v2510
    %3624 = vmatmul.bf16.gmra.mxu0 %v120
    %v3625 = vpop.f32.mrf.mxu0
    %v3626 = vadd.f32 %v3613, %v3625
    %v3627 = vpop.f32.mrf.mxu0
    %3628 = vdwg.mxu0
    %3629 = vmatpush.bf16.msra.mxu0 %v2479
    %3630 = vmatpush.bf16.msra.mxu0 %v2447
    %3631 = vmatpush.bf16.msra.mxu0 %v2415
    %3632 = vmatpush.bf16.msra.mxu0 %v2383
    %3633 = vmatpush.bf16.msra.mxu0 %v2351
    %3634 = vmatpush.bf16.msra.mxu0 %v2319
    %3635 = vmatpush.bf16.msra.mxu0 %v2287
    %3636 = vmatpush.bf16.msra.mxu0 %v2255
    %3637 = vmatmul.bf16.gmra.mxu0 %v119
    %v3638 = vpop.f32.mrf.mxu0
    %v3639 = vadd.f32 %v655, %v3638
    %v3640 = vpop.f32.mrf.mxu0
    %3641 = vdwg.mxu0
    %3642 = vmatpush.bf16.msra.mxu0 %v2735
    %3643 = vmatpush.bf16.msra.mxu0 %v2703
    %3644 = vmatpush.bf16.msra.mxu0 %v2671
    %3645 = vmatpush.bf16.msra.mxu0 %v2639
    %3646 = vmatpush.bf16.msra.mxu0 %v2607
    %3647 = vmatpush.bf16.msra.mxu0 %v2575
    %3648 = vmatpush.bf16.msra.mxu0 %v2543
    %3649 = vmatpush.bf16.msra.mxu0 %v2511
    %3650 = vmatmul.bf16.gmra.mxu0 %v120
    %v3651 = vpop.f32.mrf.mxu0
    %v3652 = vadd.f32 %v3639, %v3651
    %v3653 = vpop.f32.mrf.mxu0
    %3654 = vdwg.mxu0
    %3655 = vmatpush.bf16.msra.mxu0 %v2480
    %3656 = vmatpush.bf16.msra.mxu0 %v2448
    %3657 = vmatpush.bf16.msra.mxu0 %v2416
    %3658 = vmatpush.bf16.msra.mxu0 %v2384
    %3659 = vmatpush.bf16.msra.mxu0 %v2352
    %3660 = vmatpush.bf16.msra.mxu0 %v2320
    %3661 = vmatpush.bf16.msra.mxu0 %v2288
    %3662 = vmatpush.bf16.msra.mxu0 %v2256
    %3663 = vmatmul.bf16.gmra.mxu0 %v119
    %v3664 = vpop.f32.mrf.mxu0
    %v3665 = vadd.f32 %v656, %v3664
    %v3666 = vpop.f32.mrf.mxu0
    %3667 = vdwg.mxu0
    %3668 = vmatpush.bf16.msra.mxu0 %v2736
    %3669 = vmatpush.bf16.msra.mxu0 %v2704
    %3670 = vmatpush.bf16.msra.mxu0 %v2672
    %3671 = vmatpush.bf16.msra.mxu0 %v2640
    %3672 = vmatpush.bf16.msra.mxu0 %v2608
    %3673 = vmatpush.bf16.msra.mxu0 %v2576
    %3674 = vmatpush.bf16.msra.mxu0 %v2544
    %3675 = vmatpush.bf16.msra.mxu0 %v2512
    %3676 = vmatmul.bf16.gmra.mxu0 %v120
    %v3677 = vpop.f32.mrf.mxu0
    %v3678 = vadd.f32 %v3665, %v3677
    %v3679 = vpop.f32.mrf.mxu0
    %3680 = vdwg.mxu0
    %3681 = vmatpush.bf16.msra.mxu0 %v2481
    %3682 = vmatpush.bf16.msra.mxu0 %v2449
    %3683 = vmatpush.bf16.msra.mxu0 %v2417
    %3684 = vmatpush.bf16.msra.mxu0 %v2385
    %3685 = vmatpush.bf16.msra.mxu0 %v2353
    %3686 = vmatpush.bf16.msra.mxu0 %v2321
    %3687 = vmatpush.bf16.msra.mxu0 %v2289
    %3688 = vmatpush.bf16.msra.mxu0 %v2257
    %3689 = vmatmul.bf16.gmra.mxu0 %v119
    %v3690 = vpop.f32.mrf.mxu0
    %v3691 = vadd.f32 %v657, %v3690
    %v3692 = vpop.f32.mrf.mxu0
    %3693 = vdwg.mxu0
    %3694 = vmatpush.bf16.msra.mxu0 %v2737
    %3695 = vmatpush.bf16.msra.mxu0 %v2705
    %3696 = vmatpush.bf16.msra.mxu0 %v2673
    %3697 = vmatpush.bf16.msra.mxu0 %v2641
    %3698 = vmatpush.bf16.msra.mxu0 %v2609
    %3699 = vmatpush.bf16.msra.mxu0 %v2577
    %3700 = vmatpush.bf16.msra.mxu0 %v2545
    %3701 = vmatpush.bf16.msra.mxu0 %v2513
    %3702 = vmatmul.bf16.gmra.mxu0 %v120
    %v3703 = vpop.f32.mrf.mxu0
    %v3704 = vadd.f32 %v3691, %v3703
    %v3705 = vpop.f32.mrf.mxu0
    %3706 = vdwg.mxu0
    %3707 = vmatpush.bf16.msra.mxu0 %v2482
    %3708 = vmatpush.bf16.msra.mxu0 %v2450
    %3709 = vmatpush.bf16.msra.mxu0 %v2418
    %3710 = vmatpush.bf16.msra.mxu0 %v2386
    %3711 = vmatpush.bf16.msra.mxu0 %v2354
    %3712 = vmatpush.bf16.msra.mxu0 %v2322
    %3713 = vmatpush.bf16.msra.mxu0 %v2290
    %3714 = vmatpush.bf16.msra.mxu0 %v2258
    %3715 = vmatmul.bf16.gmra.mxu0 %v119
    %v3716 = vpop.f32.mrf.mxu0
    %v3717 = vadd.f32 %v658, %v3716
    %v3718 = vpop.f32.mrf.mxu0
    %3719 = vdwg.mxu0
    %3720 = vmatpush.bf16.msra.mxu0 %v2738
    %3721 = vmatpush.bf16.msra.mxu0 %v2706
    %3722 = vmatpush.bf16.msra.mxu0 %v2674
    %3723 = vmatpush.bf16.msra.mxu0 %v2642
    %3724 = vmatpush.bf16.msra.mxu0 %v2610
    %3725 = vmatpush.bf16.msra.mxu0 %v2578
    %3726 = vmatpush.bf16.msra.mxu0 %v2546
    %3727 = vmatpush.bf16.msra.mxu0 %v2514
    %3728 = vmatmul.bf16.gmra.mxu0 %v120
    %v3729 = vpop.f32.mrf.mxu0
    %v3730 = vadd.f32 %v3717, %v3729
    %v3731 = vpop.f32.mrf.mxu0
    %3732 = vdwg.mxu0
    %3733 = vmatpush.bf16.msra.mxu0 %v2483
    %3734 = vmatpush.bf16.msra.mxu0 %v2451
    %3735 = vmatpush.bf16.msra.mxu0 %v2419
    %3736 = vmatpush.bf16.msra.mxu0 %v2387
    %3737 = vmatpush.bf16.msra.mxu0 %v2355
    %3738 = vmatpush.bf16.msra.mxu0 %v2323
    %3739 = vmatpush.bf16.msra.mxu0 %v2291
    %3740 = vmatpush.bf16.msra.mxu0 %v2259
    %3741 = vmatmul.bf16.gmra.mxu0 %v119
    %v3742 = vpop.f32.mrf.mxu0
    %v3743 = vadd.f32 %v659, %v3742
    %v3744 = vpop.f32.mrf.mxu0
    %3745 = vdwg.mxu0
    %3746 = vmatpush.bf16.msra.mxu0 %v2739
    %3747 = vmatpush.bf16.msra.mxu0 %v2707
    %3748 = vmatpush.bf16.msra.mxu0 %v2675
    %3749 = vmatpush.bf16.msra.mxu0 %v2643
    %3750 = vmatpush.bf16.msra.mxu0 %v2611
    %3751 = vmatpush.bf16.msra.mxu0 %v2579
    %3752 = vmatpush.bf16.msra.mxu0 %v2547
    %3753 = vmatpush.bf16.msra.mxu0 %v2515
    %3754 = vmatmul.bf16.gmra.mxu0 %v120
    %v3755 = vpop.f32.mrf.mxu0
    %v3756 = vadd.f32 %v3743, %v3755
    %v3757 = vpop.f32.mrf.mxu0
    %3758 = vdwg.mxu0
    %3759 = vmatpush.bf16.msra.mxu0 %v2484
    %3760 = vmatpush.bf16.msra.mxu0 %v2452
    %3761 = vmatpush.bf16.msra.mxu0 %v2420
    %3762 = vmatpush.bf16.msra.mxu0 %v2388
    %3763 = vmatpush.bf16.msra.mxu0 %v2356
    %3764 = vmatpush.bf16.msra.mxu0 %v2324
    %3765 = vmatpush.bf16.msra.mxu0 %v2292
    %3766 = vmatpush.bf16.msra.mxu0 %v2260
    %3767 = vmatmul.bf16.gmra.mxu0 %v119
    %v3768 = vpop.f32.mrf.mxu0
    %v3769 = vadd.f32 %v660, %v3768
    %v3770 = vpop.f32.mrf.mxu0
    %3771 = vdwg.mxu0
    %3772 = vmatpush.bf16.msra.mxu0 %v2740
    %3773 = vmatpush.bf16.msra.mxu0 %v2708
    %3774 = vmatpush.bf16.msra.mxu0 %v2676
    %3775 = vmatpush.bf16.msra.mxu0 %v2644
    %3776 = vmatpush.bf16.msra.mxu0 %v2612
    %3777 = vmatpush.bf16.msra.mxu0 %v2580
    %3778 = vmatpush.bf16.msra.mxu0 %v2548
    %3779 = vmatpush.bf16.msra.mxu0 %v2516
    %3780 = vmatmul.bf16.gmra.mxu0 %v120
    %v3781 = vpop.f32.mrf.mxu0
    %v3782 = vadd.f32 %v3769, %v3781
    %v3783 = vpop.f32.mrf.mxu0
    %3784 = vdwg.mxu0
    %3785 = vmatpush.bf16.msra.mxu0 %v2485
    %3786 = vmatpush.bf16.msra.mxu0 %v2453
    %3787 = vmatpush.bf16.msra.mxu0 %v2421
    %3788 = vmatpush.bf16.msra.mxu0 %v2389
    %3789 = vmatpush.bf16.msra.mxu0 %v2357
    %3790 = vmatpush.bf16.msra.mxu0 %v2325
    %3791 = vmatpush.bf16.msra.mxu0 %v2293
    %3792 = vmatpush.bf16.msra.mxu0 %v2261
    %3793 = vmatmul.bf16.gmra.mxu0 %v119
    %v3794 = vpop.f32.mrf.mxu0
    %v3795 = vadd.f32 %v661, %v3794
    %v3796 = vpop.f32.mrf.mxu0
    %3797 = vdwg.mxu0
    %3798 = vmatpush.bf16.msra.mxu0 %v2741
    %3799 = vmatpush.bf16.msra.mxu0 %v2709
    %3800 = vmatpush.bf16.msra.mxu0 %v2677
    %3801 = vmatpush.bf16.msra.mxu0 %v2645
    %3802 = vmatpush.bf16.msra.mxu0 %v2613
    %3803 = vmatpush.bf16.msra.mxu0 %v2581
    %3804 = vmatpush.bf16.msra.mxu0 %v2549
    %3805 = vmatpush.bf16.msra.mxu0 %v2517
    %3806 = vmatmul.bf16.gmra.mxu0 %v120
    %v3807 = vpop.f32.mrf.mxu0
    %v3808 = vadd.f32 %v3795, %v3807
    %v3809 = vpop.f32.mrf.mxu0
    %3810 = vdwg.mxu0
    %3811 = vmatpush.bf16.msra.mxu0 %v2486
    %3812 = vmatpush.bf16.msra.mxu0 %v2454
    %3813 = vmatpush.bf16.msra.mxu0 %v2422
    %3814 = vmatpush.bf16.msra.mxu0 %v2390
    %3815 = vmatpush.bf16.msra.mxu0 %v2358
    %3816 = vmatpush.bf16.msra.mxu0 %v2326
    %3817 = vmatpush.bf16.msra.mxu0 %v2294
    %3818 = vmatpush.bf16.msra.mxu0 %v2262
    %3819 = vmatmul.bf16.gmra.mxu0 %v119
    %v3820 = vpop.f32.mrf.mxu0
    %v3821 = vadd.f32 %v662, %v3820
    %v3822 = vpop.f32.mrf.mxu0
    %3823 = vdwg.mxu0
    %3824 = vmatpush.bf16.msra.mxu0 %v2742
    %3825 = vmatpush.bf16.msra.mxu0 %v2710
    %3826 = vmatpush.bf16.msra.mxu0 %v2678
    %3827 = vmatpush.bf16.msra.mxu0 %v2646
    %3828 = vmatpush.bf16.msra.mxu0 %v2614
    %3829 = vmatpush.bf16.msra.mxu0 %v2582
    %3830 = vmatpush.bf16.msra.mxu0 %v2550
    %3831 = vmatpush.bf16.msra.mxu0 %v2518
    %3832 = vmatmul.bf16.gmra.mxu0 %v120
    %v3833 = vpop.f32.mrf.mxu0
    %v3834 = vadd.f32 %v3821, %v3833
    %v3835 = vpop.f32.mrf.mxu0
    %3836 = vdwg.mxu0
    %3837 = vmatpush.bf16.msra.mxu0 %v2487
    %3838 = vmatpush.bf16.msra.mxu0 %v2455
    %3839 = vmatpush.bf16.msra.mxu0 %v2423
    %3840 = vmatpush.bf16.msra.mxu0 %v2391
    %3841 = vmatpush.bf16.msra.mxu0 %v2359
    %3842 = vmatpush.bf16.msra.mxu0 %v2327
    %3843 = vmatpush.bf16.msra.mxu0 %v2295
    %3844 = vmatpush.bf16.msra.mxu0 %v2263
    %3845 = vmatmul.bf16.gmra.mxu0 %v119
    %v3846 = vpop.f32.mrf.mxu0
    %v3847 = vadd.f32 %v663, %v3846
    %v3848 = vpop.f32.mrf.mxu0
    %3849 = vdwg.mxu0
    %3850 = vmatpush.bf16.msra.mxu0 %v2743
    %3851 = vmatpush.bf16.msra.mxu0 %v2711
    %3852 = vmatpush.bf16.msra.mxu0 %v2679
    %3853 = vmatpush.bf16.msra.mxu0 %v2647
    %3854 = vmatpush.bf16.msra.mxu0 %v2615
    %3855 = vmatpush.bf16.msra.mxu0 %v2583
    %3856 = vmatpush.bf16.msra.mxu0 %v2551
    %3857 = vmatpush.bf16.msra.mxu0 %v2519
    %3858 = vmatmul.bf16.gmra.mxu0 %v120
    %v3859 = vpop.f32.mrf.mxu0
    %v3860 = vadd.f32 %v3847, %v3859
    %v3861 = vpop.f32.mrf.mxu0
    %3862 = vdwg.mxu0
    %3863 = vmatpush.bf16.msra.mxu0 %v2488
    %3864 = vmatpush.bf16.msra.mxu0 %v2456
    %3865 = vmatpush.bf16.msra.mxu0 %v2424
    %3866 = vmatpush.bf16.msra.mxu0 %v2392
    %3867 = vmatpush.bf16.msra.mxu0 %v2360
    %3868 = vmatpush.bf16.msra.mxu0 %v2328
    %3869 = vmatpush.bf16.msra.mxu0 %v2296
    %3870 = vmatpush.bf16.msra.mxu0 %v2264
    %3871 = vmatmul.bf16.gmra.mxu0 %v119
    %v3872 = vpop.f32.mrf.mxu0
    %v3873 = vadd.f32 %v664, %v3872
    %v3874 = vpop.f32.mrf.mxu0
    %3875 = vdwg.mxu0
    %3876 = vmatpush.bf16.msra.mxu0 %v2744
    %3877 = vmatpush.bf16.msra.mxu0 %v2712
    %3878 = vmatpush.bf16.msra.mxu0 %v2680
    %3879 = vmatpush.bf16.msra.mxu0 %v2648
    %3880 = vmatpush.bf16.msra.mxu0 %v2616
    %3881 = vmatpush.bf16.msra.mxu0 %v2584
    %3882 = vmatpush.bf16.msra.mxu0 %v2552
    %3883 = vmatpush.bf16.msra.mxu0 %v2520
    %3884 = vmatmul.bf16.gmra.mxu0 %v120
    %v3885 = vpop.f32.mrf.mxu0
    %v3886 = vadd.f32 %v3873, %v3885
    %v3887 = vpop.f32.mrf.mxu0
    %3888 = vdwg.mxu0
    %3889 = vmatpush.bf16.msra.mxu0 %v2489
    %3890 = vmatpush.bf16.msra.mxu0 %v2457
    %3891 = vmatpush.bf16.msra.mxu0 %v2425
    %3892 = vmatpush.bf16.msra.mxu0 %v2393
    %3893 = vmatpush.bf16.msra.mxu0 %v2361
    %3894 = vmatpush.bf16.msra.mxu0 %v2329
    %3895 = vmatpush.bf16.msra.mxu0 %v2297
    %3896 = vmatpush.bf16.msra.mxu0 %v2265
    %3897 = vmatmul.bf16.gmra.mxu0 %v119
    %v3898 = vpop.f32.mrf.mxu0
    %v3899 = vadd.f32 %v665, %v3898
    %v3900 = vpop.f32.mrf.mxu0
    %3901 = vdwg.mxu0
    %3902 = vmatpush.bf16.msra.mxu0 %v2745
    %3903 = vmatpush.bf16.msra.mxu0 %v2713
    %3904 = vmatpush.bf16.msra.mxu0 %v2681
    %3905 = vmatpush.bf16.msra.mxu0 %v2649
    %3906 = vmatpush.bf16.msra.mxu0 %v2617
    %3907 = vmatpush.bf16.msra.mxu0 %v2585
    %3908 = vmatpush.bf16.msra.mxu0 %v2553
    %3909 = vmatpush.bf16.msra.mxu0 %v2521
    %3910 = vmatmul.bf16.gmra.mxu0 %v120
    %v3911 = vpop.f32.mrf.mxu0
    %v3912 = vadd.f32 %v3899, %v3911
    %v3913 = vpop.f32.mrf.mxu0
    %3914 = vdwg.mxu0
    %3915 = vmatpush.bf16.msra.mxu0 %v2490
    %3916 = vmatpush.bf16.msra.mxu0 %v2458
    %3917 = vmatpush.bf16.msra.mxu0 %v2426
    %3918 = vmatpush.bf16.msra.mxu0 %v2394
    %3919 = vmatpush.bf16.msra.mxu0 %v2362
    %3920 = vmatpush.bf16.msra.mxu0 %v2330
    %3921 = vmatpush.bf16.msra.mxu0 %v2298
    %3922 = vmatpush.bf16.msra.mxu0 %v2266
    %3923 = vmatmul.bf16.gmra.mxu0 %v119
    %v3924 = vpop.f32.mrf.mxu0
    %v3925 = vadd.f32 %v666, %v3924
    %v3926 = vpop.f32.mrf.mxu0
    %3927 = vdwg.mxu0
    %3928 = vmatpush.bf16.msra.mxu0 %v2746
    %3929 = vmatpush.bf16.msra.mxu0 %v2714
    %3930 = vmatpush.bf16.msra.mxu0 %v2682
    %3931 = vmatpush.bf16.msra.mxu0 %v2650
    %3932 = vmatpush.bf16.msra.mxu0 %v2618
    %3933 = vmatpush.bf16.msra.mxu0 %v2586
    %3934 = vmatpush.bf16.msra.mxu0 %v2554
    %3935 = vmatpush.bf16.msra.mxu0 %v2522
    %3936 = vmatmul.bf16.gmra.mxu0 %v120
    %v3937 = vpop.f32.mrf.mxu0
    %v3938 = vadd.f32 %v3925, %v3937
    %v3939 = vpop.f32.mrf.mxu0
    %3940 = vdwg.mxu0
    %3941 = vmatpush.bf16.msra.mxu0 %v2491
    %3942 = vmatpush.bf16.msra.mxu0 %v2459
    %3943 = vmatpush.bf16.msra.mxu0 %v2427
    %3944 = vmatpush.bf16.msra.mxu0 %v2395
    %3945 = vmatpush.bf16.msra.mxu0 %v2363
    %3946 = vmatpush.bf16.msra.mxu0 %v2331
    %3947 = vmatpush.bf16.msra.mxu0 %v2299
    %3948 = vmatpush.bf16.msra.mxu0 %v2267
    %3949 = vmatmul.bf16.gmra.mxu0 %v119
    %v3950 = vpop.f32.mrf.mxu0
    %v3951 = vadd.f32 %v667, %v3950
    %v3952 = vpop.f32.mrf.mxu0
    %3953 = vdwg.mxu0
    %3954 = vmatpush.bf16.msra.mxu0 %v2747
    %3955 = vmatpush.bf16.msra.mxu0 %v2715
    %3956 = vmatpush.bf16.msra.mxu0 %v2683
    %3957 = vmatpush.bf16.msra.mxu0 %v2651
    %3958 = vmatpush.bf16.msra.mxu0 %v2619
    %3959 = vmatpush.bf16.msra.mxu0 %v2587
    %3960 = vmatpush.bf16.msra.mxu0 %v2555
    %3961 = vmatpush.bf16.msra.mxu0 %v2523
    %3962 = vmatmul.bf16.gmra.mxu0 %v120
    %v3963 = vpop.f32.mrf.mxu0
    %v3964 = vadd.f32 %v3951, %v3963
    %v3965 = vpop.f32.mrf.mxu0
    %3966 = vdwg.mxu0
    %3967 = vmatpush.bf16.msra.mxu0 %v2492
    %3968 = vmatpush.bf16.msra.mxu0 %v2460
    %3969 = vmatpush.bf16.msra.mxu0 %v2428
    %3970 = vmatpush.bf16.msra.mxu0 %v2396
    %3971 = vmatpush.bf16.msra.mxu0 %v2364
    %3972 = vmatpush.bf16.msra.mxu0 %v2332
    %3973 = vmatpush.bf16.msra.mxu0 %v2300
    %3974 = vmatpush.bf16.msra.mxu0 %v2268
    %3975 = vmatmul.bf16.gmra.mxu0 %v119
    %v3976 = vpop.f32.mrf.mxu0
    %v3977 = vadd.f32 %v668, %v3976
    %v3978 = vpop.f32.mrf.mxu0
    %3979 = vdwg.mxu0
    %3980 = vmatpush.bf16.msra.mxu0 %v2748
    %3981 = vmatpush.bf16.msra.mxu0 %v2716
    %3982 = vmatpush.bf16.msra.mxu0 %v2684
    %3983 = vmatpush.bf16.msra.mxu0 %v2652
    %3984 = vmatpush.bf16.msra.mxu0 %v2620
    %3985 = vmatpush.bf16.msra.mxu0 %v2588
    %3986 = vmatpush.bf16.msra.mxu0 %v2556
    %3987 = vmatpush.bf16.msra.mxu0 %v2524
    %3988 = vmatmul.bf16.gmra.mxu0 %v120
    %v3989 = vpop.f32.mrf.mxu0
    %v3990 = vadd.f32 %v3977, %v3989
    %v3991 = vpop.f32.mrf.mxu0
    %3992 = vdwg.mxu0
    %3993 = vmatpush.bf16.msra.mxu0 %v2493
    %3994 = vmatpush.bf16.msra.mxu0 %v2461
    %3995 = vmatpush.bf16.msra.mxu0 %v2429
    %3996 = vmatpush.bf16.msra.mxu0 %v2397
    %3997 = vmatpush.bf16.msra.mxu0 %v2365
    %3998 = vmatpush.bf16.msra.mxu0 %v2333
    %3999 = vmatpush.bf16.msra.mxu0 %v2301
    %4000 = vmatpush.bf16.msra.mxu0 %v2269
    %4001 = vmatmul.bf16.gmra.mxu0 %v119
    %v4002 = vpop.f32.mrf.mxu0
    %v4003 = vadd.f32 %v669, %v4002
    %v4004 = vpop.f32.mrf.mxu0
    %4005 = vdwg.mxu0
    %4006 = vmatpush.bf16.msra.mxu0 %v2749
    %4007 = vmatpush.bf16.msra.mxu0 %v2717
    %4008 = vmatpush.bf16.msra.mxu0 %v2685
    %4009 = vmatpush.bf16.msra.mxu0 %v2653
    %4010 = vmatpush.bf16.msra.mxu0 %v2621
    %4011 = vmatpush.bf16.msra.mxu0 %v2589
    %4012 = vmatpush.bf16.msra.mxu0 %v2557
    %4013 = vmatpush.bf16.msra.mxu0 %v2525
    %4014 = vmatmul.bf16.gmra.mxu0 %v120
    %v4015 = vpop.f32.mrf.mxu0
    %v4016 = vadd.f32 %v4003, %v4015
    %v4017 = vpop.f32.mrf.mxu0
    %4018 = vdwg.mxu0
    %4019 = vmatpush.bf16.msra.mxu0 %v2494
    %4020 = vmatpush.bf16.msra.mxu0 %v2462
    %4021 = vmatpush.bf16.msra.mxu0 %v2430
    %4022 = vmatpush.bf16.msra.mxu0 %v2398
    %4023 = vmatpush.bf16.msra.mxu0 %v2366
    %4024 = vmatpush.bf16.msra.mxu0 %v2334
    %4025 = vmatpush.bf16.msra.mxu0 %v2302
    %4026 = vmatpush.bf16.msra.mxu0 %v2270
    %4027 = vmatmul.bf16.gmra.mxu0 %v119
    %v4028 = vpop.f32.mrf.mxu0
    %v4029 = vadd.f32 %v670, %v4028
    %v4030 = vpop.f32.mrf.mxu0
    %4031 = vdwg.mxu0
    %4032 = vmatpush.bf16.msra.mxu0 %v2750
    %4033 = vmatpush.bf16.msra.mxu0 %v2718
    %4034 = vmatpush.bf16.msra.mxu0 %v2686
    %4035 = vmatpush.bf16.msra.mxu0 %v2654
    %4036 = vmatpush.bf16.msra.mxu0 %v2622
    %4037 = vmatpush.bf16.msra.mxu0 %v2590
    %4038 = vmatpush.bf16.msra.mxu0 %v2558
    %4039 = vmatpush.bf16.msra.mxu0 %v2526
    %4040 = vmatmul.bf16.gmra.mxu0 %v120
    %v4041 = vpop.f32.mrf.mxu0
    %v4042 = vadd.f32 %v4029, %v4041
    %v4043 = vpop.f32.mrf.mxu0
    %4044 = vdwg.mxu0
    %4045 = vmatpush.bf16.msra.mxu0 %v2495
    %4046 = vmatpush.bf16.msra.mxu0 %v2463
    %4047 = vmatpush.bf16.msra.mxu0 %v2431
    %4048 = vmatpush.bf16.msra.mxu0 %v2399
    %4049 = vmatpush.bf16.msra.mxu0 %v2367
    %4050 = vmatpush.bf16.msra.mxu0 %v2335
    %4051 = vmatpush.bf16.msra.mxu0 %v2303
    %4052 = vmatpush.bf16.msra.mxu0 %v2271
    %4053 = vmatmul.bf16.gmra.mxu0 %v119
    %v4054 = vpop.f32.mrf.mxu0
    %v4055 = vadd.f32 %v671, %v4054
    %v4056 = vpop.f32.mrf.mxu0
    %4057 = vdwg.mxu0
    %4058 = vmatpush.bf16.msra.mxu0 %v2751
    %4059 = vmatpush.bf16.msra.mxu0 %v2719
    %4060 = vmatpush.bf16.msra.mxu0 %v2687
    %4061 = vmatpush.bf16.msra.mxu0 %v2655
    %4062 = vmatpush.bf16.msra.mxu0 %v2623
    %4063 = vmatpush.bf16.msra.mxu0 %v2591
    %4064 = vmatpush.bf16.msra.mxu0 %v2559
    %4065 = vmatpush.bf16.msra.mxu0 %v2527
    %4066 = vmatmul.bf16.gmra.mxu0 %v120
    %v4067 = vpop.f32.mrf.mxu0
    %v4068 = vadd.f32 %v4055, %v4067
    %v4069 = vpop.f32.mrf.mxu0
    %4070 = vdwg.mxu0
    %4071 = vmatpush.bf16.msra.mxu0 %v2496
    %4072 = vmatpush.bf16.msra.mxu0 %v2464
    %4073 = vmatpush.bf16.msra.mxu0 %v2432
    %4074 = vmatpush.bf16.msra.mxu0 %v2400
    %4075 = vmatpush.bf16.msra.mxu0 %v2368
    %4076 = vmatpush.bf16.msra.mxu0 %v2336
    %4077 = vmatpush.bf16.msra.mxu0 %v2304
    %4078 = vmatpush.bf16.msra.mxu0 %v2272
    %4079 = vmatmul.bf16.gmra.mxu0 %v119
    %v4080 = vpop.f32.mrf.mxu0
    %v4081 = vadd.f32 %v672, %v4080
    %v4082 = vpop.f32.mrf.mxu0
    %4083 = vdwg.mxu0
    %4084 = vmatpush.bf16.msra.mxu0 %v2752
    %4085 = vmatpush.bf16.msra.mxu0 %v2720
    %4086 = vmatpush.bf16.msra.mxu0 %v2688
    %4087 = vmatpush.bf16.msra.mxu0 %v2656
    %4088 = vmatpush.bf16.msra.mxu0 %v2624
    %4089 = vmatpush.bf16.msra.mxu0 %v2592
    %4090 = vmatpush.bf16.msra.mxu0 %v2560
    %4091 = vmatpush.bf16.msra.mxu0 %v2528
    %4092 = vmatmul.bf16.gmra.mxu0 %v120
    %v4093 = vpop.f32.mrf.mxu0
    %v4094 = vadd.f32 %v4081, %v4093
    %v4095 = vpop.f32.mrf.mxu0
    %4096 = vdwg.mxu0
    %v4097 = vmax.f32 %v3288, 0.0
    %v4098 = vmax.f32 %v3314, 0.0
    %v4099 = vmax.f32 %v3340, 0.0
    %v4100 = vmax.f32 %v3366, 0.0
    %v4101 = vmax.f32 %v3392, 0.0
    %v4102 = vmax.f32 %v3418, 0.0
    %v4103 = vmax.f32 %v3444, 0.0
    %v4104 = vmax.f32 %v3470, 0.0
    %v4105 = vmax.f32 %v3496, 0.0
    %v4106 = vmax.f32 %v3522, 0.0
    %v4107 = vmax.f32 %v3548, 0.0
    %v4108 = vmax.f32 %v3574, 0.0
    %v4109 = vmax.f32 %v3600, 0.0
    %v4110 = vmax.f32 %v3626, 0.0
    %v4111 = vmax.f32 %v3652, 0.0
    %v4112 = vmax.f32 %v3678, 0.0
    %v4113 = vmax.f32 %v3704, 0.0
    %v4114 = vmax.f32 %v3730, 0.0
    %v4115 = vmax.f32 %v3756, 0.0
    %v4116 = vmax.f32 %v3782, 0.0
    %v4117 = vmax.f32 %v3808, 0.0
    %v4118 = vmax.f32 %v3834, 0.0
    %v4119 = vmax.f32 %v3860, 0.0
    %v4120 = vmax.f32 %v3886, 0.0
    %v4121 = vmax.f32 %v3912, 0.0
    %v4122 = vmax.f32 %v3938, 0.0
    %v4123 = vmax.f32 %v3964, 0.0
    %v4124 = vmax.f32 %v3990, 0.0
    %v4125 = vmax.f32 %v4016, 0.0
    %v4126 = vmax.f32 %v4042, 0.0
    %v4127 = vmax.f32 %v4068, 0.0
    %v4128 = vmax.f32 %v4094, 0.0
    %v4129 = vpack.c.bf16 %v4097, %v4097
    %v4130 = vpack.c.bf16 %v4098, %v4098
    %v4131 = vpack.c.bf16 %v4099, %v4099
    %v4132 = vpack.c.bf16 %v4100, %v4100
    %v4133 = vpack.c.bf16 %v4101, %v4101
    %v4134 = vpack.c.bf16 %v4102, %v4102
    %v4135 = vpack.c.bf16 %v4103, %v4103
    %v4136 = vpack.c.bf16 %v4104, %v4104
    %v4137 = vpack.c.bf16 %v4105, %v4105
    %v4138 = vpack.c.bf16 %v4106, %v4106
    %v4139 = vpack.c.bf16 %v4107, %v4107
    %v4140 = vpack.c.bf16 %v4108, %v4108
    %v4141 = vpack.c.bf16 %v4109, %v4109
    %v4142 = vpack.c.bf16 %v4110, %v4110
    %v4143 = vpack.c.bf16 %v4111, %v4111
    %v4144 = vpack.c.bf16 %v4112, %v4112
    %v4145 = vpack.c.bf16 %v4113, %v4113
    %v4146 = vpack.c.bf16 %v4114, %v4114
    %v4147 = vpack.c.bf16 %v4115, %v4115
    %v4148 = vpack.c.bf16 %v4116, %v4116
    %v4149 = vpack.c.bf16 %v4117, %v4117
    %v4150 = vpack.c.bf16 %v4118, %v4118
    %v4151 = vpack.c.bf16 %v4119, %v4119
    %v4152 = vpack.c.bf16 %v4120, %v4120
    %v4153 = vpack.c.bf16 %v4121, %v4121
    %v4154 = vpack.c.bf16 %v4122, %v4122
    %v4155 = vpack.c.bf16 %v4123, %v4123
    %v4156 = vpack.c.bf16 %v4124, %v4124
    %v4157 = vpack.c.bf16 %v4125, %v4125
    %v4158 = vpack.c.bf16 %v4126, %v4126
    %v4159 = vpack.c.bf16 %v4127, %v4127
    %v4160 = vpack.c.bf16 %v4128, %v4128
    %v4161 = vld [vmem:[#allocation9] sm:$0xf]
    %v4162 = vld [vmem:[#allocation9 + $0x4] sm:$0xf]
    %v4163 = vld [vmem:[#allocation9 + $0x8] sm:$0xf]
    %v4164 = vld [vmem:[#allocation9 + $0xc] sm:$0xf]
    %v4165 = vld [vmem:[#allocation9 + $0x10] sm:$0xf]
    %v4166 = vld [vmem:[#allocation9 + $0x14] sm:$0xf]
    %v4167 = vld [vmem:[#allocation9 + $0x18] sm:$0xf]
    %v4168 = vld [vmem:[#allocation9 + $0x1c] sm:$0xf]
    %v4169 = vld [vmem:[#allocation9 + $0x20] sm:$0xf]
    %v4170 = vld [vmem:[#allocation9 + $0x24] sm:$0xf]
    %v4171 = vld [vmem:[#allocation9 + $0x28] sm:$0xf]
    %v4172 = vld [vmem:[#allocation9 + $0x2c] sm:$0xf]
    %v4173 = vld [vmem:[#allocation9 + $0x30] sm:$0xf]
    %v4174 = vld [vmem:[#allocation9 + $0x34] sm:$0xf]
    %v4175 = vld [vmem:[#allocation9 + $0x38] sm:$0xf]
    %v4176 = vld [vmem:[#allocation9 + $0x3c] sm:$0xf]
    %v4177 = vld [vmem:[#allocation9 + $0x40] sm:$0xf]
    %v4178 = vld [vmem:[#allocation9 + $0x44] sm:$0xf]
    %v4179 = vld [vmem:[#allocation9 + $0x48] sm:$0xf]
    %v4180 = vld [vmem:[#allocation9 + $0x4c] sm:$0xf]
    %v4181 = vld [vmem:[#allocation9 + $0x50] sm:$0xf]
    %v4182 = vld [vmem:[#allocation9 + $0x54] sm:$0xf]
    %v4183 = vld [vmem:[#allocation9 + $0x58] sm:$0xf]
    %v4184 = vld [vmem:[#allocation9 + $0x5c] sm:$0xf]
    %v4185 = vld [vmem:[#allocation9 + $0x60] sm:$0xf]
    %v4186 = vld [vmem:[#allocation9 + $0x64] sm:$0xf]
    %v4187 = vld [vmem:[#allocation9 + $0x68] sm:$0xf]
    %v4188 = vld [vmem:[#allocation9 + $0x6c] sm:$0xf]
    %v4189 = vld [vmem:[#allocation9 + $0x70] sm:$0xf]
    %v4190 = vld [vmem:[#allocation9 + $0x74] sm:$0xf]
    %v4191 = vld [vmem:[#allocation9 + $0x78] sm:$0xf]
    %v4192 = vld [vmem:[#allocation9 + $0x7c] sm:$0xf]
    %v4193 = vld [vmem:[#allocation9 + $0x80] sm:$0xf]
    %v4194 = vld [vmem:[#allocation9 + $0x84] sm:$0xf]
    %v4195 = vld [vmem:[#allocation9 + $0x88] sm:$0xf]
    %v4196 = vld [vmem:[#allocation9 + $0x8c] sm:$0xf]
    %v4197 = vld [vmem:[#allocation9 + $0x90] sm:$0xf]
    %v4198 = vld [vmem:[#allocation9 + $0x94] sm:$0xf]
    %v4199 = vld [vmem:[#allocation9 + $0x98] sm:$0xf]
    %v4200 = vld [vmem:[#allocation9 + $0x9c] sm:$0xf]
    %v4201 = vld [vmem:[#allocation9 + $0xa0] sm:$0xf]
    %v4202 = vld [vmem:[#allocation9 + $0xa4] sm:$0xf]
    %v4203 = vld [vmem:[#allocation9 + $0xa8] sm:$0xf]
    %v4204 = vld [vmem:[#allocation9 + $0xac] sm:$0xf]
    %v4205 = vld [vmem:[#allocation9 + $0xb0] sm:$0xf]
    %v4206 = vld [vmem:[#allocation9 + $0xb4] sm:$0xf]
    %v4207 = vld [vmem:[#allocation9 + $0xb8] sm:$0xf]
    %v4208 = vld [vmem:[#allocation9 + $0xbc] sm:$0xf]
    %v4209 = vld [vmem:[#allocation9 + $0xc0] sm:$0xf]
    %v4210 = vld [vmem:[#allocation9 + $0xc4] sm:$0xf]
    %v4211 = vld [vmem:[#allocation9 + $0xc8] sm:$0xf]
    %v4212 = vld [vmem:[#allocation9 + $0xcc] sm:$0xf]
    %v4213 = vld [vmem:[#allocation9 + $0xd0] sm:$0xf]
    %v4214 = vld [vmem:[#allocation9 + $0xd4] sm:$0xf]
    %v4215 = vld [vmem:[#allocation9 + $0xd8] sm:$0xf]
    %v4216 = vld [vmem:[#allocation9 + $0xdc] sm:$0xf]
    %v4217 = vld [vmem:[#allocation9 + $0xe0] sm:$0xf]
    %v4218 = vld [vmem:[#allocation9 + $0xe4] sm:$0xf]
    %v4219 = vld [vmem:[#allocation9 + $0xe8] sm:$0xf]
    %v4220 = vld [vmem:[#allocation9 + $0xec] sm:$0xf]
    %v4221 = vld [vmem:[#allocation9 + $0xf0] sm:$0xf]
    %v4222 = vld [vmem:[#allocation9 + $0xf4] sm:$0xf]
    %v4223 = vld [vmem:[#allocation9 + $0xf8] sm:$0xf]
    %v4224 = vld [vmem:[#allocation9 + $0xfc] sm:$0xf]
    %v4225 = vld [vmem:[#allocation9 + $0x100] sm:$0xf]
    %v4226 = vld [vmem:[#allocation9 + $0x104] sm:$0xf]
    %v4227 = vld [vmem:[#allocation9 + $0x108] sm:$0xf]
    %v4228 = vld [vmem:[#allocation9 + $0x10c] sm:$0xf]
    %v4229 = vld [vmem:[#allocation9 + $0x110] sm:$0xf]
    %v4230 = vld [vmem:[#allocation9 + $0x114] sm:$0xf]
    %v4231 = vld [vmem:[#allocation9 + $0x118] sm:$0xf]
    %v4232 = vld [vmem:[#allocation9 + $0x11c] sm:$0xf]
    %v4233 = vld [vmem:[#allocation9 + $0x120] sm:$0xf]
    %v4234 = vld [vmem:[#allocation9 + $0x124] sm:$0xf]
    %v4235 = vld [vmem:[#allocation9 + $0x128] sm:$0xf]
    %v4236 = vld [vmem:[#allocation9 + $0x12c] sm:$0xf]
    %v4237 = vld [vmem:[#allocation9 + $0x130] sm:$0xf]
    %v4238 = vld [vmem:[#allocation9 + $0x134] sm:$0xf]
    %v4239 = vld [vmem:[#allocation9 + $0x138] sm:$0xf]
    %v4240 = vld [vmem:[#allocation9 + $0x13c] sm:$0xf]
    %v4241 = vld [vmem:[#allocation9 + $0x140] sm:$0xf]
    %v4242 = vld [vmem:[#allocation9 + $0x144] sm:$0xf]
    %v4243 = vld [vmem:[#allocation9 + $0x148] sm:$0xf]
    %v4244 = vld [vmem:[#allocation9 + $0x14c] sm:$0xf]
    %v4245 = vld [vmem:[#allocation9 + $0x150] sm:$0xf]
    %v4246 = vld [vmem:[#allocation9 + $0x154] sm:$0xf]
    %v4247 = vld [vmem:[#allocation9 + $0x158] sm:$0xf]
    %v4248 = vld [vmem:[#allocation9 + $0x15c] sm:$0xf]
    %v4249 = vld [vmem:[#allocation9 + $0x160] sm:$0xf]
    %v4250 = vld [vmem:[#allocation9 + $0x164] sm:$0xf]
    %v4251 = vld [vmem:[#allocation9 + $0x168] sm:$0xf]
    %v4252 = vld [vmem:[#allocation9 + $0x16c] sm:$0xf]
    %v4253 = vld [vmem:[#allocation9 + $0x170] sm:$0xf]
    %v4254 = vld [vmem:[#allocation9 + $0x174] sm:$0xf]
    %v4255 = vld [vmem:[#allocation9 + $0x178] sm:$0xf]
    %v4256 = vld [vmem:[#allocation9 + $0x17c] sm:$0xf]
    %v4257 = vld [vmem:[#allocation9 + $0x180] sm:$0xf]
    %v4258 = vld [vmem:[#allocation9 + $0x184] sm:$0xf]
    %v4259 = vld [vmem:[#allocation9 + $0x188] sm:$0xf]
    %v4260 = vld [vmem:[#allocation9 + $0x18c] sm:$0xf]
    %v4261 = vld [vmem:[#allocation9 + $0x190] sm:$0xf]
    %v4262 = vld [vmem:[#allocation9 + $0x194] sm:$0xf]
    %v4263 = vld [vmem:[#allocation9 + $0x198] sm:$0xf]
    %v4264 = vld [vmem:[#allocation9 + $0x19c] sm:$0xf]
    %v4265 = vld [vmem:[#allocation9 + $0x1a0] sm:$0xf]
    %v4266 = vld [vmem:[#allocation9 + $0x1a4] sm:$0xf]
    %v4267 = vld [vmem:[#allocation9 + $0x1a8] sm:$0xf]
    %v4268 = vld [vmem:[#allocation9 + $0x1ac] sm:$0xf]
    %v4269 = vld [vmem:[#allocation9 + $0x1b0] sm:$0xf]
    %v4270 = vld [vmem:[#allocation9 + $0x1b4] sm:$0xf]
    %v4271 = vld [vmem:[#allocation9 + $0x1b8] sm:$0xf]
    %v4272 = vld [vmem:[#allocation9 + $0x1bc] sm:$0xf]
    %v4273 = vld [vmem:[#allocation9 + $0x1c0] sm:$0xf]
    %v4274 = vld [vmem:[#allocation9 + $0x1c4] sm:$0xf]
    %v4275 = vld [vmem:[#allocation9 + $0x1c8] sm:$0xf]
    %v4276 = vld [vmem:[#allocation9 + $0x1cc] sm:$0xf]
    %v4277 = vld [vmem:[#allocation9 + $0x1d0] sm:$0xf]
    %v4278 = vld [vmem:[#allocation9 + $0x1d4] sm:$0xf]
    %v4279 = vld [vmem:[#allocation9 + $0x1d8] sm:$0xf]
    %v4280 = vld [vmem:[#allocation9 + $0x1dc] sm:$0xf]
    %v4281 = vld [vmem:[#allocation9 + $0x1e0] sm:$0xf]
    %v4282 = vld [vmem:[#allocation9 + $0x1e4] sm:$0xf]
    %v4283 = vld [vmem:[#allocation9 + $0x1e8] sm:$0xf]
    %v4284 = vld [vmem:[#allocation9 + $0x1ec] sm:$0xf]
    %v4285 = vld [vmem:[#allocation9 + $0x1f0] sm:$0xf]
    %v4286 = vld [vmem:[#allocation9 + $0x1f4] sm:$0xf]
    %v4287 = vld [vmem:[#allocation9 + $0x1f8] sm:$0xf]
    %v4288 = vld [vmem:[#allocation9 + $0x1fc] sm:$0xf]
    %v4289 = vld [vmem:[#allocation9 + $0x200] sm:$0xf]
    %v4290 = vld [vmem:[#allocation9 + $0x204] sm:$0xf]
    %v4291 = vld [vmem:[#allocation9 + $0x208] sm:$0xf]
    %v4292 = vld [vmem:[#allocation9 + $0x20c] sm:$0xf]
    %v4293 = vld [vmem:[#allocation9 + $0x210] sm:$0xf]
    %v4294 = vld [vmem:[#allocation9 + $0x214] sm:$0xf]
    %v4295 = vld [vmem:[#allocation9 + $0x218] sm:$0xf]
    %v4296 = vld [vmem:[#allocation9 + $0x21c] sm:$0xf]
    %v4297 = vld [vmem:[#allocation9 + $0x220] sm:$0xf]
    %v4298 = vld [vmem:[#allocation9 + $0x224] sm:$0xf]
    %v4299 = vld [vmem:[#allocation9 + $0x228] sm:$0xf]
    %v4300 = vld [vmem:[#allocation9 + $0x22c] sm:$0xf]
    %v4301 = vld [vmem:[#allocation9 + $0x230] sm:$0xf]
    %v4302 = vld [vmem:[#allocation9 + $0x234] sm:$0xf]
    %v4303 = vld [vmem:[#allocation9 + $0x238] sm:$0xf]
    %v4304 = vld [vmem:[#allocation9 + $0x23c] sm:$0xf]
    %v4305 = vld [vmem:[#allocation9 + $0x240] sm:$0xf]
    %v4306 = vld [vmem:[#allocation9 + $0x244] sm:$0xf]
    %v4307 = vld [vmem:[#allocation9 + $0x248] sm:$0xf]
    %v4308 = vld [vmem:[#allocation9 + $0x24c] sm:$0xf]
    %v4309 = vld [vmem:[#allocation9 + $0x250] sm:$0xf]
    %v4310 = vld [vmem:[#allocation9 + $0x254] sm:$0xf]
    %v4311 = vld [vmem:[#allocation9 + $0x258] sm:$0xf]
    %v4312 = vld [vmem:[#allocation9 + $0x25c] sm:$0xf]
    %v4313 = vld [vmem:[#allocation9 + $0x260] sm:$0xf]
    %v4314 = vld [vmem:[#allocation9 + $0x264] sm:$0xf]
    %v4315 = vld [vmem:[#allocation9 + $0x268] sm:$0xf]
    %v4316 = vld [vmem:[#allocation9 + $0x26c] sm:$0xf]
    %v4317 = vld [vmem:[#allocation9 + $0x270] sm:$0xf]
    %v4318 = vld [vmem:[#allocation9 + $0x274] sm:$0xf]
    %v4319 = vld [vmem:[#allocation9 + $0x278] sm:$0xf]
    %v4320 = vld [vmem:[#allocation9 + $0x27c] sm:$0xf]
    %v4321 = vld [vmem:[#allocation9 + $0x280] sm:$0xf]
    %v4322 = vld [vmem:[#allocation9 + $0x284] sm:$0xf]
    %v4323 = vld [vmem:[#allocation9 + $0x288] sm:$0xf]
    %v4324 = vld [vmem:[#allocation9 + $0x28c] sm:$0xf]
    %v4325 = vld [vmem:[#allocation9 + $0x290] sm:$0xf]
    %v4326 = vld [vmem:[#allocation9 + $0x294] sm:$0xf]
    %v4327 = vld [vmem:[#allocation9 + $0x298] sm:$0xf]
    %v4328 = vld [vmem:[#allocation9 + $0x29c] sm:$0xf]
    %v4329 = vld [vmem:[#allocation9 + $0x2a0] sm:$0xf]
    %v4330 = vld [vmem:[#allocation9 + $0x2a4] sm:$0xf]
    %v4331 = vld [vmem:[#allocation9 + $0x2a8] sm:$0xf]
    %v4332 = vld [vmem:[#allocation9 + $0x2ac] sm:$0xf]
    %v4333 = vld [vmem:[#allocation9 + $0x2b0] sm:$0xf]
    %v4334 = vld [vmem:[#allocation9 + $0x2b4] sm:$0xf]
    %v4335 = vld [vmem:[#allocation9 + $0x2b8] sm:$0xf]
    %v4336 = vld [vmem:[#allocation9 + $0x2bc] sm:$0xf]
    %v4337 = vld [vmem:[#allocation9 + $0x2c0] sm:$0xf]
    %v4338 = vld [vmem:[#allocation9 + $0x2c4] sm:$0xf]
    %v4339 = vld [vmem:[#allocation9 + $0x2c8] sm:$0xf]
    %v4340 = vld [vmem:[#allocation9 + $0x2cc] sm:$0xf]
    %v4341 = vld [vmem:[#allocation9 + $0x2d0] sm:$0xf]
    %v4342 = vld [vmem:[#allocation9 + $0x2d4] sm:$0xf]
    %v4343 = vld [vmem:[#allocation9 + $0x2d8] sm:$0xf]
    %v4344 = vld [vmem:[#allocation9 + $0x2dc] sm:$0xf]
    %v4345 = vld [vmem:[#allocation9 + $0x2e0] sm:$0xf]
    %v4346 = vld [vmem:[#allocation9 + $0x2e4] sm:$0xf]
    %v4347 = vld [vmem:[#allocation9 + $0x2e8] sm:$0xf]
    %v4348 = vld [vmem:[#allocation9 + $0x2ec] sm:$0xf]
    %v4349 = vld [vmem:[#allocation9 + $0x2f0] sm:$0xf]
    %v4350 = vld [vmem:[#allocation9 + $0x2f4] sm:$0xf]
    %v4351 = vld [vmem:[#allocation9 + $0x2f8] sm:$0xf]
    %v4352 = vld [vmem:[#allocation9 + $0x2fc] sm:$0xf]
    %v4353 = vld [vmem:[#allocation9 + $0x300] sm:$0xf]
    %v4354 = vld [vmem:[#allocation9 + $0x304] sm:$0xf]
    %v4355 = vld [vmem:[#allocation9 + $0x308] sm:$0xf]
    %v4356 = vld [vmem:[#allocation9 + $0x30c] sm:$0xf]
    %v4357 = vld [vmem:[#allocation9 + $0x310] sm:$0xf]
    %v4358 = vld [vmem:[#allocation9 + $0x314] sm:$0xf]
    %v4359 = vld [vmem:[#allocation9 + $0x318] sm:$0xf]
    %v4360 = vld [vmem:[#allocation9 + $0x31c] sm:$0xf]
    %v4361 = vld [vmem:[#allocation9 + $0x320] sm:$0xf]
    %v4362 = vld [vmem:[#allocation9 + $0x324] sm:$0xf]
    %v4363 = vld [vmem:[#allocation9 + $0x328] sm:$0xf]
    %v4364 = vld [vmem:[#allocation9 + $0x32c] sm:$0xf]
    %v4365 = vld [vmem:[#allocation9 + $0x330] sm:$0xf]
    %v4366 = vld [vmem:[#allocation9 + $0x334] sm:$0xf]
    %v4367 = vld [vmem:[#allocation9 + $0x338] sm:$0xf]
    %v4368 = vld [vmem:[#allocation9 + $0x33c] sm:$0xf]
    %v4369 = vld [vmem:[#allocation9 + $0x340] sm:$0xf]
    %v4370 = vld [vmem:[#allocation9 + $0x344] sm:$0xf]
    %v4371 = vld [vmem:[#allocation9 + $0x348] sm:$0xf]
    %v4372 = vld [vmem:[#allocation9 + $0x34c] sm:$0xf]
    %v4373 = vld [vmem:[#allocation9 + $0x350] sm:$0xf]
    %v4374 = vld [vmem:[#allocation9 + $0x354] sm:$0xf]
    %v4375 = vld [vmem:[#allocation9 + $0x358] sm:$0xf]
    %v4376 = vld [vmem:[#allocation9 + $0x35c] sm:$0xf]
    %v4377 = vld [vmem:[#allocation9 + $0x360] sm:$0xf]
    %v4378 = vld [vmem:[#allocation9 + $0x364] sm:$0xf]
    %v4379 = vld [vmem:[#allocation9 + $0x368] sm:$0xf]
    %v4380 = vld [vmem:[#allocation9 + $0x36c] sm:$0xf]
    %v4381 = vld [vmem:[#allocation9 + $0x370] sm:$0xf]
    %v4382 = vld [vmem:[#allocation9 + $0x374] sm:$0xf]
    %v4383 = vld [vmem:[#allocation9 + $0x378] sm:$0xf]
    %v4384 = vld [vmem:[#allocation9 + $0x37c] sm:$0xf]
    %v4385 = vld [vmem:[#allocation9 + $0x380] sm:$0xf]
    %v4386 = vld [vmem:[#allocation9 + $0x384] sm:$0xf]
    %v4387 = vld [vmem:[#allocation9 + $0x388] sm:$0xf]
    %v4388 = vld [vmem:[#allocation9 + $0x38c] sm:$0xf]
    %v4389 = vld [vmem:[#allocation9 + $0x390] sm:$0xf]
    %v4390 = vld [vmem:[#allocation9 + $0x394] sm:$0xf]
    %v4391 = vld [vmem:[#allocation9 + $0x398] sm:$0xf]
    %v4392 = vld [vmem:[#allocation9 + $0x39c] sm:$0xf]
    %v4393 = vld [vmem:[#allocation9 + $0x3a0] sm:$0xf]
    %v4394 = vld [vmem:[#allocation9 + $0x3a4] sm:$0xf]
    %v4395 = vld [vmem:[#allocation9 + $0x3a8] sm:$0xf]
    %v4396 = vld [vmem:[#allocation9 + $0x3ac] sm:$0xf]
    %v4397 = vld [vmem:[#allocation9 + $0x3b0] sm:$0xf]
    %v4398 = vld [vmem:[#allocation9 + $0x3b4] sm:$0xf]
    %v4399 = vld [vmem:[#allocation9 + $0x3b8] sm:$0xf]
    %v4400 = vld [vmem:[#allocation9 + $0x3bc] sm:$0xf]
    %v4401 = vld [vmem:[#allocation9 + $0x3c0] sm:$0xf]
    %v4402 = vld [vmem:[#allocation9 + $0x3c4] sm:$0xf]
    %v4403 = vld [vmem:[#allocation9 + $0x3c8] sm:$0xf]
    %v4404 = vld [vmem:[#allocation9 + $0x3cc] sm:$0xf]
    %v4405 = vld [vmem:[#allocation9 + $0x3d0] sm:$0xf]
    %v4406 = vld [vmem:[#allocation9 + $0x3d4] sm:$0xf]
    %v4407 = vld [vmem:[#allocation9 + $0x3d8] sm:$0xf]
    %v4408 = vld [vmem:[#allocation9 + $0x3dc] sm:$0xf]
    %v4409 = vld [vmem:[#allocation9 + $0x3e0] sm:$0xf]
    %v4410 = vld [vmem:[#allocation9 + $0x3e4] sm:$0xf]
    %v4411 = vld [vmem:[#allocation9 + $0x3e8] sm:$0xf]
    %v4412 = vld [vmem:[#allocation9 + $0x3ec] sm:$0xf]
    %v4413 = vld [vmem:[#allocation9 + $0x3f0] sm:$0xf]
    %v4414 = vld [vmem:[#allocation9 + $0x3f4] sm:$0xf]
    %v4415 = vld [vmem:[#allocation9 + $0x3f8] sm:$0xf]
    %v4416 = vld [vmem:[#allocation9 + $0x3fc] sm:$0xf]
    %v4417 = vld [vmem:[#allocation9 + $0x400] sm:$0xf]
    %v4418 = vld [vmem:[#allocation9 + $0x404] sm:$0xf]
    %v4419 = vld [vmem:[#allocation9 + $0x408] sm:$0xf]
    %v4420 = vld [vmem:[#allocation9 + $0x40c] sm:$0xf]
    %v4421 = vld [vmem:[#allocation9 + $0x410] sm:$0xf]
    %v4422 = vld [vmem:[#allocation9 + $0x414] sm:$0xf]
    %v4423 = vld [vmem:[#allocation9 + $0x418] sm:$0xf]
    %v4424 = vld [vmem:[#allocation9 + $0x41c] sm:$0xf]
    %v4425 = vld [vmem:[#allocation9 + $0x420] sm:$0xf]
    %v4426 = vld [vmem:[#allocation9 + $0x424] sm:$0xf]
    %v4427 = vld [vmem:[#allocation9 + $0x428] sm:$0xf]
    %v4428 = vld [vmem:[#allocation9 + $0x42c] sm:$0xf]
    %v4429 = vld [vmem:[#allocation9 + $0x430] sm:$0xf]
    %v4430 = vld [vmem:[#allocation9 + $0x434] sm:$0xf]
    %v4431 = vld [vmem:[#allocation9 + $0x438] sm:$0xf]
    %v4432 = vld [vmem:[#allocation9 + $0x43c] sm:$0xf]
    %v4433 = vld [vmem:[#allocation9 + $0x440] sm:$0xf]
    %v4434 = vld [vmem:[#allocation9 + $0x444] sm:$0xf]
    %v4435 = vld [vmem:[#allocation9 + $0x448] sm:$0xf]
    %v4436 = vld [vmem:[#allocation9 + $0x44c] sm:$0xf]
    %v4437 = vld [vmem:[#allocation9 + $0x450] sm:$0xf]
    %v4438 = vld [vmem:[#allocation9 + $0x454] sm:$0xf]
    %v4439 = vld [vmem:[#allocation9 + $0x458] sm:$0xf]
    %v4440 = vld [vmem:[#allocation9 + $0x45c] sm:$0xf]
    %v4441 = vld [vmem:[#allocation9 + $0x460] sm:$0xf]
    %v4442 = vld [vmem:[#allocation9 + $0x464] sm:$0xf]
    %v4443 = vld [vmem:[#allocation9 + $0x468] sm:$0xf]
    %v4444 = vld [vmem:[#allocation9 + $0x46c] sm:$0xf]
    %v4445 = vld [vmem:[#allocation9 + $0x470] sm:$0xf]
    %v4446 = vld [vmem:[#allocation9 + $0x474] sm:$0xf]
    %v4447 = vld [vmem:[#allocation9 + $0x478] sm:$0xf]
    %v4448 = vld [vmem:[#allocation9 + $0x47c] sm:$0xf]
    %v4449 = vld [vmem:[#allocation9 + $0x480] sm:$0xf]
    %v4450 = vld [vmem:[#allocation9 + $0x484] sm:$0xf]
    %v4451 = vld [vmem:[#allocation9 + $0x488] sm:$0xf]
    %v4452 = vld [vmem:[#allocation9 + $0x48c] sm:$0xf]
    %v4453 = vld [vmem:[#allocation9 + $0x490] sm:$0xf]
    %v4454 = vld [vmem:[#allocation9 + $0x494] sm:$0xf]
    %v4455 = vld [vmem:[#allocation9 + $0x498] sm:$0xf]
    %v4456 = vld [vmem:[#allocation9 + $0x49c] sm:$0xf]
    %v4457 = vld [vmem:[#allocation9 + $0x4a0] sm:$0xf]
    %v4458 = vld [vmem:[#allocation9 + $0x4a4] sm:$0xf]
    %v4459 = vld [vmem:[#allocation9 + $0x4a8] sm:$0xf]
    %v4460 = vld [vmem:[#allocation9 + $0x4ac] sm:$0xf]
    %v4461 = vld [vmem:[#allocation9 + $0x4b0] sm:$0xf]
    %v4462 = vld [vmem:[#allocation9 + $0x4b4] sm:$0xf]
    %v4463 = vld [vmem:[#allocation9 + $0x4b8] sm:$0xf]
    %v4464 = vld [vmem:[#allocation9 + $0x4bc] sm:$0xf]
    %v4465 = vld [vmem:[#allocation9 + $0x4c0] sm:$0xf]
    %v4466 = vld [vmem:[#allocation9 + $0x4c4] sm:$0xf]
    %v4467 = vld [vmem:[#allocation9 + $0x4c8] sm:$0xf]
    %v4468 = vld [vmem:[#allocation9 + $0x4cc] sm:$0xf]
    %v4469 = vld [vmem:[#allocation9 + $0x4d0] sm:$0xf]
    %v4470 = vld [vmem:[#allocation9 + $0x4d4] sm:$0xf]
    %v4471 = vld [vmem:[#allocation9 + $0x4d8] sm:$0xf]
    %v4472 = vld [vmem:[#allocation9 + $0x4dc] sm:$0xf]
    %v4473 = vld [vmem:[#allocation9 + $0x4e0] sm:$0xf]
    %v4474 = vld [vmem:[#allocation9 + $0x4e4] sm:$0xf]
    %v4475 = vld [vmem:[#allocation9 + $0x4e8] sm:$0xf]
    %v4476 = vld [vmem:[#allocation9 + $0x4ec] sm:$0xf]
    %v4477 = vld [vmem:[#allocation9 + $0x4f0] sm:$0xf]
    %v4478 = vld [vmem:[#allocation9 + $0x4f4] sm:$0xf]
    %v4479 = vld [vmem:[#allocation9 + $0x4f8] sm:$0xf]
    %v4480 = vld [vmem:[#allocation9 + $0x4fc] sm:$0xf]
    %v4481 = vld [vmem:[#allocation9 + $0x500] sm:$0xf]
    %v4482 = vld [vmem:[#allocation9 + $0x504] sm:$0xf]
    %v4483 = vld [vmem:[#allocation9 + $0x508] sm:$0xf]
    %v4484 = vld [vmem:[#allocation9 + $0x50c] sm:$0xf]
    %v4485 = vld [vmem:[#allocation9 + $0x510] sm:$0xf]
    %v4486 = vld [vmem:[#allocation9 + $0x514] sm:$0xf]
    %v4487 = vld [vmem:[#allocation9 + $0x518] sm:$0xf]
    %v4488 = vld [vmem:[#allocation9 + $0x51c] sm:$0xf]
    %v4489 = vld [vmem:[#allocation9 + $0x520] sm:$0xf]
    %v4490 = vld [vmem:[#allocation9 + $0x524] sm:$0xf]
    %v4491 = vld [vmem:[#allocation9 + $0x528] sm:$0xf]
    %v4492 = vld [vmem:[#allocation9 + $0x52c] sm:$0xf]
    %v4493 = vld [vmem:[#allocation9 + $0x530] sm:$0xf]
    %v4494 = vld [vmem:[#allocation9 + $0x534] sm:$0xf]
    %v4495 = vld [vmem:[#allocation9 + $0x538] sm:$0xf]
    %v4496 = vld [vmem:[#allocation9 + $0x53c] sm:$0xf]
    %v4497 = vld [vmem:[#allocation9 + $0x540] sm:$0xf]
    %v4498 = vld [vmem:[#allocation9 + $0x544] sm:$0xf]
    %v4499 = vld [vmem:[#allocation9 + $0x548] sm:$0xf]
    %v4500 = vld [vmem:[#allocation9 + $0x54c] sm:$0xf]
    %v4501 = vld [vmem:[#allocation9 + $0x550] sm:$0xf]
    %v4502 = vld [vmem:[#allocation9 + $0x554] sm:$0xf]
    %v4503 = vld [vmem:[#allocation9 + $0x558] sm:$0xf]
    %v4504 = vld [vmem:[#allocation9 + $0x55c] sm:$0xf]
    %v4505 = vld [vmem:[#allocation9 + $0x560] sm:$0xf]
    %v4506 = vld [vmem:[#allocation9 + $0x564] sm:$0xf]
    %v4507 = vld [vmem:[#allocation9 + $0x568] sm:$0xf]
    %v4508 = vld [vmem:[#allocation9 + $0x56c] sm:$0xf]
    %v4509 = vld [vmem:[#allocation9 + $0x570] sm:$0xf]
    %v4510 = vld [vmem:[#allocation9 + $0x574] sm:$0xf]
    %v4511 = vld [vmem:[#allocation9 + $0x578] sm:$0xf]
    %v4512 = vld [vmem:[#allocation9 + $0x57c] sm:$0xf]
    %v4513 = vld [vmem:[#allocation9 + $0x580] sm:$0xf]
    %v4514 = vld [vmem:[#allocation9 + $0x584] sm:$0xf]
    %v4515 = vld [vmem:[#allocation9 + $0x588] sm:$0xf]
    %v4516 = vld [vmem:[#allocation9 + $0x58c] sm:$0xf]
    %v4517 = vld [vmem:[#allocation9 + $0x590] sm:$0xf]
    %v4518 = vld [vmem:[#allocation9 + $0x594] sm:$0xf]
    %v4519 = vld [vmem:[#allocation9 + $0x598] sm:$0xf]
    %v4520 = vld [vmem:[#allocation9 + $0x59c] sm:$0xf]
    %v4521 = vld [vmem:[#allocation9 + $0x5a0] sm:$0xf]
    %v4522 = vld [vmem:[#allocation9 + $0x5a4] sm:$0xf]
    %v4523 = vld [vmem:[#allocation9 + $0x5a8] sm:$0xf]
    %v4524 = vld [vmem:[#allocation9 + $0x5ac] sm:$0xf]
    %v4525 = vld [vmem:[#allocation9 + $0x5b0] sm:$0xf]
    %v4526 = vld [vmem:[#allocation9 + $0x5b4] sm:$0xf]
    %v4527 = vld [vmem:[#allocation9 + $0x5b8] sm:$0xf]
    %v4528 = vld [vmem:[#allocation9 + $0x5bc] sm:$0xf]
    %v4529 = vld [vmem:[#allocation9 + $0x5c0] sm:$0xf]
    %v4530 = vld [vmem:[#allocation9 + $0x5c4] sm:$0xf]
    %v4531 = vld [vmem:[#allocation9 + $0x5c8] sm:$0xf]
    %v4532 = vld [vmem:[#allocation9 + $0x5cc] sm:$0xf]
    %v4533 = vld [vmem:[#allocation9 + $0x5d0] sm:$0xf]
    %v4534 = vld [vmem:[#allocation9 + $0x5d4] sm:$0xf]
    %v4535 = vld [vmem:[#allocation9 + $0x5d8] sm:$0xf]
    %v4536 = vld [vmem:[#allocation9 + $0x5dc] sm:$0xf]
    %v4537 = vld [vmem:[#allocation9 + $0x5e0] sm:$0xf]
    %v4538 = vld [vmem:[#allocation9 + $0x5e4] sm:$0xf]
    %v4539 = vld [vmem:[#allocation9 + $0x5e8] sm:$0xf]
    %v4540 = vld [vmem:[#allocation9 + $0x5ec] sm:$0xf]
    %v4541 = vld [vmem:[#allocation9 + $0x5f0] sm:$0xf]
    %v4542 = vld [vmem:[#allocation9 + $0x5f4] sm:$0xf]
    %v4543 = vld [vmem:[#allocation9 + $0x5f8] sm:$0xf]
    %v4544 = vld [vmem:[#allocation9 + $0x5fc] sm:$0xf]
    %v4545 = vld [vmem:[#allocation9 + $0x600] sm:$0xf]
    %v4546 = vld [vmem:[#allocation9 + $0x604] sm:$0xf]
    %v4547 = vld [vmem:[#allocation9 + $0x608] sm:$0xf]
    %v4548 = vld [vmem:[#allocation9 + $0x60c] sm:$0xf]
    %v4549 = vld [vmem:[#allocation9 + $0x610] sm:$0xf]
    %v4550 = vld [vmem:[#allocation9 + $0x614] sm:$0xf]
    %v4551 = vld [vmem:[#allocation9 + $0x618] sm:$0xf]
    %v4552 = vld [vmem:[#allocation9 + $0x61c] sm:$0xf]
    %v4553 = vld [vmem:[#allocation9 + $0x620] sm:$0xf]
    %v4554 = vld [vmem:[#allocation9 + $0x624] sm:$0xf]
    %v4555 = vld [vmem:[#allocation9 + $0x628] sm:$0xf]
    %v4556 = vld [vmem:[#allocation9 + $0x62c] sm:$0xf]
    %v4557 = vld [vmem:[#allocation9 + $0x630] sm:$0xf]
    %v4558 = vld [vmem:[#allocation9 + $0x634] sm:$0xf]
    %v4559 = vld [vmem:[#allocation9 + $0x638] sm:$0xf]
    %v4560 = vld [vmem:[#allocation9 + $0x63c] sm:$0xf]
    %v4561 = vld [vmem:[#allocation9 + $0x640] sm:$0xf]
    %v4562 = vld [vmem:[#allocation9 + $0x644] sm:$0xf]
    %v4563 = vld [vmem:[#allocation9 + $0x648] sm:$0xf]
    %v4564 = vld [vmem:[#allocation9 + $0x64c] sm:$0xf]
    %v4565 = vld [vmem:[#allocation9 + $0x650] sm:$0xf]
    %v4566 = vld [vmem:[#allocation9 + $0x654] sm:$0xf]
    %v4567 = vld [vmem:[#allocation9 + $0x658] sm:$0xf]
    %v4568 = vld [vmem:[#allocation9 + $0x65c] sm:$0xf]
    %v4569 = vld [vmem:[#allocation9 + $0x660] sm:$0xf]
    %v4570 = vld [vmem:[#allocation9 + $0x664] sm:$0xf]
    %v4571 = vld [vmem:[#allocation9 + $0x668] sm:$0xf]
    %v4572 = vld [vmem:[#allocation9 + $0x66c] sm:$0xf]
    %v4573 = vld [vmem:[#allocation9 + $0x670] sm:$0xf]
    %v4574 = vld [vmem:[#allocation9 + $0x674] sm:$0xf]
    %v4575 = vld [vmem:[#allocation9 + $0x678] sm:$0xf]
    %v4576 = vld [vmem:[#allocation9 + $0x67c] sm:$0xf]
    %v4577 = vld [vmem:[#allocation9 + $0x680] sm:$0xf]
    %v4578 = vld [vmem:[#allocation9 + $0x684] sm:$0xf]
    %v4579 = vld [vmem:[#allocation9 + $0x688] sm:$0xf]
    %v4580 = vld [vmem:[#allocation9 + $0x68c] sm:$0xf]
    %v4581 = vld [vmem:[#allocation9 + $0x690] sm:$0xf]
    %v4582 = vld [vmem:[#allocation9 + $0x694] sm:$0xf]
    %v4583 = vld [vmem:[#allocation9 + $0x698] sm:$0xf]
    %v4584 = vld [vmem:[#allocation9 + $0x69c] sm:$0xf]
    %v4585 = vld [vmem:[#allocation9 + $0x6a0] sm:$0xf]
    %v4586 = vld [vmem:[#allocation9 + $0x6a4] sm:$0xf]
    %v4587 = vld [vmem:[#allocation9 + $0x6a8] sm:$0xf]
    %v4588 = vld [vmem:[#allocation9 + $0x6ac] sm:$0xf]
    %v4589 = vld [vmem:[#allocation9 + $0x6b0] sm:$0xf]
    %v4590 = vld [vmem:[#allocation9 + $0x6b4] sm:$0xf]
    %v4591 = vld [vmem:[#allocation9 + $0x6b8] sm:$0xf]
    %v4592 = vld [vmem:[#allocation9 + $0x6bc] sm:$0xf]
    %v4593 = vld [vmem:[#allocation9 + $0x6c0] sm:$0xf]
    %v4594 = vld [vmem:[#allocation9 + $0x6c4] sm:$0xf]
    %v4595 = vld [vmem:[#allocation9 + $0x6c8] sm:$0xf]
    %v4596 = vld [vmem:[#allocation9 + $0x6cc] sm:$0xf]
    %v4597 = vld [vmem:[#allocation9 + $0x6d0] sm:$0xf]
    %v4598 = vld [vmem:[#allocation9 + $0x6d4] sm:$0xf]
    %v4599 = vld [vmem:[#allocation9 + $0x6d8] sm:$0xf]
    %v4600 = vld [vmem:[#allocation9 + $0x6dc] sm:$0xf]
    %v4601 = vld [vmem:[#allocation9 + $0x6e0] sm:$0xf]
    %v4602 = vld [vmem:[#allocation9 + $0x6e4] sm:$0xf]
    %v4603 = vld [vmem:[#allocation9 + $0x6e8] sm:$0xf]
    %v4604 = vld [vmem:[#allocation9 + $0x6ec] sm:$0xf]
    %v4605 = vld [vmem:[#allocation9 + $0x6f0] sm:$0xf]
    %v4606 = vld [vmem:[#allocation9 + $0x6f4] sm:$0xf]
    %v4607 = vld [vmem:[#allocation9 + $0x6f8] sm:$0xf]
    %v4608 = vld [vmem:[#allocation9 + $0x6fc] sm:$0xf]
    %v4609 = vld [vmem:[#allocation9 + $0x700] sm:$0xf]
    %v4610 = vld [vmem:[#allocation9 + $0x704] sm:$0xf]
    %v4611 = vld [vmem:[#allocation9 + $0x708] sm:$0xf]
    %v4612 = vld [vmem:[#allocation9 + $0x70c] sm:$0xf]
    %v4613 = vld [vmem:[#allocation9 + $0x710] sm:$0xf]
    %v4614 = vld [vmem:[#allocation9 + $0x714] sm:$0xf]
    %v4615 = vld [vmem:[#allocation9 + $0x718] sm:$0xf]
    %v4616 = vld [vmem:[#allocation9 + $0x71c] sm:$0xf]
    %v4617 = vld [vmem:[#allocation9 + $0x720] sm:$0xf]
    %v4618 = vld [vmem:[#allocation9 + $0x724] sm:$0xf]
    %v4619 = vld [vmem:[#allocation9 + $0x728] sm:$0xf]
    %v4620 = vld [vmem:[#allocation9 + $0x72c] sm:$0xf]
    %v4621 = vld [vmem:[#allocation9 + $0x730] sm:$0xf]
    %v4622 = vld [vmem:[#allocation9 + $0x734] sm:$0xf]
    %v4623 = vld [vmem:[#allocation9 + $0x738] sm:$0xf]
    %v4624 = vld [vmem:[#allocation9 + $0x73c] sm:$0xf]
    %v4625 = vld [vmem:[#allocation9 + $0x740] sm:$0xf]
    %v4626 = vld [vmem:[#allocation9 + $0x744] sm:$0xf]
    %v4627 = vld [vmem:[#allocation9 + $0x748] sm:$0xf]
    %v4628 = vld [vmem:[#allocation9 + $0x74c] sm:$0xf]
    %v4629 = vld [vmem:[#allocation9 + $0x750] sm:$0xf]
    %v4630 = vld [vmem:[#allocation9 + $0x754] sm:$0xf]
    %v4631 = vld [vmem:[#allocation9 + $0x758] sm:$0xf]
    %v4632 = vld [vmem:[#allocation9 + $0x75c] sm:$0xf]
    %v4633 = vld [vmem:[#allocation9 + $0x760] sm:$0xf]
    %v4634 = vld [vmem:[#allocation9 + $0x764] sm:$0xf]
    %v4635 = vld [vmem:[#allocation9 + $0x768] sm:$0xf]
    %v4636 = vld [vmem:[#allocation9 + $0x76c] sm:$0xf]
    %v4637 = vld [vmem:[#allocation9 + $0x770] sm:$0xf]
    %v4638 = vld [vmem:[#allocation9 + $0x774] sm:$0xf]
    %v4639 = vld [vmem:[#allocation9 + $0x778] sm:$0xf]
    %v4640 = vld [vmem:[#allocation9 + $0x77c] sm:$0xf]
    %v4641 = vld [vmem:[#allocation9 + $0x780] sm:$0xf]
    %v4642 = vld [vmem:[#allocation9 + $0x784] sm:$0xf]
    %v4643 = vld [vmem:[#allocation9 + $0x788] sm:$0xf]
    %v4644 = vld [vmem:[#allocation9 + $0x78c] sm:$0xf]
    %v4645 = vld [vmem:[#allocation9 + $0x790] sm:$0xf]
    %v4646 = vld [vmem:[#allocation9 + $0x794] sm:$0xf]
    %v4647 = vld [vmem:[#allocation9 + $0x798] sm:$0xf]
    %v4648 = vld [vmem:[#allocation9 + $0x79c] sm:$0xf]
    %v4649 = vld [vmem:[#allocation9 + $0x7a0] sm:$0xf]
    %v4650 = vld [vmem:[#allocation9 + $0x7a4] sm:$0xf]
    %v4651 = vld [vmem:[#allocation9 + $0x7a8] sm:$0xf]
    %v4652 = vld [vmem:[#allocation9 + $0x7ac] sm:$0xf]
    %v4653 = vld [vmem:[#allocation9 + $0x7b0] sm:$0xf]
    %v4654 = vld [vmem:[#allocation9 + $0x7b4] sm:$0xf]
    %v4655 = vld [vmem:[#allocation9 + $0x7b8] sm:$0xf]
    %v4656 = vld [vmem:[#allocation9 + $0x7bc] sm:$0xf]
    %v4657 = vld [vmem:[#allocation9 + $0x7c0] sm:$0xf]
    %v4658 = vld [vmem:[#allocation9 + $0x7c4] sm:$0xf]
    %v4659 = vld [vmem:[#allocation9 + $0x7c8] sm:$0xf]
    %v4660 = vld [vmem:[#allocation9 + $0x7cc] sm:$0xf]
    %v4661 = vld [vmem:[#allocation9 + $0x7d0] sm:$0xf]
    %v4662 = vld [vmem:[#allocation9 + $0x7d4] sm:$0xf]
    %v4663 = vld [vmem:[#allocation9 + $0x7d8] sm:$0xf]
    %v4664 = vld [vmem:[#allocation9 + $0x7dc] sm:$0xf]
    %v4665 = vld [vmem:[#allocation9 + $0x7e0] sm:$0xf]
    %v4666 = vld [vmem:[#allocation9 + $0x7e4] sm:$0xf]
    %v4667 = vld [vmem:[#allocation9 + $0x7e8] sm:$0xf]
    %v4668 = vld [vmem:[#allocation9 + $0x7ec] sm:$0xf]
    %v4669 = vld [vmem:[#allocation9 + $0x7f0] sm:$0xf]
    %v4670 = vld [vmem:[#allocation9 + $0x7f4] sm:$0xf]
    %v4671 = vld [vmem:[#allocation9 + $0x7f8] sm:$0xf]
    %v4672 = vld [vmem:[#allocation9 + $0x7fc] sm:$0xf]
    %v4673 = vld [vmem:[#allocation11] sm:$0x1]
    %v4675 = vperm.slane %v4673, 0
    %v5189 = vunpack.c.l.b16 %v4161
    %v5190 = vunpack.c.l.b16 %v4162
    %v5191 = vunpack.c.l.b16 %v4163
    %v5192 = vunpack.c.l.b16 %v4164
    %v5193 = vunpack.c.l.b16 %v4165
    %v5194 = vunpack.c.l.b16 %v4166
    %v5195 = vunpack.c.l.b16 %v4167
    %v5196 = vunpack.c.l.b16 %v4168
    %v5197 = vunpack.c.l.b16 %v4169
    %v5198 = vunpack.c.l.b16 %v4170
    %v5199 = vunpack.c.l.b16 %v4171
    %v5200 = vunpack.c.l.b16 %v4172
    %v5201 = vunpack.c.l.b16 %v4173
    %v5202 = vunpack.c.l.b16 %v4174
    %v5203 = vunpack.c.l.b16 %v4175
    %v5204 = vunpack.c.l.b16 %v4176
    %v5205 = vunpack.c.l.b16 %v4177
    %v5206 = vunpack.c.l.b16 %v4178
    %v5207 = vunpack.c.l.b16 %v4179
    %v5208 = vunpack.c.l.b16 %v4180
    %v5209 = vunpack.c.l.b16 %v4181
    %v5210 = vunpack.c.l.b16 %v4182
    %v5211 = vunpack.c.l.b16 %v4183
    %v5212 = vunpack.c.l.b16 %v4184
    %v5213 = vunpack.c.l.b16 %v4185
    %v5214 = vunpack.c.l.b16 %v4186
    %v5215 = vunpack.c.l.b16 %v4187
    %v5216 = vunpack.c.l.b16 %v4188
    %v5217 = vunpack.c.l.b16 %v4189
    %v5218 = vunpack.c.l.b16 %v4190
    %v5219 = vunpack.c.l.b16 %v4191
    %v5220 = vunpack.c.l.b16 %v4192
    %v5221 = vunpack.c.l.b16 %v4193
    %v5222 = vunpack.c.l.b16 %v4194
    %v5223 = vunpack.c.l.b16 %v4195
    %v5224 = vunpack.c.l.b16 %v4196
    %v5225 = vunpack.c.l.b16 %v4197
    %v5226 = vunpack.c.l.b16 %v4198
    %v5227 = vunpack.c.l.b16 %v4199
    %v5228 = vunpack.c.l.b16 %v4200
    %v5229 = vunpack.c.l.b16 %v4201
    %v5230 = vunpack.c.l.b16 %v4202
    %v5231 = vunpack.c.l.b16 %v4203
    %v5232 = vunpack.c.l.b16 %v4204
    %v5233 = vunpack.c.l.b16 %v4205
    %v5234 = vunpack.c.l.b16 %v4206
    %v5235 = vunpack.c.l.b16 %v4207
    %v5236 = vunpack.c.l.b16 %v4208
    %v5237 = vunpack.c.l.b16 %v4209
    %v5238 = vunpack.c.l.b16 %v4210
    %v5239 = vunpack.c.l.b16 %v4211
    %v5240 = vunpack.c.l.b16 %v4212
    %v5241 = vunpack.c.l.b16 %v4213
    %v5242 = vunpack.c.l.b16 %v4214
    %v5243 = vunpack.c.l.b16 %v4215
    %v5244 = vunpack.c.l.b16 %v4216
    %v5245 = vunpack.c.l.b16 %v4217
    %v5246 = vunpack.c.l.b16 %v4218
    %v5247 = vunpack.c.l.b16 %v4219
    %v5248 = vunpack.c.l.b16 %v4220
    %v5249 = vunpack.c.l.b16 %v4221
    %v5250 = vunpack.c.l.b16 %v4222
    %v5251 = vunpack.c.l.b16 %v4223
    %v5252 = vunpack.c.l.b16 %v4224
    %v5253 = vunpack.c.l.b16 %v4225
    %v5254 = vunpack.c.l.b16 %v4226
    %v5255 = vunpack.c.l.b16 %v4227
    %v5256 = vunpack.c.l.b16 %v4228
    %v5257 = vunpack.c.l.b16 %v4229
    %v5258 = vunpack.c.l.b16 %v4230
    %v5259 = vunpack.c.l.b16 %v4231
    %v5260 = vunpack.c.l.b16 %v4232
    %v5261 = vunpack.c.l.b16 %v4233
    %v5262 = vunpack.c.l.b16 %v4234
    %v5263 = vunpack.c.l.b16 %v4235
    %v5264 = vunpack.c.l.b16 %v4236
    %v5265 = vunpack.c.l.b16 %v4237
    %v5266 = vunpack.c.l.b16 %v4238
    %v5267 = vunpack.c.l.b16 %v4239
    %v5268 = vunpack.c.l.b16 %v4240
    %v5269 = vunpack.c.l.b16 %v4241
    %v5270 = vunpack.c.l.b16 %v4242
    %v5271 = vunpack.c.l.b16 %v4243
    %v5272 = vunpack.c.l.b16 %v4244
    %v5273 = vunpack.c.l.b16 %v4245
    %v5274 = vunpack.c.l.b16 %v4246
    %v5275 = vunpack.c.l.b16 %v4247
    %v5276 = vunpack.c.l.b16 %v4248
    %v5277 = vunpack.c.l.b16 %v4249
    %v5278 = vunpack.c.l.b16 %v4250
    %v5279 = vunpack.c.l.b16 %v4251
    %v5280 = vunpack.c.l.b16 %v4252
    %v5281 = vunpack.c.l.b16 %v4253
    %v5282 = vunpack.c.l.b16 %v4254
    %v5283 = vunpack.c.l.b16 %v4255
    %v5284 = vunpack.c.l.b16 %v4256
    %v5285 = vunpack.c.l.b16 %v4257
    %v5286 = vunpack.c.l.b16 %v4258
    %v5287 = vunpack.c.l.b16 %v4259
    %v5288 = vunpack.c.l.b16 %v4260
    %v5289 = vunpack.c.l.b16 %v4261
    %v5290 = vunpack.c.l.b16 %v4262
    %v5291 = vunpack.c.l.b16 %v4263
    %v5292 = vunpack.c.l.b16 %v4264
    %v5293 = vunpack.c.l.b16 %v4265
    %v5294 = vunpack.c.l.b16 %v4266
    %v5295 = vunpack.c.l.b16 %v4267
    %v5296 = vunpack.c.l.b16 %v4268
    %v5297 = vunpack.c.l.b16 %v4269
    %v5298 = vunpack.c.l.b16 %v4270
    %v5299 = vunpack.c.l.b16 %v4271
    %v5300 = vunpack.c.l.b16 %v4272
    %v5301 = vunpack.c.l.b16 %v4273
    %v5302 = vunpack.c.l.b16 %v4274
    %v5303 = vunpack.c.l.b16 %v4275
    %v5304 = vunpack.c.l.b16 %v4276
    %v5305 = vunpack.c.l.b16 %v4277
    %v5306 = vunpack.c.l.b16 %v4278
    %v5307 = vunpack.c.l.b16 %v4279
    %v5308 = vunpack.c.l.b16 %v4280
    %v5309 = vunpack.c.l.b16 %v4281
    %v5310 = vunpack.c.l.b16 %v4282
    %v5311 = vunpack.c.l.b16 %v4283
    %v5312 = vunpack.c.l.b16 %v4284
    %v5313 = vunpack.c.l.b16 %v4285
    %v5314 = vunpack.c.l.b16 %v4286
    %v5315 = vunpack.c.l.b16 %v4287
    %v5316 = vunpack.c.l.b16 %v4288
    %v5317 = vunpack.c.l.b16 %v4289
    %v5318 = vunpack.c.l.b16 %v4290
    %v5319 = vunpack.c.l.b16 %v4291
    %v5320 = vunpack.c.l.b16 %v4292
    %v5321 = vunpack.c.l.b16 %v4293
    %v5322 = vunpack.c.l.b16 %v4294
    %v5323 = vunpack.c.l.b16 %v4295
    %v5324 = vunpack.c.l.b16 %v4296
    %v5325 = vunpack.c.l.b16 %v4297
    %v5326 = vunpack.c.l.b16 %v4298
    %v5327 = vunpack.c.l.b16 %v4299
    %v5328 = vunpack.c.l.b16 %v4300
    %v5329 = vunpack.c.l.b16 %v4301
    %v5330 = vunpack.c.l.b16 %v4302
    %v5331 = vunpack.c.l.b16 %v4303
    %v5332 = vunpack.c.l.b16 %v4304
    %v5333 = vunpack.c.l.b16 %v4305
    %v5334 = vunpack.c.l.b16 %v4306
    %v5335 = vunpack.c.l.b16 %v4307
    %v5336 = vunpack.c.l.b16 %v4308
    %v5337 = vunpack.c.l.b16 %v4309
    %v5338 = vunpack.c.l.b16 %v4310
    %v5339 = vunpack.c.l.b16 %v4311
    %v5340 = vunpack.c.l.b16 %v4312
    %v5341 = vunpack.c.l.b16 %v4313
    %v5342 = vunpack.c.l.b16 %v4314
    %v5343 = vunpack.c.l.b16 %v4315
    %v5344 = vunpack.c.l.b16 %v4316
    %v5345 = vunpack.c.l.b16 %v4317
    %v5346 = vunpack.c.l.b16 %v4318
    %v5347 = vunpack.c.l.b16 %v4319
    %v5348 = vunpack.c.l.b16 %v4320
    %v5349 = vunpack.c.l.b16 %v4321
    %v5350 = vunpack.c.l.b16 %v4322
    %v5351 = vunpack.c.l.b16 %v4323
    %v5352 = vunpack.c.l.b16 %v4324
    %v5353 = vunpack.c.l.b16 %v4325
    %v5354 = vunpack.c.l.b16 %v4326
    %v5355 = vunpack.c.l.b16 %v4327
    %v5356 = vunpack.c.l.b16 %v4328
    %v5357 = vunpack.c.l.b16 %v4329
    %v5358 = vunpack.c.l.b16 %v4330
    %v5359 = vunpack.c.l.b16 %v4331
    %v5360 = vunpack.c.l.b16 %v4332
    %v5361 = vunpack.c.l.b16 %v4333
    %v5362 = vunpack.c.l.b16 %v4334
    %v5363 = vunpack.c.l.b16 %v4335
    %v5364 = vunpack.c.l.b16 %v4336
    %v5365 = vunpack.c.l.b16 %v4337
    %v5366 = vunpack.c.l.b16 %v4338
    %v5367 = vunpack.c.l.b16 %v4339
    %v5368 = vunpack.c.l.b16 %v4340
    %v5369 = vunpack.c.l.b16 %v4341
    %v5370 = vunpack.c.l.b16 %v4342
    %v5371 = vunpack.c.l.b16 %v4343
    %v5372 = vunpack.c.l.b16 %v4344
    %v5373 = vunpack.c.l.b16 %v4345
    %v5374 = vunpack.c.l.b16 %v4346
    %v5375 = vunpack.c.l.b16 %v4347
    %v5376 = vunpack.c.l.b16 %v4348
    %v5377 = vunpack.c.l.b16 %v4349
    %v5378 = vunpack.c.l.b16 %v4350
    %v5379 = vunpack.c.l.b16 %v4351
    %v5380 = vunpack.c.l.b16 %v4352
    %v5381 = vunpack.c.l.b16 %v4353
    %v5382 = vunpack.c.l.b16 %v4354
    %v5383 = vunpack.c.l.b16 %v4355
    %v5384 = vunpack.c.l.b16 %v4356
    %v5385 = vunpack.c.l.b16 %v4357
    %v5386 = vunpack.c.l.b16 %v4358
    %v5387 = vunpack.c.l.b16 %v4359
    %v5388 = vunpack.c.l.b16 %v4360
    %v5389 = vunpack.c.l.b16 %v4361
    %v5390 = vunpack.c.l.b16 %v4362
    %v5391 = vunpack.c.l.b16 %v4363
    %v5392 = vunpack.c.l.b16 %v4364
    %v5393 = vunpack.c.l.b16 %v4365
    %v5394 = vunpack.c.l.b16 %v4366
    %v5395 = vunpack.c.l.b16 %v4367
    %v5396 = vunpack.c.l.b16 %v4368
    %v5397 = vunpack.c.l.b16 %v4369
    %v5398 = vunpack.c.l.b16 %v4370
    %v5399 = vunpack.c.l.b16 %v4371
    %v5400 = vunpack.c.l.b16 %v4372
    %v5401 = vunpack.c.l.b16 %v4373
    %v5402 = vunpack.c.l.b16 %v4374
    %v5403 = vunpack.c.l.b16 %v4375
    %v5404 = vunpack.c.l.b16 %v4376
    %v5405 = vunpack.c.l.b16 %v4377
    %v5406 = vunpack.c.l.b16 %v4378
    %v5407 = vunpack.c.l.b16 %v4379
    %v5408 = vunpack.c.l.b16 %v4380
    %v5409 = vunpack.c.l.b16 %v4381
    %v5410 = vunpack.c.l.b16 %v4382
    %v5411 = vunpack.c.l.b16 %v4383
    %v5412 = vunpack.c.l.b16 %v4384
    %v5413 = vunpack.c.l.b16 %v4385
    %v5414 = vunpack.c.l.b16 %v4386
    %v5415 = vunpack.c.l.b16 %v4387
    %v5416 = vunpack.c.l.b16 %v4388
    %v5417 = vunpack.c.l.b16 %v4389
    %v5418 = vunpack.c.l.b16 %v4390
    %v5419 = vunpack.c.l.b16 %v4391
    %v5420 = vunpack.c.l.b16 %v4392
    %v5421 = vunpack.c.l.b16 %v4393
    %v5422 = vunpack.c.l.b16 %v4394
    %v5423 = vunpack.c.l.b16 %v4395
    %v5424 = vunpack.c.l.b16 %v4396
    %v5425 = vunpack.c.l.b16 %v4397
    %v5426 = vunpack.c.l.b16 %v4398
    %v5427 = vunpack.c.l.b16 %v4399
    %v5428 = vunpack.c.l.b16 %v4400
    %v5429 = vunpack.c.l.b16 %v4401
    %v5430 = vunpack.c.l.b16 %v4402
    %v5431 = vunpack.c.l.b16 %v4403
    %v5432 = vunpack.c.l.b16 %v4404
    %v5433 = vunpack.c.l.b16 %v4405
    %v5434 = vunpack.c.l.b16 %v4406
    %v5435 = vunpack.c.l.b16 %v4407
    %v5436 = vunpack.c.l.b16 %v4408
    %v5437 = vunpack.c.l.b16 %v4409
    %v5438 = vunpack.c.l.b16 %v4410
    %v5439 = vunpack.c.l.b16 %v4411
    %v5440 = vunpack.c.l.b16 %v4412
    %v5441 = vunpack.c.l.b16 %v4413
    %v5442 = vunpack.c.l.b16 %v4414
    %v5443 = vunpack.c.l.b16 %v4415
    %v5444 = vunpack.c.l.b16 %v4416
    %v5445 = vunpack.c.l.b16 %v4417
    %v5446 = vunpack.c.l.b16 %v4418
    %v5447 = vunpack.c.l.b16 %v4419
    %v5448 = vunpack.c.l.b16 %v4420
    %v5449 = vunpack.c.l.b16 %v4421
    %v5450 = vunpack.c.l.b16 %v4422
    %v5451 = vunpack.c.l.b16 %v4423
    %v5452 = vunpack.c.l.b16 %v4424
    %v5453 = vunpack.c.l.b16 %v4425
    %v5454 = vunpack.c.l.b16 %v4426
    %v5455 = vunpack.c.l.b16 %v4427
    %v5456 = vunpack.c.l.b16 %v4428
    %v5457 = vunpack.c.l.b16 %v4429
    %v5458 = vunpack.c.l.b16 %v4430
    %v5459 = vunpack.c.l.b16 %v4431
    %v5460 = vunpack.c.l.b16 %v4432
    %v5461 = vunpack.c.l.b16 %v4433
    %v5462 = vunpack.c.l.b16 %v4434
    %v5463 = vunpack.c.l.b16 %v4435
    %v5464 = vunpack.c.l.b16 %v4436
    %v5465 = vunpack.c.l.b16 %v4437
    %v5466 = vunpack.c.l.b16 %v4438
    %v5467 = vunpack.c.l.b16 %v4439
    %v5468 = vunpack.c.l.b16 %v4440
    %v5469 = vunpack.c.l.b16 %v4441
    %v5470 = vunpack.c.l.b16 %v4442
    %v5471 = vunpack.c.l.b16 %v4443
    %v5472 = vunpack.c.l.b16 %v4444
    %v5473 = vunpack.c.l.b16 %v4445
    %v5474 = vunpack.c.l.b16 %v4446
    %v5475 = vunpack.c.l.b16 %v4447
    %v5476 = vunpack.c.l.b16 %v4448
    %v5477 = vunpack.c.l.b16 %v4449
    %v5478 = vunpack.c.l.b16 %v4450
    %v5479 = vunpack.c.l.b16 %v4451
    %v5480 = vunpack.c.l.b16 %v4452
    %v5481 = vunpack.c.l.b16 %v4453
    %v5482 = vunpack.c.l.b16 %v4454
    %v5483 = vunpack.c.l.b16 %v4455
    %v5484 = vunpack.c.l.b16 %v4456
    %v5485 = vunpack.c.l.b16 %v4457
    %v5486 = vunpack.c.l.b16 %v4458
    %v5487 = vunpack.c.l.b16 %v4459
    %v5488 = vunpack.c.l.b16 %v4460
    %v5489 = vunpack.c.l.b16 %v4461
    %v5490 = vunpack.c.l.b16 %v4462
    %v5491 = vunpack.c.l.b16 %v4463
    %v5492 = vunpack.c.l.b16 %v4464
    %v5493 = vunpack.c.l.b16 %v4465
    %v5494 = vunpack.c.l.b16 %v4466
    %v5495 = vunpack.c.l.b16 %v4467
    %v5496 = vunpack.c.l.b16 %v4468
    %v5497 = vunpack.c.l.b16 %v4469
    %v5498 = vunpack.c.l.b16 %v4470
    %v5499 = vunpack.c.l.b16 %v4471
    %v5500 = vunpack.c.l.b16 %v4472
    %v5501 = vunpack.c.l.b16 %v4473
    %v5502 = vunpack.c.l.b16 %v4474
    %v5503 = vunpack.c.l.b16 %v4475
    %v5504 = vunpack.c.l.b16 %v4476
    %v5505 = vunpack.c.l.b16 %v4477
    %v5506 = vunpack.c.l.b16 %v4478
    %v5507 = vunpack.c.l.b16 %v4479
    %v5508 = vunpack.c.l.b16 %v4480
    %v5509 = vunpack.c.l.b16 %v4481
    %v5510 = vunpack.c.l.b16 %v4482
    %v5511 = vunpack.c.l.b16 %v4483
    %v5512 = vunpack.c.l.b16 %v4484
    %v5513 = vunpack.c.l.b16 %v4485
    %v5514 = vunpack.c.l.b16 %v4486
    %v5515 = vunpack.c.l.b16 %v4487
    %v5516 = vunpack.c.l.b16 %v4488
    %v5517 = vunpack.c.l.b16 %v4489
    %v5518 = vunpack.c.l.b16 %v4490
    %v5519 = vunpack.c.l.b16 %v4491
    %v5520 = vunpack.c.l.b16 %v4492
    %v5521 = vunpack.c.l.b16 %v4493
    %v5522 = vunpack.c.l.b16 %v4494
    %v5523 = vunpack.c.l.b16 %v4495
    %v5524 = vunpack.c.l.b16 %v4496
    %v5525 = vunpack.c.l.b16 %v4497
    %v5526 = vunpack.c.l.b16 %v4498
    %v5527 = vunpack.c.l.b16 %v4499
    %v5528 = vunpack.c.l.b16 %v4500
    %v5529 = vunpack.c.l.b16 %v4501
    %v5530 = vunpack.c.l.b16 %v4502
    %v5531 = vunpack.c.l.b16 %v4503
    %v5532 = vunpack.c.l.b16 %v4504
    %v5533 = vunpack.c.l.b16 %v4505
    %v5534 = vunpack.c.l.b16 %v4506
    %v5535 = vunpack.c.l.b16 %v4507
    %v5536 = vunpack.c.l.b16 %v4508
    %v5537 = vunpack.c.l.b16 %v4509
    %v5538 = vunpack.c.l.b16 %v4510
    %v5539 = vunpack.c.l.b16 %v4511
    %v5540 = vunpack.c.l.b16 %v4512
    %v5541 = vunpack.c.l.b16 %v4513
    %v5542 = vunpack.c.l.b16 %v4514
    %v5543 = vunpack.c.l.b16 %v4515
    %v5544 = vunpack.c.l.b16 %v4516
    %v5545 = vunpack.c.l.b16 %v4517
    %v5546 = vunpack.c.l.b16 %v4518
    %v5547 = vunpack.c.l.b16 %v4519
    %v5548 = vunpack.c.l.b16 %v4520
    %v5549 = vunpack.c.l.b16 %v4521
    %v5550 = vunpack.c.l.b16 %v4522
    %v5551 = vunpack.c.l.b16 %v4523
    %v5552 = vunpack.c.l.b16 %v4524
    %v5553 = vunpack.c.l.b16 %v4525
    %v5554 = vunpack.c.l.b16 %v4526
    %v5555 = vunpack.c.l.b16 %v4527
    %v5556 = vunpack.c.l.b16 %v4528
    %v5557 = vunpack.c.l.b16 %v4529
    %v5558 = vunpack.c.l.b16 %v4530
    %v5559 = vunpack.c.l.b16 %v4531
    %v5560 = vunpack.c.l.b16 %v4532
    %v5561 = vunpack.c.l.b16 %v4533
    %v5562 = vunpack.c.l.b16 %v4534
    %v5563 = vunpack.c.l.b16 %v4535
    %v5564 = vunpack.c.l.b16 %v4536
    %v5565 = vunpack.c.l.b16 %v4537
    %v5566 = vunpack.c.l.b16 %v4538
    %v5567 = vunpack.c.l.b16 %v4539
    %v5568 = vunpack.c.l.b16 %v4540
    %v5569 = vunpack.c.l.b16 %v4541
    %v5570 = vunpack.c.l.b16 %v4542
    %v5571 = vunpack.c.l.b16 %v4543
    %v5572 = vunpack.c.l.b16 %v4544
    %v5573 = vunpack.c.l.b16 %v4545
    %v5574 = vunpack.c.l.b16 %v4546
    %v5575 = vunpack.c.l.b16 %v4547
    %v5576 = vunpack.c.l.b16 %v4548
    %v5577 = vunpack.c.l.b16 %v4549
    %v5578 = vunpack.c.l.b16 %v4550
    %v5579 = vunpack.c.l.b16 %v4551
    %v5580 = vunpack.c.l.b16 %v4552
    %v5581 = vunpack.c.l.b16 %v4553
    %v5582 = vunpack.c.l.b16 %v4554
    %v5583 = vunpack.c.l.b16 %v4555
    %v5584 = vunpack.c.l.b16 %v4556
    %v5585 = vunpack.c.l.b16 %v4557
    %v5586 = vunpack.c.l.b16 %v4558
    %v5587 = vunpack.c.l.b16 %v4559
    %v5588 = vunpack.c.l.b16 %v4560
    %v5589 = vunpack.c.l.b16 %v4561
    %v5590 = vunpack.c.l.b16 %v4562
    %v5591 = vunpack.c.l.b16 %v4563
    %v5592 = vunpack.c.l.b16 %v4564
    %v5593 = vunpack.c.l.b16 %v4565
    %v5594 = vunpack.c.l.b16 %v4566
    %v5595 = vunpack.c.l.b16 %v4567
    %v5596 = vunpack.c.l.b16 %v4568
    %v5597 = vunpack.c.l.b16 %v4569
    %v5598 = vunpack.c.l.b16 %v4570
    %v5599 = vunpack.c.l.b16 %v4571
    %v5600 = vunpack.c.l.b16 %v4572
    %v5601 = vunpack.c.l.b16 %v4573
    %v5602 = vunpack.c.l.b16 %v4574
    %v5603 = vunpack.c.l.b16 %v4575
    %v5604 = vunpack.c.l.b16 %v4576
    %v5605 = vunpack.c.l.b16 %v4577
    %v5606 = vunpack.c.l.b16 %v4578
    %v5607 = vunpack.c.l.b16 %v4579
    %v5608 = vunpack.c.l.b16 %v4580
    %v5609 = vunpack.c.l.b16 %v4581
    %v5610 = vunpack.c.l.b16 %v4582
    %v5611 = vunpack.c.l.b16 %v4583
    %v5612 = vunpack.c.l.b16 %v4584
    %v5613 = vunpack.c.l.b16 %v4585
    %v5614 = vunpack.c.l.b16 %v4586
    %v5615 = vunpack.c.l.b16 %v4587
    %v5616 = vunpack.c.l.b16 %v4588
    %v5617 = vunpack.c.l.b16 %v4589
    %v5618 = vunpack.c.l.b16 %v4590
    %v5619 = vunpack.c.l.b16 %v4591
    %v5620 = vunpack.c.l.b16 %v4592
    %v5621 = vunpack.c.l.b16 %v4593
    %v5622 = vunpack.c.l.b16 %v4594
    %v5623 = vunpack.c.l.b16 %v4595
    %v5624 = vunpack.c.l.b16 %v4596
    %v5625 = vunpack.c.l.b16 %v4597
    %v5626 = vunpack.c.l.b16 %v4598
    %v5627 = vunpack.c.l.b16 %v4599
    %v5628 = vunpack.c.l.b16 %v4600
    %v5629 = vunpack.c.l.b16 %v4601
    %v5630 = vunpack.c.l.b16 %v4602
    %v5631 = vunpack.c.l.b16 %v4603
    %v5632 = vunpack.c.l.b16 %v4604
    %v5633 = vunpack.c.l.b16 %v4605
    %v5634 = vunpack.c.l.b16 %v4606
    %v5635 = vunpack.c.l.b16 %v4607
    %v5636 = vunpack.c.l.b16 %v4608
    %v5637 = vunpack.c.l.b16 %v4609
    %v5638 = vunpack.c.l.b16 %v4610
    %v5639 = vunpack.c.l.b16 %v4611
    %v5640 = vunpack.c.l.b16 %v4612
    %v5641 = vunpack.c.l.b16 %v4613
    %v5642 = vunpack.c.l.b16 %v4614
    %v5643 = vunpack.c.l.b16 %v4615
    %v5644 = vunpack.c.l.b16 %v4616
    %v5645 = vunpack.c.l.b16 %v4617
    %v5646 = vunpack.c.l.b16 %v4618
    %v5647 = vunpack.c.l.b16 %v4619
    %v5648 = vunpack.c.l.b16 %v4620
    %v5649 = vunpack.c.l.b16 %v4621
    %v5650 = vunpack.c.l.b16 %v4622
    %v5651 = vunpack.c.l.b16 %v4623
    %v5652 = vunpack.c.l.b16 %v4624
    %v5653 = vunpack.c.l.b16 %v4625
    %v5654 = vunpack.c.l.b16 %v4626
    %v5655 = vunpack.c.l.b16 %v4627
    %v5656 = vunpack.c.l.b16 %v4628
    %v5657 = vunpack.c.l.b16 %v4629
    %v5658 = vunpack.c.l.b16 %v4630
    %v5659 = vunpack.c.l.b16 %v4631
    %v5660 = vunpack.c.l.b16 %v4632
    %v5661 = vunpack.c.l.b16 %v4633
    %v5662 = vunpack.c.l.b16 %v4634
    %v5663 = vunpack.c.l.b16 %v4635
    %v5664 = vunpack.c.l.b16 %v4636
    %v5665 = vunpack.c.l.b16 %v4637
    %v5666 = vunpack.c.l.b16 %v4638
    %v5667 = vunpack.c.l.b16 %v4639
    %v5668 = vunpack.c.l.b16 %v4640
    %v5669 = vunpack.c.l.b16 %v4641
    %v5670 = vunpack.c.l.b16 %v4642
    %v5671 = vunpack.c.l.b16 %v4643
    %v5672 = vunpack.c.l.b16 %v4644
    %v5673 = vunpack.c.l.b16 %v4645
    %v5674 = vunpack.c.l.b16 %v4646
    %v5675 = vunpack.c.l.b16 %v4647
    %v5676 = vunpack.c.l.b16 %v4648
    %v5677 = vunpack.c.l.b16 %v4649
    %v5678 = vunpack.c.l.b16 %v4650
    %v5679 = vunpack.c.l.b16 %v4651
    %v5680 = vunpack.c.l.b16 %v4652
    %v5681 = vunpack.c.l.b16 %v4653
    %v5682 = vunpack.c.l.b16 %v4654
    %v5683 = vunpack.c.l.b16 %v4655
    %v5684 = vunpack.c.l.b16 %v4656
    %v5685 = vunpack.c.l.b16 %v4657
    %v5686 = vunpack.c.l.b16 %v4658
    %v5687 = vunpack.c.l.b16 %v4659
    %v5688 = vunpack.c.l.b16 %v4660
    %v5689 = vunpack.c.l.b16 %v4661
    %v5690 = vunpack.c.l.b16 %v4662
    %v5691 = vunpack.c.l.b16 %v4663
    %v5692 = vunpack.c.l.b16 %v4664
    %v5693 = vunpack.c.l.b16 %v4665
    %v5694 = vunpack.c.l.b16 %v4666
    %v5695 = vunpack.c.l.b16 %v4667
    %v5696 = vunpack.c.l.b16 %v4668
    %v5697 = vunpack.c.l.b16 %v4669
    %v5698 = vunpack.c.l.b16 %v4670
    %v5699 = vunpack.c.l.b16 %v4671
    %v5700 = vunpack.c.l.b16 %v4672
    %v5701 = vpack.c.b16 %v5190, %v5189
    %v5702 = vpack.c.b16 %v5192, %v5191
    %v5703 = vpack.c.b16 %v5194, %v5193
    %v5704 = vpack.c.b16 %v5196, %v5195
    %v5705 = vpack.c.b16 %v5198, %v5197
    %v5706 = vpack.c.b16 %v5200, %v5199
    %v5707 = vpack.c.b16 %v5202, %v5201
    %v5708 = vpack.c.b16 %v5204, %v5203
    %v5709 = vpack.c.b16 %v5206, %v5205
    %v5710 = vpack.c.b16 %v5208, %v5207
    %v5711 = vpack.c.b16 %v5210, %v5209
    %v5712 = vpack.c.b16 %v5212, %v5211
    %v5713 = vpack.c.b16 %v5214, %v5213
    %v5714 = vpack.c.b16 %v5216, %v5215
    %v5715 = vpack.c.b16 %v5218, %v5217
    %v5716 = vpack.c.b16 %v5220, %v5219
    %v5717 = vpack.c.b16 %v5222, %v5221
    %v5718 = vpack.c.b16 %v5224, %v5223
    %v5719 = vpack.c.b16 %v5226, %v5225
    %v5720 = vpack.c.b16 %v5228, %v5227
    %v5721 = vpack.c.b16 %v5230, %v5229
    %v5722 = vpack.c.b16 %v5232, %v5231
    %v5723 = vpack.c.b16 %v5234, %v5233
    %v5724 = vpack.c.b16 %v5236, %v5235
    %v5725 = vpack.c.b16 %v5238, %v5237
    %v5726 = vpack.c.b16 %v5240, %v5239
    %v5727 = vpack.c.b16 %v5242, %v5241
    %v5728 = vpack.c.b16 %v5244, %v5243
    %v5729 = vpack.c.b16 %v5246, %v5245
    %v5730 = vpack.c.b16 %v5248, %v5247
    %v5731 = vpack.c.b16 %v5250, %v5249
    %v5732 = vpack.c.b16 %v5252, %v5251
    %v5733 = vpack.c.b16 %v5254, %v5253
    %v5734 = vpack.c.b16 %v5256, %v5255
    %v5735 = vpack.c.b16 %v5258, %v5257
    %v5736 = vpack.c.b16 %v5260, %v5259
    %v5737 = vpack.c.b16 %v5262, %v5261
    %v5738 = vpack.c.b16 %v5264, %v5263
    %v5739 = vpack.c.b16 %v5266, %v5265
    %v5740 = vpack.c.b16 %v5268, %v5267
    %v5741 = vpack.c.b16 %v5270, %v5269
    %v5742 = vpack.c.b16 %v5272, %v5271
    %v5743 = vpack.c.b16 %v5274, %v5273
    %v5744 = vpack.c.b16 %v5276, %v5275
    %v5745 = vpack.c.b16 %v5278, %v5277
    %v5746 = vpack.c.b16 %v5280, %v5279
    %v5747 = vpack.c.b16 %v5282, %v5281
    %v5748 = vpack.c.b16 %v5284, %v5283
    %v5749 = vpack.c.b16 %v5286, %v5285
    %v5750 = vpack.c.b16 %v5288, %v5287
    %v5751 = vpack.c.b16 %v5290, %v5289
    %v5752 = vpack.c.b16 %v5292, %v5291
    %v5753 = vpack.c.b16 %v5294, %v5293
    %v5754 = vpack.c.b16 %v5296, %v5295
    %v5755 = vpack.c.b16 %v5298, %v5297
    %v5756 = vpack.c.b16 %v5300, %v5299
    %v5757 = vpack.c.b16 %v5302, %v5301
    %v5758 = vpack.c.b16 %v5304, %v5303
    %v5759 = vpack.c.b16 %v5306, %v5305
    %v5760 = vpack.c.b16 %v5308, %v5307
    %v5761 = vpack.c.b16 %v5310, %v5309
    %v5762 = vpack.c.b16 %v5312, %v5311
    %v5763 = vpack.c.b16 %v5314, %v5313
    %v5764 = vpack.c.b16 %v5316, %v5315
    %v5765 = vpack.c.b16 %v5318, %v5317
    %v5766 = vpack.c.b16 %v5320, %v5319
    %v5767 = vpack.c.b16 %v5322, %v5321
    %v5768 = vpack.c.b16 %v5324, %v5323
    %v5769 = vpack.c.b16 %v5326, %v5325
    %v5770 = vpack.c.b16 %v5328, %v5327
    %v5771 = vpack.c.b16 %v5330, %v5329
    %v5772 = vpack.c.b16 %v5332, %v5331
    %v5773 = vpack.c.b16 %v5334, %v5333
    %v5774 = vpack.c.b16 %v5336, %v5335
    %v5775 = vpack.c.b16 %v5338, %v5337
    %v5776 = vpack.c.b16 %v5340, %v5339
    %v5777 = vpack.c.b16 %v5342, %v5341
    %v5778 = vpack.c.b16 %v5344, %v5343
    %v5779 = vpack.c.b16 %v5346, %v5345
    %v5780 = vpack.c.b16 %v5348, %v5347
    %v5781 = vpack.c.b16 %v5350, %v5349
    %v5782 = vpack.c.b16 %v5352, %v5351
    %v5783 = vpack.c.b16 %v5354, %v5353
    %v5784 = vpack.c.b16 %v5356, %v5355
    %v5785 = vpack.c.b16 %v5358, %v5357
    %v5786 = vpack.c.b16 %v5360, %v5359
    %v5787 = vpack.c.b16 %v5362, %v5361
    %v5788 = vpack.c.b16 %v5364, %v5363
    %v5789 = vpack.c.b16 %v5366, %v5365
    %v5790 = vpack.c.b16 %v5368, %v5367
    %v5791 = vpack.c.b16 %v5370, %v5369
    %v5792 = vpack.c.b16 %v5372, %v5371
    %v5793 = vpack.c.b16 %v5374, %v5373
    %v5794 = vpack.c.b16 %v5376, %v5375
    %v5795 = vpack.c.b16 %v5378, %v5377
    %v5796 = vpack.c.b16 %v5380, %v5379
    %v5797 = vpack.c.b16 %v5382, %v5381
    %v5798 = vpack.c.b16 %v5384, %v5383
    %v5799 = vpack.c.b16 %v5386, %v5385
    %v5800 = vpack.c.b16 %v5388, %v5387
    %v5801 = vpack.c.b16 %v5390, %v5389
    %v5802 = vpack.c.b16 %v5392, %v5391
    %v5803 = vpack.c.b16 %v5394, %v5393
    %v5804 = vpack.c.b16 %v5396, %v5395
    %v5805 = vpack.c.b16 %v5398, %v5397
    %v5806 = vpack.c.b16 %v5400, %v5399
    %v5807 = vpack.c.b16 %v5402, %v5401
    %v5808 = vpack.c.b16 %v5404, %v5403
    %v5809 = vpack.c.b16 %v5406, %v5405
    %v5810 = vpack.c.b16 %v5408, %v5407
    %v5811 = vpack.c.b16 %v5410, %v5409
    %v5812 = vpack.c.b16 %v5412, %v5411
    %v5813 = vpack.c.b16 %v5414, %v5413
    %v5814 = vpack.c.b16 %v5416, %v5415
    %v5815 = vpack.c.b16 %v5418, %v5417
    %v5816 = vpack.c.b16 %v5420, %v5419
    %v5817 = vpack.c.b16 %v5422, %v5421
    %v5818 = vpack.c.b16 %v5424, %v5423
    %v5819 = vpack.c.b16 %v5426, %v5425
    %v5820 = vpack.c.b16 %v5428, %v5427
    %v5821 = vpack.c.b16 %v5430, %v5429
    %v5822 = vpack.c.b16 %v5432, %v5431
    %v5823 = vpack.c.b16 %v5434, %v5433
    %v5824 = vpack.c.b16 %v5436, %v5435
    %v5825 = vpack.c.b16 %v5438, %v5437
    %v5826 = vpack.c.b16 %v5440, %v5439
    %v5827 = vpack.c.b16 %v5442, %v5441
    %v5828 = vpack.c.b16 %v5444, %v5443
    %v5829 = vpack.c.b16 %v5446, %v5445
    %v5830 = vpack.c.b16 %v5448, %v5447
    %v5831 = vpack.c.b16 %v5450, %v5449
    %v5832 = vpack.c.b16 %v5452, %v5451
    %v5833 = vpack.c.b16 %v5454, %v5453
    %v5834 = vpack.c.b16 %v5456, %v5455
    %v5835 = vpack.c.b16 %v5458, %v5457
    %v5836 = vpack.c.b16 %v5460, %v5459
    %v5837 = vpack.c.b16 %v5462, %v5461
    %v5838 = vpack.c.b16 %v5464, %v5463
    %v5839 = vpack.c.b16 %v5466, %v5465
    %v5840 = vpack.c.b16 %v5468, %v5467
    %v5841 = vpack.c.b16 %v5470, %v5469
    %v5842 = vpack.c.b16 %v5472, %v5471
    %v5843 = vpack.c.b16 %v5474, %v5473
    %v5844 = vpack.c.b16 %v5476, %v5475
    %v5845 = vpack.c.b16 %v5478, %v5477
    %v5846 = vpack.c.b16 %v5480, %v5479
    %v5847 = vpack.c.b16 %v5482, %v5481
    %v5848 = vpack.c.b16 %v5484, %v5483
    %v5849 = vpack.c.b16 %v5486, %v5485
    %v5850 = vpack.c.b16 %v5488, %v5487
    %v5851 = vpack.c.b16 %v5490, %v5489
    %v5852 = vpack.c.b16 %v5492, %v5491
    %v5853 = vpack.c.b16 %v5494, %v5493
    %v5854 = vpack.c.b16 %v5496, %v5495
    %v5855 = vpack.c.b16 %v5498, %v5497
    %v5856 = vpack.c.b16 %v5500, %v5499
    %v5857 = vpack.c.b16 %v5502, %v5501
    %v5858 = vpack.c.b16 %v5504, %v5503
    %v5859 = vpack.c.b16 %v5506, %v5505
    %v5860 = vpack.c.b16 %v5508, %v5507
    %v5861 = vpack.c.b16 %v5510, %v5509
    %v5862 = vpack.c.b16 %v5512, %v5511
    %v5863 = vpack.c.b16 %v5514, %v5513
    %v5864 = vpack.c.b16 %v5516, %v5515
    %v5865 = vpack.c.b16 %v5518, %v5517
    %v5866 = vpack.c.b16 %v5520, %v5519
    %v5867 = vpack.c.b16 %v5522, %v5521
    %v5868 = vpack.c.b16 %v5524, %v5523
    %v5869 = vpack.c.b16 %v5526, %v5525
    %v5870 = vpack.c.b16 %v5528, %v5527
    %v5871 = vpack.c.b16 %v5530, %v5529
    %v5872 = vpack.c.b16 %v5532, %v5531
    %v5873 = vpack.c.b16 %v5534, %v5533
    %v5874 = vpack.c.b16 %v5536, %v5535
    %v5875 = vpack.c.b16 %v5538, %v5537
    %v5876 = vpack.c.b16 %v5540, %v5539
    %v5877 = vpack.c.b16 %v5542, %v5541
    %v5878 = vpack.c.b16 %v5544, %v5543
    %v5879 = vpack.c.b16 %v5546, %v5545
    %v5880 = vpack.c.b16 %v5548, %v5547
    %v5881 = vpack.c.b16 %v5550, %v5549
    %v5882 = vpack.c.b16 %v5552, %v5551
    %v5883 = vpack.c.b16 %v5554, %v5553
    %v5884 = vpack.c.b16 %v5556, %v5555
    %v5885 = vpack.c.b16 %v5558, %v5557
    %v5886 = vpack.c.b16 %v5560, %v5559
    %v5887 = vpack.c.b16 %v5562, %v5561
    %v5888 = vpack.c.b16 %v5564, %v5563
    %v5889 = vpack.c.b16 %v5566, %v5565
    %v5890 = vpack.c.b16 %v5568, %v5567
    %v5891 = vpack.c.b16 %v5570, %v5569
    %v5892 = vpack.c.b16 %v5572, %v5571
    %v5893 = vpack.c.b16 %v5574, %v5573
    %v5894 = vpack.c.b16 %v5576, %v5575
    %v5895 = vpack.c.b16 %v5578, %v5577
    %v5896 = vpack.c.b16 %v5580, %v5579
    %v5897 = vpack.c.b16 %v5582, %v5581
    %v5898 = vpack.c.b16 %v5584, %v5583
    %v5899 = vpack.c.b16 %v5586, %v5585
    %v5900 = vpack.c.b16 %v5588, %v5587
    %v5901 = vpack.c.b16 %v5590, %v5589
    %v5902 = vpack.c.b16 %v5592, %v5591
    %v5903 = vpack.c.b16 %v5594, %v5593
    %v5904 = vpack.c.b16 %v5596, %v5595
    %v5905 = vpack.c.b16 %v5598, %v5597
    %v5906 = vpack.c.b16 %v5600, %v5599
    %v5907 = vpack.c.b16 %v5602, %v5601
    %v5908 = vpack.c.b16 %v5604, %v5603
    %v5909 = vpack.c.b16 %v5606, %v5605
    %v5910 = vpack.c.b16 %v5608, %v5607
    %v5911 = vpack.c.b16 %v5610, %v5609
    %v5912 = vpack.c.b16 %v5612, %v5611
    %v5913 = vpack.c.b16 %v5614, %v5613
    %v5914 = vpack.c.b16 %v5616, %v5615
    %v5915 = vpack.c.b16 %v5618, %v5617
    %v5916 = vpack.c.b16 %v5620, %v5619
    %v5917 = vpack.c.b16 %v5622, %v5621
    %v5918 = vpack.c.b16 %v5624, %v5623
    %v5919 = vpack.c.b16 %v5626, %v5625
    %v5920 = vpack.c.b16 %v5628, %v5627
    %v5921 = vpack.c.b16 %v5630, %v5629
    %v5922 = vpack.c.b16 %v5632, %v5631
    %v5923 = vpack.c.b16 %v5634, %v5633
    %v5924 = vpack.c.b16 %v5636, %v5635
    %v5925 = vpack.c.b16 %v5638, %v5637
    %v5926 = vpack.c.b16 %v5640, %v5639
    %v5927 = vpack.c.b16 %v5642, %v5641
    %v5928 = vpack.c.b16 %v5644, %v5643
    %v5929 = vpack.c.b16 %v5646, %v5645
    %v5930 = vpack.c.b16 %v5648, %v5647
    %v5931 = vpack.c.b16 %v5650, %v5649
    %v5932 = vpack.c.b16 %v5652, %v5651
    %v5933 = vpack.c.b16 %v5654, %v5653
    %v5934 = vpack.c.b16 %v5656, %v5655
    %v5935 = vpack.c.b16 %v5658, %v5657
    %v5936 = vpack.c.b16 %v5660, %v5659
    %v5937 = vpack.c.b16 %v5662, %v5661
    %v5938 = vpack.c.b16 %v5664, %v5663
    %v5939 = vpack.c.b16 %v5666, %v5665
    %v5940 = vpack.c.b16 %v5668, %v5667
    %v5941 = vpack.c.b16 %v5670, %v5669
    %v5942 = vpack.c.b16 %v5672, %v5671
    %v5943 = vpack.c.b16 %v5674, %v5673
    %v5944 = vpack.c.b16 %v5676, %v5675
    %v5945 = vpack.c.b16 %v5678, %v5677
    %v5946 = vpack.c.b16 %v5680, %v5679
    %v5947 = vpack.c.b16 %v5682, %v5681
    %v5948 = vpack.c.b16 %v5684, %v5683
    %v5949 = vpack.c.b16 %v5686, %v5685
    %v5950 = vpack.c.b16 %v5688, %v5687
    %v5951 = vpack.c.b16 %v5690, %v5689
    %v5952 = vpack.c.b16 %v5692, %v5691
    %v5953 = vpack.c.b16 %v5694, %v5693
    %v5954 = vpack.c.b16 %v5696, %v5695
    %v5955 = vpack.c.b16 %v5698, %v5697
    %v5956 = vpack.c.b16 %v5700, %v5699
    %6213 = vmatpush.bf16.msra.mxu0 %v5708
    %6214 = vmatpush.bf16.msra.mxu0 %v5707
    %6215 = vmatpush.bf16.msra.mxu0 %v5706
    %6216 = vmatpush.bf16.msra.mxu0 %v5705
    %6217 = vmatpush.bf16.msra.mxu0 %v5704
    %6218 = vmatpush.bf16.msra.mxu0 %v5703
    %6219 = vmatpush.bf16.msra.mxu0 %v5702
    %6220 = vmatpush.bf16.msra.mxu0 %v5701
    %6221 = vmatmul.bf16.gmra.mxu0 %v4129
    %v6222 = vpop.f32.mrf.mxu0
    %v6223 = vadd.f32 %v4675, %v6222
    %v6224 = vpop.f32.mrf.mxu0
    %6225 = vdwg.mxu0
    %6226 = vmatpush.bf16.msra.mxu0 %v5716
    %6227 = vmatpush.bf16.msra.mxu0 %v5715
    %6228 = vmatpush.bf16.msra.mxu0 %v5714
    %6229 = vmatpush.bf16.msra.mxu0 %v5713
    %6230 = vmatpush.bf16.msra.mxu0 %v5712
    %6231 = vmatpush.bf16.msra.mxu0 %v5711
    %6232 = vmatpush.bf16.msra.mxu0 %v5710
    %6233 = vmatpush.bf16.msra.mxu0 %v5709
    %6234 = vmatmul.bf16.gmra.mxu0 %v4130
    %v6235 = vpop.f32.mrf.mxu0
    %v6236 = vadd.f32 %v6223, %v6235
    %v6237 = vpop.f32.mrf.mxu0
    %6238 = vdwg.mxu0
    %6239 = vmatpush.bf16.msra.mxu0 %v5724
    %6240 = vmatpush.bf16.msra.mxu0 %v5723
    %6241 = vmatpush.bf16.msra.mxu0 %v5722
    %6242 = vmatpush.bf16.msra.mxu0 %v5721
    %6243 = vmatpush.bf16.msra.mxu0 %v5720
    %6244 = vmatpush.bf16.msra.mxu0 %v5719
    %6245 = vmatpush.bf16.msra.mxu0 %v5718
    %6246 = vmatpush.bf16.msra.mxu0 %v5717
    %6247 = vmatmul.bf16.gmra.mxu0 %v4131
    %v6248 = vpop.f32.mrf.mxu0
    %v6249 = vadd.f32 %v6236, %v6248
    %v6250 = vpop.f32.mrf.mxu0
    %6251 = vdwg.mxu0
    %6252 = vmatpush.bf16.msra.mxu0 %v5732
    %6253 = vmatpush.bf16.msra.mxu0 %v5731
    %6254 = vmatpush.bf16.msra.mxu0 %v5730
    %6255 = vmatpush.bf16.msra.mxu0 %v5729
    %6256 = vmatpush.bf16.msra.mxu0 %v5728
    %6257 = vmatpush.bf16.msra.mxu0 %v5727
    %6258 = vmatpush.bf16.msra.mxu0 %v5726
    %6259 = vmatpush.bf16.msra.mxu0 %v5725
    %6260 = vmatmul.bf16.gmra.mxu0 %v4132
    %v6261 = vpop.f32.mrf.mxu0
    %v6262 = vadd.f32 %v6249, %v6261
    %v6263 = vpop.f32.mrf.mxu0
    %6264 = vdwg.mxu0
    %6265 = vmatpush.bf16.msra.mxu0 %v5740
    %6266 = vmatpush.bf16.msra.mxu0 %v5739
    %6267 = vmatpush.bf16.msra.mxu0 %v5738
    %6268 = vmatpush.bf16.msra.mxu0 %v5737
    %6269 = vmatpush.bf16.msra.mxu0 %v5736
    %6270 = vmatpush.bf16.msra.mxu0 %v5735
    %6271 = vmatpush.bf16.msra.mxu0 %v5734
    %6272 = vmatpush.bf16.msra.mxu0 %v5733
    %6273 = vmatmul.bf16.gmra.mxu0 %v4133
    %v6274 = vpop.f32.mrf.mxu0
    %v6275 = vadd.f32 %v6262, %v6274
    %v6276 = vpop.f32.mrf.mxu0
    %6277 = vdwg.mxu0
    %6278 = vmatpush.bf16.msra.mxu0 %v5748
    %6279 = vmatpush.bf16.msra.mxu0 %v5747
    %6280 = vmatpush.bf16.msra.mxu0 %v5746
    %6281 = vmatpush.bf16.msra.mxu0 %v5745
    %6282 = vmatpush.bf16.msra.mxu0 %v5744
    %6283 = vmatpush.bf16.msra.mxu0 %v5743
    %6284 = vmatpush.bf16.msra.mxu0 %v5742
    %6285 = vmatpush.bf16.msra.mxu0 %v5741
    %6286 = vmatmul.bf16.gmra.mxu0 %v4134
    %v6287 = vpop.f32.mrf.mxu0
    %v6288 = vadd.f32 %v6275, %v6287
    %v6289 = vpop.f32.mrf.mxu0
    %6290 = vdwg.mxu0
    %6291 = vmatpush.bf16.msra.mxu0 %v5756
    %6292 = vmatpush.bf16.msra.mxu0 %v5755
    %6293 = vmatpush.bf16.msra.mxu0 %v5754
    %6294 = vmatpush.bf16.msra.mxu0 %v5753
    %6295 = vmatpush.bf16.msra.mxu0 %v5752
    %6296 = vmatpush.bf16.msra.mxu0 %v5751
    %6297 = vmatpush.bf16.msra.mxu0 %v5750
    %6298 = vmatpush.bf16.msra.mxu0 %v5749
    %6299 = vmatmul.bf16.gmra.mxu0 %v4135
    %v6300 = vpop.f32.mrf.mxu0
    %v6301 = vadd.f32 %v6288, %v6300
    %v6302 = vpop.f32.mrf.mxu0
    %6303 = vdwg.mxu0
    %6304 = vmatpush.bf16.msra.mxu0 %v5764
    %6305 = vmatpush.bf16.msra.mxu0 %v5763
    %6306 = vmatpush.bf16.msra.mxu0 %v5762
    %6307 = vmatpush.bf16.msra.mxu0 %v5761
    %6308 = vmatpush.bf16.msra.mxu0 %v5760
    %6309 = vmatpush.bf16.msra.mxu0 %v5759
    %6310 = vmatpush.bf16.msra.mxu0 %v5758
    %6311 = vmatpush.bf16.msra.mxu0 %v5757
    %6312 = vmatmul.bf16.gmra.mxu0 %v4136
    %v6313 = vpop.f32.mrf.mxu0
    %v6314 = vadd.f32 %v6301, %v6313
    %v6315 = vpop.f32.mrf.mxu0
    %6316 = vdwg.mxu0
    %6317 = vmatpush.bf16.msra.mxu0 %v5772
    %6318 = vmatpush.bf16.msra.mxu0 %v5771
    %6319 = vmatpush.bf16.msra.mxu0 %v5770
    %6320 = vmatpush.bf16.msra.mxu0 %v5769
    %6321 = vmatpush.bf16.msra.mxu0 %v5768
    %6322 = vmatpush.bf16.msra.mxu0 %v5767
    %6323 = vmatpush.bf16.msra.mxu0 %v5766
    %6324 = vmatpush.bf16.msra.mxu0 %v5765
    %6325 = vmatmul.bf16.gmra.mxu0 %v4137
    %v6326 = vpop.f32.mrf.mxu0
    %v6327 = vadd.f32 %v6314, %v6326
    %v6328 = vpop.f32.mrf.mxu0
    %6329 = vdwg.mxu0
    %6330 = vmatpush.bf16.msra.mxu0 %v5780
    %6331 = vmatpush.bf16.msra.mxu0 %v5779
    %6332 = vmatpush.bf16.msra.mxu0 %v5778
    %6333 = vmatpush.bf16.msra.mxu0 %v5777
    %6334 = vmatpush.bf16.msra.mxu0 %v5776
    %6335 = vmatpush.bf16.msra.mxu0 %v5775
    %6336 = vmatpush.bf16.msra.mxu0 %v5774
    %6337 = vmatpush.bf16.msra.mxu0 %v5773
    %6338 = vmatmul.bf16.gmra.mxu0 %v4138
    %v6339 = vpop.f32.mrf.mxu0
    %v6340 = vadd.f32 %v6327, %v6339
    %v6341 = vpop.f32.mrf.mxu0
    %6342 = vdwg.mxu0
    %6343 = vmatpush.bf16.msra.mxu0 %v5788
    %6344 = vmatpush.bf16.msra.mxu0 %v5787
    %6345 = vmatpush.bf16.msra.mxu0 %v5786
    %6346 = vmatpush.bf16.msra.mxu0 %v5785
    %6347 = vmatpush.bf16.msra.mxu0 %v5784
    %6348 = vmatpush.bf16.msra.mxu0 %v5783
    %6349 = vmatpush.bf16.msra.mxu0 %v5782
    %6350 = vmatpush.bf16.msra.mxu0 %v5781
    %6351 = vmatmul.bf16.gmra.mxu0 %v4139
    %v6352 = vpop.f32.mrf.mxu0
    %v6353 = vadd.f32 %v6340, %v6352
    %v6354 = vpop.f32.mrf.mxu0
    %6355 = vdwg.mxu0
    %6356 = vmatpush.bf16.msra.mxu0 %v5796
    %6357 = vmatpush.bf16.msra.mxu0 %v5795
    %6358 = vmatpush.bf16.msra.mxu0 %v5794
    %6359 = vmatpush.bf16.msra.mxu0 %v5793
    %6360 = vmatpush.bf16.msra.mxu0 %v5792
    %6361 = vmatpush.bf16.msra.mxu0 %v5791
    %6362 = vmatpush.bf16.msra.mxu0 %v5790
    %6363 = vmatpush.bf16.msra.mxu0 %v5789
    %6364 = vmatmul.bf16.gmra.mxu0 %v4140
    %v6365 = vpop.f32.mrf.mxu0
    %v6366 = vadd.f32 %v6353, %v6365
    %v6367 = vpop.f32.mrf.mxu0
    %6368 = vdwg.mxu0
    %6369 = vmatpush.bf16.msra.mxu0 %v5804
    %6370 = vmatpush.bf16.msra.mxu0 %v5803
    %6371 = vmatpush.bf16.msra.mxu0 %v5802
    %6372 = vmatpush.bf16.msra.mxu0 %v5801
    %6373 = vmatpush.bf16.msra.mxu0 %v5800
    %6374 = vmatpush.bf16.msra.mxu0 %v5799
    %6375 = vmatpush.bf16.msra.mxu0 %v5798
    %6376 = vmatpush.bf16.msra.mxu0 %v5797
    %6377 = vmatmul.bf16.gmra.mxu0 %v4141
    %v6378 = vpop.f32.mrf.mxu0
    %v6379 = vadd.f32 %v6366, %v6378
    %v6380 = vpop.f32.mrf.mxu0
    %6381 = vdwg.mxu0
    %6382 = vmatpush.bf16.msra.mxu0 %v5812
    %6383 = vmatpush.bf16.msra.mxu0 %v5811
    %6384 = vmatpush.bf16.msra.mxu0 %v5810
    %6385 = vmatpush.bf16.msra.mxu0 %v5809
    %6386 = vmatpush.bf16.msra.mxu0 %v5808
    %6387 = vmatpush.bf16.msra.mxu0 %v5807
    %6388 = vmatpush.bf16.msra.mxu0 %v5806
    %6389 = vmatpush.bf16.msra.mxu0 %v5805
    %6390 = vmatmul.bf16.gmra.mxu0 %v4142
    %v6391 = vpop.f32.mrf.mxu0
    %v6392 = vadd.f32 %v6379, %v6391
    %v6393 = vpop.f32.mrf.mxu0
    %6394 = vdwg.mxu0
    %6395 = vmatpush.bf16.msra.mxu0 %v5820
    %6396 = vmatpush.bf16.msra.mxu0 %v5819
    %6397 = vmatpush.bf16.msra.mxu0 %v5818
    %6398 = vmatpush.bf16.msra.mxu0 %v5817
    %6399 = vmatpush.bf16.msra.mxu0 %v5816
    %6400 = vmatpush.bf16.msra.mxu0 %v5815
    %6401 = vmatpush.bf16.msra.mxu0 %v5814
    %6402 = vmatpush.bf16.msra.mxu0 %v5813
    %6403 = vmatmul.bf16.gmra.mxu0 %v4143
    %v6404 = vpop.f32.mrf.mxu0
    %v6405 = vadd.f32 %v6392, %v6404
    %v6406 = vpop.f32.mrf.mxu0
    %6407 = vdwg.mxu0
    %6408 = vmatpush.bf16.msra.mxu0 %v5828
    %6409 = vmatpush.bf16.msra.mxu0 %v5827
    %6410 = vmatpush.bf16.msra.mxu0 %v5826
    %6411 = vmatpush.bf16.msra.mxu0 %v5825
    %6412 = vmatpush.bf16.msra.mxu0 %v5824
    %6413 = vmatpush.bf16.msra.mxu0 %v5823
    %6414 = vmatpush.bf16.msra.mxu0 %v5822
    %6415 = vmatpush.bf16.msra.mxu0 %v5821
    %6416 = vmatmul.bf16.gmra.mxu0 %v4144
    %v6417 = vpop.f32.mrf.mxu0
    %v6418 = vadd.f32 %v6405, %v6417
    %v6419 = vpop.f32.mrf.mxu0
    %6420 = vdwg.mxu0
    %6421 = vmatpush.bf16.msra.mxu0 %v5836
    %6422 = vmatpush.bf16.msra.mxu0 %v5835
    %6423 = vmatpush.bf16.msra.mxu0 %v5834
    %6424 = vmatpush.bf16.msra.mxu0 %v5833
    %6425 = vmatpush.bf16.msra.mxu0 %v5832
    %6426 = vmatpush.bf16.msra.mxu0 %v5831
    %6427 = vmatpush.bf16.msra.mxu0 %v5830
    %6428 = vmatpush.bf16.msra.mxu0 %v5829
    %6429 = vmatmul.bf16.gmra.mxu0 %v4145
    %v6430 = vpop.f32.mrf.mxu0
    %v6431 = vadd.f32 %v6418, %v6430
    %v6432 = vpop.f32.mrf.mxu0
    %6433 = vdwg.mxu0
    %6434 = vmatpush.bf16.msra.mxu0 %v5844
    %6435 = vmatpush.bf16.msra.mxu0 %v5843
    %6436 = vmatpush.bf16.msra.mxu0 %v5842
    %6437 = vmatpush.bf16.msra.mxu0 %v5841
    %6438 = vmatpush.bf16.msra.mxu0 %v5840
    %6439 = vmatpush.bf16.msra.mxu0 %v5839
    %6440 = vmatpush.bf16.msra.mxu0 %v5838
    %6441 = vmatpush.bf16.msra.mxu0 %v5837
    %6442 = vmatmul.bf16.gmra.mxu0 %v4146
    %v6443 = vpop.f32.mrf.mxu0
    %v6444 = vadd.f32 %v6431, %v6443
    %v6445 = vpop.f32.mrf.mxu0
    %6446 = vdwg.mxu0
    %6447 = vmatpush.bf16.msra.mxu0 %v5852
    %6448 = vmatpush.bf16.msra.mxu0 %v5851
    %6449 = vmatpush.bf16.msra.mxu0 %v5850
    %6450 = vmatpush.bf16.msra.mxu0 %v5849
    %6451 = vmatpush.bf16.msra.mxu0 %v5848
    %6452 = vmatpush.bf16.msra.mxu0 %v5847
    %6453 = vmatpush.bf16.msra.mxu0 %v5846
    %6454 = vmatpush.bf16.msra.mxu0 %v5845
    %6455 = vmatmul.bf16.gmra.mxu0 %v4147
    %v6456 = vpop.f32.mrf.mxu0
    %v6457 = vadd.f32 %v6444, %v6456
    %v6458 = vpop.f32.mrf.mxu0
    %6459 = vdwg.mxu0
    %6460 = vmatpush.bf16.msra.mxu0 %v5860
    %6461 = vmatpush.bf16.msra.mxu0 %v5859
    %6462 = vmatpush.bf16.msra.mxu0 %v5858
    %6463 = vmatpush.bf16.msra.mxu0 %v5857
    %6464 = vmatpush.bf16.msra.mxu0 %v5856
    %6465 = vmatpush.bf16.msra.mxu0 %v5855
    %6466 = vmatpush.bf16.msra.mxu0 %v5854
    %6467 = vmatpush.bf16.msra.mxu0 %v5853
    %6468 = vmatmul.bf16.gmra.mxu0 %v4148
    %v6469 = vpop.f32.mrf.mxu0
    %v6470 = vadd.f32 %v6457, %v6469
    %v6471 = vpop.f32.mrf.mxu0
    %6472 = vdwg.mxu0
    %6473 = vmatpush.bf16.msra.mxu0 %v5868
    %6474 = vmatpush.bf16.msra.mxu0 %v5867
    %6475 = vmatpush.bf16.msra.mxu0 %v5866
    %6476 = vmatpush.bf16.msra.mxu0 %v5865
    %6477 = vmatpush.bf16.msra.mxu0 %v5864
    %6478 = vmatpush.bf16.msra.mxu0 %v5863
    %6479 = vmatpush.bf16.msra.mxu0 %v5862
    %6480 = vmatpush.bf16.msra.mxu0 %v5861
    %6481 = vmatmul.bf16.gmra.mxu0 %v4149
    %v6482 = vpop.f32.mrf.mxu0
    %v6483 = vadd.f32 %v6470, %v6482
    %v6484 = vpop.f32.mrf.mxu0
    %6485 = vdwg.mxu0
    %6486 = vmatpush.bf16.msra.mxu0 %v5876
    %6487 = vmatpush.bf16.msra.mxu0 %v5875
    %6488 = vmatpush.bf16.msra.mxu0 %v5874
    %6489 = vmatpush.bf16.msra.mxu0 %v5873
    %6490 = vmatpush.bf16.msra.mxu0 %v5872
    %6491 = vmatpush.bf16.msra.mxu0 %v5871
    %6492 = vmatpush.bf16.msra.mxu0 %v5870
    %6493 = vmatpush.bf16.msra.mxu0 %v5869
    %6494 = vmatmul.bf16.gmra.mxu0 %v4150
    %v6495 = vpop.f32.mrf.mxu0
    %v6496 = vadd.f32 %v6483, %v6495
    %v6497 = vpop.f32.mrf.mxu0
    %6498 = vdwg.mxu0
    %6499 = vmatpush.bf16.msra.mxu0 %v5884
    %6500 = vmatpush.bf16.msra.mxu0 %v5883
    %6501 = vmatpush.bf16.msra.mxu0 %v5882
    %6502 = vmatpush.bf16.msra.mxu0 %v5881
    %6503 = vmatpush.bf16.msra.mxu0 %v5880
    %6504 = vmatpush.bf16.msra.mxu0 %v5879
    %6505 = vmatpush.bf16.msra.mxu0 %v5878
    %6506 = vmatpush.bf16.msra.mxu0 %v5877
    %6507 = vmatmul.bf16.gmra.mxu0 %v4151
    %v6508 = vpop.f32.mrf.mxu0
    %v6509 = vadd.f32 %v6496, %v6508
    %v6510 = vpop.f32.mrf.mxu0
    %6511 = vdwg.mxu0
    %6512 = vmatpush.bf16.msra.mxu0 %v5892
    %6513 = vmatpush.bf16.msra.mxu0 %v5891
    %6514 = vmatpush.bf16.msra.mxu0 %v5890
    %6515 = vmatpush.bf16.msra.mxu0 %v5889
    %6516 = vmatpush.bf16.msra.mxu0 %v5888
    %6517 = vmatpush.bf16.msra.mxu0 %v5887
    %6518 = vmatpush.bf16.msra.mxu0 %v5886
    %6519 = vmatpush.bf16.msra.mxu0 %v5885
    %6520 = vmatmul.bf16.gmra.mxu0 %v4152
    %v6521 = vpop.f32.mrf.mxu0
    %v6522 = vadd.f32 %v6509, %v6521
    %v6523 = vpop.f32.mrf.mxu0
    %6524 = vdwg.mxu0
    %6525 = vmatpush.bf16.msra.mxu0 %v5900
    %6526 = vmatpush.bf16.msra.mxu0 %v5899
    %6527 = vmatpush.bf16.msra.mxu0 %v5898
    %6528 = vmatpush.bf16.msra.mxu0 %v5897
    %6529 = vmatpush.bf16.msra.mxu0 %v5896
    %6530 = vmatpush.bf16.msra.mxu0 %v5895
    %6531 = vmatpush.bf16.msra.mxu0 %v5894
    %6532 = vmatpush.bf16.msra.mxu0 %v5893
    %6533 = vmatmul.bf16.gmra.mxu0 %v4153
    %v6534 = vpop.f32.mrf.mxu0
    %v6535 = vadd.f32 %v6522, %v6534
    %v6536 = vpop.f32.mrf.mxu0
    %6537 = vdwg.mxu0
    %6538 = vmatpush.bf16.msra.mxu0 %v5908
    %6539 = vmatpush.bf16.msra.mxu0 %v5907
    %6540 = vmatpush.bf16.msra.mxu0 %v5906
    %6541 = vmatpush.bf16.msra.mxu0 %v5905
    %6542 = vmatpush.bf16.msra.mxu0 %v5904
    %6543 = vmatpush.bf16.msra.mxu0 %v5903
    %6544 = vmatpush.bf16.msra.mxu0 %v5902
    %6545 = vmatpush.bf16.msra.mxu0 %v5901
    %6546 = vmatmul.bf16.gmra.mxu0 %v4154
    %v6547 = vpop.f32.mrf.mxu0
    %v6548 = vadd.f32 %v6535, %v6547
    %v6549 = vpop.f32.mrf.mxu0
    %6550 = vdwg.mxu0
    %6551 = vmatpush.bf16.msra.mxu0 %v5916
    %6552 = vmatpush.bf16.msra.mxu0 %v5915
    %6553 = vmatpush.bf16.msra.mxu0 %v5914
    %6554 = vmatpush.bf16.msra.mxu0 %v5913
    %6555 = vmatpush.bf16.msra.mxu0 %v5912
    %6556 = vmatpush.bf16.msra.mxu0 %v5911
    %6557 = vmatpush.bf16.msra.mxu0 %v5910
    %6558 = vmatpush.bf16.msra.mxu0 %v5909
    %6559 = vmatmul.bf16.gmra.mxu0 %v4155
    %v6560 = vpop.f32.mrf.mxu0
    %v6561 = vadd.f32 %v6548, %v6560
    %v6562 = vpop.f32.mrf.mxu0
    %6563 = vdwg.mxu0
    %6564 = vmatpush.bf16.msra.mxu0 %v5924
    %6565 = vmatpush.bf16.msra.mxu0 %v5923
    %6566 = vmatpush.bf16.msra.mxu0 %v5922
    %6567 = vmatpush.bf16.msra.mxu0 %v5921
    %6568 = vmatpush.bf16.msra.mxu0 %v5920
    %6569 = vmatpush.bf16.msra.mxu0 %v5919
    %6570 = vmatpush.bf16.msra.mxu0 %v5918
    %6571 = vmatpush.bf16.msra.mxu0 %v5917
    %6572 = vmatmul.bf16.gmra.mxu0 %v4156
    %v6573 = vpop.f32.mrf.mxu0
    %v6574 = vadd.f32 %v6561, %v6573
    %v6575 = vpop.f32.mrf.mxu0
    %6576 = vdwg.mxu0
    %6577 = vmatpush.bf16.msra.mxu0 %v5932
    %6578 = vmatpush.bf16.msra.mxu0 %v5931
    %6579 = vmatpush.bf16.msra.mxu0 %v5930
    %6580 = vmatpush.bf16.msra.mxu0 %v5929
    %6581 = vmatpush.bf16.msra.mxu0 %v5928
    %6582 = vmatpush.bf16.msra.mxu0 %v5927
    %6583 = vmatpush.bf16.msra.mxu0 %v5926
    %6584 = vmatpush.bf16.msra.mxu0 %v5925
    %6585 = vmatmul.bf16.gmra.mxu0 %v4157
    %v6586 = vpop.f32.mrf.mxu0
    %v6587 = vadd.f32 %v6574, %v6586
    %v6588 = vpop.f32.mrf.mxu0
    %6589 = vdwg.mxu0
    %6590 = vmatpush.bf16.msra.mxu0 %v5940
    %6591 = vmatpush.bf16.msra.mxu0 %v5939
    %6592 = vmatpush.bf16.msra.mxu0 %v5938
    %6593 = vmatpush.bf16.msra.mxu0 %v5937
    %6594 = vmatpush.bf16.msra.mxu0 %v5936
    %6595 = vmatpush.bf16.msra.mxu0 %v5935
    %6596 = vmatpush.bf16.msra.mxu0 %v5934
    %6597 = vmatpush.bf16.msra.mxu0 %v5933
    %6598 = vmatmul.bf16.gmra.mxu0 %v4158
    %v6599 = vpop.f32.mrf.mxu0
    %v6600 = vadd.f32 %v6587, %v6599
    %v6601 = vpop.f32.mrf.mxu0
    %6602 = vdwg.mxu0
    %6603 = vmatpush.bf16.msra.mxu0 %v5948
    %6604 = vmatpush.bf16.msra.mxu0 %v5947
    %6605 = vmatpush.bf16.msra.mxu0 %v5946
    %6606 = vmatpush.bf16.msra.mxu0 %v5945
    %6607 = vmatpush.bf16.msra.mxu0 %v5944
    %6608 = vmatpush.bf16.msra.mxu0 %v5943
    %6609 = vmatpush.bf16.msra.mxu0 %v5942
    %6610 = vmatpush.bf16.msra.mxu0 %v5941
    %6611 = vmatmul.bf16.gmra.mxu0 %v4159
    %v6612 = vpop.f32.mrf.mxu0
    %v6613 = vadd.f32 %v6600, %v6612
    %v6614 = vpop.f32.mrf.mxu0
    %6615 = vdwg.mxu0
    %6616 = vmatpush.bf16.msra.mxu0 %v5956
    %6617 = vmatpush.bf16.msra.mxu0 %v5955
    %6618 = vmatpush.bf16.msra.mxu0 %v5954
    %6619 = vmatpush.bf16.msra.mxu0 %v5953
    %6620 = vmatpush.bf16.msra.mxu0 %v5952
    %6621 = vmatpush.bf16.msra.mxu0 %v5951
    %6622 = vmatpush.bf16.msra.mxu0 %v5950
    %6623 = vmatpush.bf16.msra.mxu0 %v5949
    %6624 = vmatmul.bf16.gmra.mxu0 %v4160
    %v6625 = vpop.f32.mrf.mxu0
    %v6626 = vadd.f32 %v6613, %v6625
    %v6627 = vpop.f32.mrf.mxu0
    %6628 = vdwg.mxu0
    %6629 = vst [vmem:[#allocation12] sm:$0xff] %v6626
    // Predicated region
    $region46: #{tpu_custom_call.1} parent=1 // pred_check
      _
    $region47: #{tpu_custom_call.1} parent=1 // pred_check_branch
      %6631 = sbr.rel (0) target = $region49
    $region48: #{tpu_custom_call.1} parent=1 // pred_region
      %6633 = vsyncadd [#allocation5], 0
      %s6635 = sshll.u32 [#allocation12], 4
      %s6636 = int_to_ptr.vmem [resolvable:$true] %s6635
      %s6637 = sshll.u32 %s6, 4
      %s6638 = int_to_ptr.hbm [resolvable:$true] %s6637
      %6640 = dma.vmem_to_hbm [thread:$0]  %s6636, 128, %s6638, [#allocation5]
    $region49: #{tpu_custom_call.1} parent=1 // pred_fallthru
      _
    // Predicated region
    $region50: #{tpu_custom_call.1} parent=1 // pred_check
      _
    $region51: #{tpu_custom_call.1} parent=1 // pred_check_branch
      %6642 = sbr.rel (0) target = $region53
    $region52: #{tpu_custom_call.1} parent=1 // pred_region
      %6644 = dma.done [#allocation5], 128
    $region53: #{tpu_custom_call.1} parent=1 // pred_fallthru
      _
    %6645 = vsyncpa [#allocation4], 1
    %6646 = vsyncpa [#allocation7], 1
    %6647 = vsyncpa [#allocation10], 1
    %6648 = vsyncpa [#allocation5], 1

</llo_original>
